<compile_context>
chip_gen: v7x
topology: tpu7x:2x2x1
jax: 0.10.0
libtpu: 0.0.40
codegen_flags: <defaults>
</compile_context>

<pallas_src>
import jax
import jax.numpy as jnp
from jax import lax
from jax.experimental import pallas as pl
from jax.experimental.pallas import tpu as pltpu


def bilinear_resize_align_corners(img, out_h, out_w):
    """F.interpolate(..., mode='bilinear', align_corners=True) for (B, Hc, Wc)."""
    B, Hc, Wc = img.shape
    img = img.astype(jnp.float32)
    if out_h > 1 and Hc > 1:
        ys = jnp.arange(out_h, dtype=jnp.float32) * (Hc - 1) / (out_h - 1)
    else:
        ys = jnp.zeros((out_h,), jnp.float32)
    if out_w > 1 and Wc > 1:
        xs = jnp.arange(out_w, dtype=jnp.float32) * (Wc - 1) / (out_w - 1)
    else:
        xs = jnp.zeros((out_w,), jnp.float32)
    y0 = jnp.floor(ys).astype(jnp.int32)
    y1 = jnp.minimum(y0 + 1, Hc - 1)
    wy = ys - y0.astype(jnp.float32)
    x0 = jnp.floor(xs).astype(jnp.int32)
    x1 = jnp.minimum(x0 + 1, Wc - 1)
    wx = xs - x0.astype(jnp.float32)
    top = img[:, y0, :]
    bot = img[:, y1, :]
    v00 = top[:, :, x0]
    v01 = top[:, :, x1]
    v10 = bot[:, :, x0]
    v11 = bot[:, :, x1]
    wy_ = wy[None, :, None]
    wx_ = wx[None, None, :]
    return (v00 * (1.0 - wy_) * (1.0 - wx_)
            + v01 * (1.0 - wy_) * wx_
            + v10 * wy_ * (1.0 - wx_)
            + v11 * wy_ * wx_)


def _lorm_kernel(xf_ref, xv_ref, kt_ref, wq_ref, bq_ref, km_ref, gm_ref,
                 sum_ref, cnt_ref):
    # ---- query projection for this TQ-row tile (bf16 MXU, f32 accumulate) ----
    xf = xf_ref[0]                                                  # (TQ, C) f32
    q32 = jnp.dot(xf.astype(jnp.bfloat16), wq_ref[...],
                  preferred_element_type=jnp.float32) + bq_ref[...]
    qn2 = jnp.sum(q32 * q32, axis=-1, keepdims=True)                # (TQ, 1)
    # Guarded rsqrt: padded (all-zero) query rows stay finite and end up with a
    # zero query vector -> finite softmax -> gmask=0 kills their contribution.
    q_bf = (q32 * lax.rsqrt(jnp.maximum(qn2, 1e-30))).astype(jnp.bfloat16)

    # ---- cosine energy: plain NN matmul against pre-normalized K^T ----------
    a = jnp.dot(q_bf, kt_ref[0], preferred_element_type=jnp.float32)  # (TQ, HWP)
    a = a + km_ref[...]                                             # kill padded keys

    # ---- softmax over keys (f32; EUP reciprocal for the denominator) --------
    m = jnp.max(a, axis=-1, keepdims=True)
    e = jnp.exp(a - m)
    inv_l = pl.reciprocal(jnp.sum(e, axis=-1, keepdims=True), approx=True)
    p_bf = (e * inv_l).astype(jnp.bfloat16)                         # (TQ, HWP)

    # ---- attention-weighted aggregation; fused (gamma * mask) row scale -----
    newx = jnp.dot(p_bf, xv_ref[0], preferred_element_type=jnp.float32)  # (TQ, C)
    newx = gm_ref[0] * newx                                         # (TQ, 1) scale

    # ---- mse_loss partial reductions (xf is f32 -> exact zeros preserved) ---
    diff = xf - newx
    sq = diff * diff
    sum_ref[...] = jnp.sum(sq).reshape(1, 1, 1)
    cnt_ref[...] = jnp.sum((sq != 0.0).astype(jnp.float32)).reshape(1, 1, 1)


def _vmem_capacity_bytes():
    try:
        return int(pltpu.get_tpu_info().vmem_capacity_bytes)
    except Exception:
        return 64 << 20          # conservative (v7x-sized) fallback


def _vmem_estimate(tq, hwp, c):
    """Bytes of VMEM needed for one grid step, counting live softmax transients."""
    return int(
        2 * tq * c * 4           # xf tile, double-buffered
        + 2 * tq * 4             # gamma*mask tile, double-buffered
        + hwp * c * 2            # value X (bf16), single-buffered
        + c * hwp * 2            # normalized K^T (bf16), single-buffered
        + c * c * 2 + c * 4      # Wq^T + bq, single-buffered
        + hwp * 4                # key pad mask
        + 2.5 * tq * hwp * 4     # energy f32 + exp f32 + p_bf live together
        + 6 * tq * c * 4)        # q32 / q_bf / newx / diff / sq transients


@jax.jit
def lorm_forward(x_nchw, cam, wq, bq, wk, bk, gamma):
    """Reproduces LoRM.forward(x, cam, mode='cam') -> scalar loss."""
    B, C, H, W = x_nchw.shape
    HW = H * W

    # ---------------- wrapper glue (plain JAX) ----------------
    cam = jnp.where(cam == 255, jnp.zeros_like(cam), cam).astype(jnp.float32)
    cam_i = bilinear_resize_align_corners(cam, H, W)                 # (B, H, W)
    mask = (cam_i > 0).astype(jnp.float32).reshape(B, HW, 1)
    gmask = gamma.reshape(1, 1, 1).astype(jnp.float32) * mask        # (B, HW, 1)

    x_bcp = x_nchw.reshape(B, C, HW).astype(jnp.float32)             # (B, C, HW)
    x_phw = jnp.transpose(x_bcp, (0, 2, 1))                          # (B, HW, C)

    # Key projection + cosine normalization, once per batch, directly in the
    # (C_out, HW) "transposed" layout so the kernel's energy matmul is pure NN.
    k_t = jnp.einsum('oc,bcp->bop', wk.astype(jnp.float32), x_bcp)   # (B, C, HW)
    k_t = k_t + bk.astype(jnp.float32)[None, :, None]
    kn2 = jnp.sum(k_t * k_t, axis=1, keepdims=True)                  # (B, 1, HW)
    k_t = k_t * lax.rsqrt(jnp.maximum(kn2, 1e-30))

    # ---------------- tiling: pad the query/key axis to TQ ----------------
    vmem_cap = _vmem_capacity_bytes()

    def padded(tq):
        return pl.cdiv(HW, tq) * tq

    if HW > 128 and _vmem_estimate(256, padded(256), C) <= (vmem_cap * 4) // 5:
        TQ = 256                                  # feeds the 256-wide MXU (v6e/v7x)
    else:
        TQ = 128                                  # VMEM-tight / small-map fallback
    HWP = padded(TQ)
    NQ = HWP // TQ
    pad = HWP - HW

    xf = jnp.pad(x_phw, ((0, 0), (0, pad), (0, 0)))                  # (B, HWP, C) f32
    xv = xf.astype(jnp.bfloat16)                                     # values, bf16
    kt_bf = jnp.pad(k_t, ((0, 0), (0, 0), (0, pad))).astype(jnp.bfloat16)
    gmask_p = jnp.pad(gmask, ((0, 0), (0, pad), (0, 0)))             # (B, HWP, 1)
    kmask = jnp.where(jnp.arange(HWP) < HW, 0.0, -1e30)
    kmask = kmask.astype(jnp.float32).reshape(1, HWP)                # additive key mask
    wq_t = wq.T.astype(jnp.bfloat16)                                 # (C_in, C_out)
    bq2 = bq.reshape(1, C).astype(jnp.float32)

    single = dict(pipeline_mode=pl.Buffered(1))   # no double-buffering for constants
    grid_spec = pltpu.PrefetchScalarGridSpec(
        num_scalar_prefetch=0,
        grid=(B, NQ),
        in_specs=[
            pl.BlockSpec((1, TQ, C), lambda b, q: (b, q, 0)),              # x f32 tile
            pl.BlockSpec((1, HWP, C), lambda b, q: (b, 0, 0), **single),   # values bf16
            pl.BlockSpec((1, C, HWP), lambda b, q: (b, 0, 0), **single),   # K^T bf16
            pl.BlockSpec((C, C), lambda b, q: (0, 0), **single),           # Wq^T bf16
            pl.BlockSpec((1, C), lambda b, q: (0, 0), **single),           # bq
            pl.BlockSpec((1, HWP), lambda b, q: (0, 0), **single),         # key pad mask
            pl.BlockSpec((1, TQ, 1), lambda b, q: (b, q, 0)),              # gamma*mask
        ],
        out_specs=[
            pl.BlockSpec((1, 1, 1), lambda b, q: (b * NQ + q, 0, 0)),      # partial sum
            pl.BlockSpec((1, 1, 1), lambda b, q: (b * NQ + q, 0, 0)),      # partial count
        ],
    )

    vmem_est = _vmem_estimate(TQ, HWP, C)
    vmem_limit = int(min(max(vmem_est * 3 // 2 + (2 << 20), 32 << 20), vmem_cap))

    cost = pl.CostEstimate(
        flops=B * HWP * (2 * C * C + 4 * HWP * C),
        transcendentals=B * HWP * (HWP + 2),
        bytes_accessed=(B * HWP * C * (4 + 2 + 2) + C * C * 2
                        + B * HWP * 8 + B * NQ * 8),
    )

    sums, cnts = pl.pallas_call(
        _lorm_kernel,
        out_shape=(jax.ShapeDtypeStruct((B * NQ, 1, 1), jnp.float32),
                   jax.ShapeDtypeStruct((B * NQ, 1, 1), jnp.float32)),
        grid_spec=grid_spec,
        compiler_params=pltpu.CompilerParams(
            dimension_semantics=("parallel", "parallel"),
            vmem_limit_bytes=vmem_limit),
        cost_estimate=cost,
    )(xf, xv, kt_bf, wq_t, bq2, kmask, gmask_p)

    return jnp.sum(sums) / jnp.sum(cnts)


def lorm_reference(x_nchw, cam, wq, bq, wk, bk, gamma):
    """Pure-JAX f32 reference matching the PyTorch forward."""
    B, C, H, W = x_nchw.shape
    HW = H * W
    cam = jnp.where(cam == 255, jnp.zeros_like(cam), cam).astype(jnp.float32)
    cam_i = bilinear_resize_align_corners(cam, H, W)
    mask = (cam_i > 0).astype(jnp.float32).reshape(B, HW, 1)
    x_phw = jnp.transpose(x_nchw.reshape(B, C, HW), (0, 2, 1))
    q = jnp.einsum('bpc,oc->bpo', x_phw, wq) + bq
    k = jnp.einsum('bpc,oc->bpo', x_phw, wk) + bk
    energy = jnp.einsum('bpc,bqc->bpq', q, k)
    qn = jnp.sqrt(jnp.sum(q * q, -1, keepdims=True))
    kn = jnp.sqrt(jnp.sum(k * k, -1, keepdims=True))
    a = energy / (qn * jnp.transpose(kn, (0, 2, 1)))
    a = jax.nn.softmax(a, axis=-1)
    a = mask * a
    new_x = gamma[0] * jnp.einsum('bpq,bqc->bpc', a, x_phw)
    sq = (x_phw - new_x) ** 2
    return jnp.sum(sq) / jnp.sum((sq != 0).astype(jnp.float32))


if __name__ == "__main__":
    def run_case(B, C, H, W, Hc, Wc, key):
        kx, kc, kq, kk = jax.random.split(key, 4)
        x = jax.random.normal(kx, (B, C, H, W), dtype=jnp.float32)
        # cam with some negatives and some 255 "ignore" entries
        cam = jax.random.uniform(kc, (B, Hc, Wc), dtype=jnp.float32,
                                 minval=-0.5, maxval=1.5)
        cam = cam.at[:, 0, 0].set(255.0)
        # xavier_uniform init for the 1x1 convs (fan_in = fan_out = C), bias = 0
        bound = (6.0 / (C + C)) ** 0.5
        wq = jax.random.uniform(kq, (C, C), dtype=jnp.float32,
                                minval=-bound, maxval=bound)
        wk = jax.random.uniform(kk, (C, C), dtype=jnp.float32,
                                minval=-bound, maxval=bound)
        bq = jnp.zeros((C,), jnp.float32)
        bk = jnp.zeros((C,), jnp.float32)
        gamma = jnp.ones((1,), jnp.float32)   # nn.Parameter(torch.ones(1))

        loss = jax.block_until_ready(lorm_forward(x, cam, wq, bq, wk, bk, gamma))
        loss_ref = lorm_reference(x, cam, wq, bq, wk, bk, gamma)
        assert jnp.isfinite(loss), "kernel produced non-finite loss"
        assert jnp.allclose(loss, loss_ref, rtol=2e-2, atol=2e-2), (
            f"mismatch (H={H}, W={W}): kernel={loss}, ref={loss_ref}")

    key = jax.random.PRNGKey(0)
    k1, k2 = jax.random.split(key)
    # 128-aligned spatial extent (HW = 512 -> 2 query tiles of 256)
    run_case(2, 128, 16, 32, 12, 12, k1)
    # Non-aligned spatial extent (HW = 169 -> padded to 256, exercises the
    # padded-query / masked-key path used for real DeepLab 41x41 / 65x65 maps)
    run_case(2, 128, 13, 13, 12, 12, k2)
    print("KERNEL_OK")
</pallas_src>

<mosaic_0001>
module attributes {stable_mosaic.version = 11 : i64} {
  func.func @_lorm_kernel(%arg0: i32, %arg1: i32, %arg2: memref<1x256x128xf32, #tpu.memory_space<vmem>>, %arg3: memref<1x512x128xbf16, #tpu.memory_space<vmem>>, %arg4: memref<1x128x512xbf16, #tpu.memory_space<vmem>>, %arg5: memref<128x128xbf16, #tpu.memory_space<vmem>>, %arg6: memref<1x128xf32, #tpu.memory_space<vmem>>, %arg7: memref<1x512xf32, #tpu.memory_space<vmem>>, %arg8: memref<1x256x1xf32, #tpu.memory_space<vmem>>, %arg9: memref<1x1x1xf32, #tpu.memory_space<vmem>>, %arg10: memref<1x1x1xf32, #tpu.memory_space<vmem>>) attributes {dimension_semantics = [#tpu.dimension_semantics<parallel>, #tpu.dimension_semantics<parallel>], iteration_bounds = array<i64: 2, 2>, scalar_prefetch = 0 : i64, scratch_operands = 0 : i64, tpu.core_type = #tpu.core_type<tc>, window_params = [{transform_indices = @transform_0, window_bounds = array<i64: 1, 256, 128>}, {pipeline_mode = #tpu.pipeline_mode<synchronous>, transform_indices = @transform_1, window_bounds = array<i64: 1, 512, 128>}, {pipeline_mode = #tpu.pipeline_mode<synchronous>, transform_indices = @transform_2, window_bounds = array<i64: 1, 128, 512>}, {pipeline_mode = #tpu.pipeline_mode<synchronous>, transform_indices = @transform_3, window_bounds = array<i64: 128, 128>}, {pipeline_mode = #tpu.pipeline_mode<synchronous>, transform_indices = @transform_4, window_bounds = array<i64: 1, 128>}, {pipeline_mode = #tpu.pipeline_mode<synchronous>, transform_indices = @transform_5, window_bounds = array<i64: 1, 512>}, {transform_indices = @transform_6, window_bounds = array<i64: 1, 256, 1>}, {transform_indices = @transform_7, window_bounds = array<i64: 1, 1, 1>}, {transform_indices = @transform_8, window_bounds = array<i64: 1, 1, 1>}]} {
    %c0 = arith.constant 0 : index
    %c0_0 = arith.constant 0 : index
    %c0_1 = arith.constant 0 : index
    %0 = vector.load %arg2[%c0, %c0_0, %c0_1] : memref<1x256x128xf32, #tpu.memory_space<vmem>>, vector<1x256x128xf32>
    %1 = vector.shape_cast %0 : vector<1x256x128xf32> to vector<256x128xf32>
    %2 = arith.truncf %1 : vector<256x128xf32> to vector<256x128xbf16>
    %c0_2 = arith.constant 0 : index
    %c0_3 = arith.constant 0 : index
    %3 = vector.load %arg5[%c0_2, %c0_3] : memref<128x128xbf16, #tpu.memory_space<vmem>>, vector<128x128xbf16>
    %cst = arith.constant dense<0.000000e+00> : vector<256x128xf32>
    %4 = tpu.matmul %2, %3, %cst {dimension_numbers = #tpu.dot_dimension_numbers<[1], [0], [0], [1], [0, 0, 1, 1], [], []>} : vector<256x128xbf16>, vector<128x128xbf16>, vector<256x128xf32> -> vector<256x128xf32>
    %c0_4 = arith.constant 0 : index
    %c0_5 = arith.constant 0 : index
    %5 = vector.load %arg6[%c0_4, %c0_5] : memref<1x128xf32, #tpu.memory_space<vmem>>, vector<1x128xf32>
    %6 = vector.broadcast %5 : vector<1x128xf32> to vector<256x128xf32>
    %7 = arith.addf %4, %6 : vector<256x128xf32>
    %8 = arith.mulf %7, %7 : vector<256x128xf32>
    %cst_6 = arith.constant dense<0.000000e+00> : vector<256xf32>
    %9 = vector.multi_reduction <add>, %8, %cst_6 [1] : vector<256x128xf32> to vector<256xf32>
    %10 = vector.shape_cast %9 : vector<256xf32> to vector<256x1xf32>
    %cst_7 = arith.constant 1.000000e-30 : f32
    %11 = vector.broadcast %cst_7 : f32 to vector<256x1xf32>
    %12 = arith.maximumf %10, %11 : vector<256x1xf32>
    %13 = math.rsqrt %12 : vector<256x1xf32>
    %14 = vector.broadcast %13 : vector<256x1xf32> to vector<256x128xf32>
    %15 = arith.mulf %7, %14 : vector<256x128xf32>
    %16 = arith.truncf %15 : vector<256x128xf32> to vector<256x128xbf16>
    %c0_8 = arith.constant 0 : index
    %c0_9 = arith.constant 0 : index
    %c0_10 = arith.constant 0 : index
    %17 = vector.load %arg4[%c0_8, %c0_9, %c0_10] : memref<1x128x512xbf16, #tpu.memory_space<vmem>>, vector<1x128x512xbf16>
    %18 = vector.shape_cast %17 : vector<1x128x512xbf16> to vector<128x512xbf16>
    %cst_11 = arith.constant dense<0.000000e+00> : vector<256x512xf32>
    %19 = tpu.matmul %16, %18, %cst_11 {dimension_numbers = #tpu.dot_dimension_numbers<[1], [0], [0], [1], [0, 0, 1, 1], [], []>} : vector<256x128xbf16>, vector<128x512xbf16>, vector<256x512xf32> -> vector<256x512xf32>
    %c0_12 = arith.constant 0 : index
    %c0_13 = arith.constant 0 : index
    %20 = vector.load %arg7[%c0_12, %c0_13] : memref<1x512xf32, #tpu.memory_space<vmem>>, vector<1x512xf32>
    %21 = vector.broadcast %20 : vector<1x512xf32> to vector<256x512xf32>
    %22 = arith.addf %19, %21 : vector<256x512xf32>
    %cst_14 = arith.constant dense<0xFF800000> : vector<256xf32>
    %23 = vector.multi_reduction <maximumf>, %22, %cst_14 [1] : vector<256x512xf32> to vector<256xf32>
    %24 = vector.shape_cast %23 : vector<256xf32> to vector<256x1xf32>
    %25 = vector.broadcast %24 : vector<256x1xf32> to vector<256x512xf32>
    %26 = arith.subf %22, %25 : vector<256x512xf32>
    %27 = math.exp %26 : vector<256x512xf32>
    %cst_15 = arith.constant dense<0.000000e+00> : vector<256xf32>
    %28 = vector.multi_reduction <add>, %27, %cst_15 [1] : vector<256x512xf32> to vector<256xf32>
    %29 = vector.shape_cast %28 : vector<256xf32> to vector<256x1xf32>
    %30 = tpu.reciprocal %29 {approx = true} : vector<256x1xf32> -> vector<256x1xf32>
    %31 = vector.broadcast %30 : vector<256x1xf32> to vector<256x512xf32>
    %32 = arith.mulf %27, %31 : vector<256x512xf32>
    %33 = arith.truncf %32 : vector<256x512xf32> to vector<256x512xbf16>
    %c0_16 = arith.constant 0 : index
    %c0_17 = arith.constant 0 : index
    %c0_18 = arith.constant 0 : index
    %34 = vector.load %arg3[%c0_16, %c0_17, %c0_18] : memref<1x512x128xbf16, #tpu.memory_space<vmem>>, vector<1x512x128xbf16>
    %35 = vector.shape_cast %34 : vector<1x512x128xbf16> to vector<512x128xbf16>
    %cst_19 = arith.constant dense<0.000000e+00> : vector<256x128xf32>
    %36 = tpu.matmul %33, %35, %cst_19 {dimension_numbers = #tpu.dot_dimension_numbers<[1], [0], [0], [1], [0, 0, 1, 1], [], []>} : vector<256x512xbf16>, vector<512x128xbf16>, vector<256x128xf32> -> vector<256x128xf32>
    %c0_20 = arith.constant 0 : index
    %c0_21 = arith.constant 0 : index
    %c0_22 = arith.constant 0 : index
    %37 = vector.load %arg8[%c0_20, %c0_21, %c0_22] : memref<1x256x1xf32, #tpu.memory_space<vmem>>, vector<1x256x1xf32>
    %38 = vector.shape_cast %37 : vector<1x256x1xf32> to vector<256x1xf32>
    %39 = vector.broadcast %38 : vector<256x1xf32> to vector<256x128xf32>
    %40 = arith.mulf %39, %36 : vector<256x128xf32>
    %41 = arith.subf %1, %40 : vector<256x128xf32>
    %42 = arith.mulf %41, %41 : vector<256x128xf32>
    %43 = vector.shape_cast %42 : vector<256x128xf32> to vector<1x256x128xf32>
    %cst_23 = arith.constant dense<0.000000e+00> : vector<1xf32>
    %44 = vector.multi_reduction <add>, %43, %cst_23 [1, 2] : vector<1x256x128xf32> to vector<1xf32>
    %45 = vector.shape_cast %44 : vector<1xf32> to vector<1x1x1xf32>
    %46 = vector.extract %45[0, 0, 0] : f32 from vector<1x1x1xf32>
    %47 = vector.broadcast %46 : f32 to vector<1x1x1xf32>
    %c0_24 = arith.constant 0 : index
    %c0_25 = arith.constant 0 : index
    %c0_26 = arith.constant 0 : index
    %48 = vector.load %arg9[%c0_24, %c0_25, %c0_26] : memref<1x1x1xf32, #tpu.memory_space<vmem>>, vector<1x1x1xf32>
    tpu.vector_store %arg9[%c0_24, %c0_25, %c0_26], %47 {strides = array<i32>} : memref<1x1x1xf32, #tpu.memory_space<vmem>>, vector<1x1x1xf32>,
    %cst_27 = arith.constant 0.000000e+00 : f32
    %49 = vector.broadcast %cst_27 : f32 to vector<256x128xf32>
    %50 = arith.cmpf one, %42, %49 : vector<256x128xf32>
    %51 = arith.extui %50 : vector<256x128xi1> to vector<256x128xi32>
    %52 = arith.sitofp %51 : vector<256x128xi32> to vector<256x128xf32>
    %53 = vector.shape_cast %52 : vector<256x128xf32> to vector<1x256x128xf32>
    %cst_28 = arith.constant dense<0.000000e+00> : vector<1xf32>
    %54 = vector.multi_reduction <add>, %53, %cst_28 [1, 2] : vector<1x256x128xf32> to vector<1xf32>
    %55 = vector.shape_cast %54 : vector<1xf32> to vector<1x1x1xf32>
    %56 = vector.extract %55[0, 0, 0] : f32 from vector<1x1x1xf32>
    %57 = vector.broadcast %56 : f32 to vector<1x1x1xf32>
    %c0_29 = arith.constant 0 : index
    %c0_30 = arith.constant 0 : index
    %c0_31 = arith.constant 0 : index
    %58 = vector.load %arg10[%c0_29, %c0_30, %c0_31] : memref<1x1x1xf32, #tpu.memory_space<vmem>>, vector<1x1x1xf32>
    tpu.vector_store %arg10[%c0_29, %c0_30, %c0_31], %57 {strides = array<i32>} : memref<1x1x1xf32, #tpu.memory_space<vmem>>, vector<1x1x1xf32>,
    return
  }
  func.func @transform_0(%arg0: i32, %arg1: i32) -> (i32, i32, i32) {
    %c0_i32 = arith.constant 0 : i32
    %c0_i32_0 = arith.constant 0 : i32
    return %arg0, %arg1, %c0_i32 : i32, i32, i32
  }
  func.func @transform_1(%arg0: i32, %arg1: i32) -> (i32, i32, i32) {
    %c0_i32 = arith.constant 0 : i32
    %c0_i32_0 = arith.constant 0 : i32
    %c0_i32_1 = arith.constant 0 : i32
    return %arg0, %c0_i32, %c0_i32_0 : i32, i32, i32
  }
  func.func @transform_2(%arg0: i32, %arg1: i32) -> (i32, i32, i32) {
    %c0_i32 = arith.constant 0 : i32
    %c0_i32_0 = arith.constant 0 : i32
    %c0_i32_1 = arith.constant 0 : i32
    return %arg0, %c0_i32, %c0_i32_0 : i32, i32, i32
  }
  func.func @transform_3(%arg0: i32, %arg1: i32) -> (i32, i32) {
    %c0_i32 = arith.constant 0 : i32
    %c0_i32_0 = arith.constant 0 : i32
    %c0_i32_1 = arith.constant 0 : i32
    return %c0_i32, %c0_i32_0 : i32, i32
  }
  func.func @transform_4(%arg0: i32, %arg1: i32) -> (i32, i32) {
    %c0_i32 = arith.constant 0 : i32
    %c0_i32_0 = arith.constant 0 : i32
    %c0_i32_1 = arith.constant 0 : i32
    return %c0_i32, %c0_i32_0 : i32, i32
  }
  func.func @transform_5(%arg0: i32, %arg1: i32) -> (i32, i32) {
    %c0_i32 = arith.constant 0 : i32
    %c0_i32_0 = arith.constant 0 : i32
    %c0_i32_1 = arith.constant 0 : i32
    return %c0_i32, %c0_i32_0 : i32, i32
  }
  func.func @transform_6(%arg0: i32, %arg1: i32) -> (i32, i32, i32) {
    %c0_i32 = arith.constant 0 : i32
    %c0_i32_0 = arith.constant 0 : i32
    return %arg0, %arg1, %c0_i32 : i32, i32, i32
  }
  func.func @transform_7(%arg0: i32, %arg1: i32) -> (i32, i32, i32) {
    %c2_i32 = arith.constant 2 : i32
    %0 = arith.muli %arg0, %c2_i32 : i32
    %1 = arith.addi %0, %arg1 : i32
    %c0_i32 = arith.constant 0 : i32
    %c0_i32_0 = arith.constant 0 : i32
    %c0_i32_1 = arith.constant 0 : i32
    return %1, %c0_i32, %c0_i32_0 : i32, i32, i32
  }
  func.func @transform_8(%arg0: i32, %arg1: i32) -> (i32, i32, i32) {
    %c2_i32 = arith.constant 2 : i32
    %0 = arith.muli %arg0, %c2_i32 : i32
    %1 = arith.addi %0, %arg1 : i32
    %c0_i32 = arith.constant 0 : i32
    %c0_i32_0 = arith.constant 0 : i32
    %c0_i32_1 = arith.constant 0 : i32
    return %1, %c0_i32, %c0_i32_0 : i32, i32, i32
  }
}

</mosaic_0001>

<llo_original>
// kernel: lorm_forward.1
$region0: #{lorm_forward.1}
  #allocation0 [shape = 'u32[]', space=smem, size = 0x4, offset = 0x4, fixed_abs, tag = 'smem constant byte address 0x4 - core index']
  #allocation1 [shape = 'u32[144,128]{1,0:T(1,128)}', space=vmem, size = 0x12000, scoped, tag = 'internal scratch']
  %s0 = inlined_call_operand.vmem [shape: f32[2,512,128], index: 0, kind: input, shape index: {}]
  %s1 = inlined_call_operand.vmem [shape: bf16[2,512,128], index: 1, kind: input, shape index: {}]
  %s2 = inlined_call_operand.vmem [shape: bf16[2,128,512], index: 2, kind: input, shape index: {}]
  %s3 = inlined_call_operand.vmem [shape: bf16[128,128], index: 3, kind: input, shape index: {}]
  %s4 = inlined_call_operand.vmem [shape: f32[1,128], index: 4, kind: input, shape index: {}]
  %s5 = inlined_call_operand.vmem [shape: f32[1,512], index: 5, kind: input, shape index: {}]
  %s6 = inlined_call_operand.vmem [shape: f32[2,512,1], index: 6, kind: input, shape index: {}]
  %s7 = inlined_call_operand.vmem [shape: f32[4,1,1], index: 7, kind: output, shape index: {0}]
  %s8 = inlined_call_operand.vmem [shape: f32[4,1,1], index: 8, kind: output, shape index: {1}]
  %9 = xla_tuple %s7, %s8
  %s10 = sld [smem:[#allocation0]]
  $region69: #{lorm_forward.1} parent=0
    _
  %s12 = ssub.s32 1, %s10
  %s13 = scalar_select 0, %s12, %s10
  loop: start=0, step=1, limit=6
  $region2: #{lorm_forward.1} parent=0 // loop_pre_header
    _
  $region3: #{lorm_forward.1} parent=0 // loop_header
    %s15 = sphi 0, %s19
    %p16 = scmp.ge.s32.totalorder %s15, 6
    %s22 = sphi 0, %s34
    %s23 = sphi 0, %s30
    %s24 = sphi 0, %s22
    %s25 = sphi 0, %s23
    %s26 = sphi 0, %s24
    %s27 = sphi 0, %s25
    %s39 = sphi 0, %s41
    %s42 = sphi 0, %s39
    %s43 = sphi 0, %s42
    %s59 = sphi 0, %s43
    %s65 = sphi 0, %s67
    %s68 = sphi 0, %s65
    %s69 = sphi 0, %s68
    %s85 = sphi 0, %s69
    %s91 = sphi 0, %s93
    %s94 = sphi 0, %s91
    %s95 = sphi 0, %s94
    %s111 = sphi 0, %s95
    %s115 = sphi 0, %s115
    %s117 = sphi 0, %s115
    %s118 = sphi 0, %s117
    %s132 = sphi 0, %s118
    %s136 = sphi 0, %s136
    %s138 = sphi 0, %s136
    %s139 = sphi 0, %s138
    %s153 = sphi 0, %s139
    %s157 = sphi 0, %s157
    %s159 = sphi 0, %s157
    %s160 = sphi 0, %s159
    %s174 = sphi 0, %s160
    %s182 = sphi 0, %s184
    %s185 = sphi 0, %s182
    %s186 = sphi 0, %s185
    %s202 = sphi 0, %s186
    %s212 = sphi 0, %s214
    %s215 = sphi 0, %s212
    %s216 = sphi 0, %s215
    %s232 = sphi 0, %s216
    %s242 = sphi 0, %s244
    %s245 = sphi 0, %s242
    %s246 = sphi 0, %s245
    %s262 = sphi 0, %s246
  $region4: #{lorm_forward.1} parent=0 // loop_header_branch
    %18 = sbr.rel (%p16) target = $region8
  $region5: #{lorm_forward.1} parent=0 // loop_body
    %s20 = ssub.s32 %s15, 1
    %s21 = ssub.s32 %s15, 2
    %s28 = sadd.s32 1, %s23
    %p29 = scmp.ge.s32.totalorder %s28, 2
    %s30 = scalar_select %p29, 0, %s28
    %s31 = sadd.s32 1, %s22
    %s32 = scalar_select %p29, %s31, %s22
    %p33 = scmp.ge.s32.totalorder %s32, 2
    %s34 = scalar_select %p33, 0, %s32
    %s35 = ssub.s32 %s22, %s34
    %s36 = ssub.s32 %s23, %s30
    %s37 = sor.u32 %s35, %s36
    %p38 = scmp.eq.s32.totalorder %s37, 0
    %s40 = sadd.s32 %s39, 1
    %s41 = scalar_select %p38, %s39, %s40
    %p44 = pneg %p38
    %p45 = scmp.eq.s32.totalorder %s15, 3
    %p46 = por %p44, %p45
    %p47 = scmp.ne.s32.totalorder %s39, %s42
    %p48 = scmp.eq.s32.totalorder %s15, 0
    %p49 = por %p47, %p48
    %p50 = scmp.ne.s32.totalorder %s39, %s42
    %p51 = scmp.eq.s32.totalorder %s20, 3
    %p52 = por %p50, %p51
    %p53 = scmp.ne.s32.totalorder %s42, %s43
    %p54 = scmp.eq.s32.totalorder %s20, 0
    %p55 = por %p53, %p54
    %p56 = scmp.ne.s32.totalorder %s42, %s43
    %p57 = scmp.eq.s32.totalorder %s21, 3
    %p58 = por %p56, %p57
    %p60 = scmp.ne.s32.totalorder %s43, %s59
    %p61 = scmp.eq.s32.totalorder %s21, 0
    %p62 = por %p60, %p61
    %s63 = ssub.s32 %s22, %s34
    %p64 = scmp.eq.s32.totalorder %s63, 0
    %s66 = sadd.s32 %s65, 1
    %s67 = scalar_select %p64, %s65, %s66
    %p70 = pneg %p64
    %p71 = scmp.eq.s32.totalorder %s15, 3
    %p72 = por %p70, %p71
    %p73 = scmp.ne.s32.totalorder %s65, %s68
    %p74 = scmp.eq.s32.totalorder %s15, 0
    %p75 = por %p73, %p74
    %p76 = scmp.ne.s32.totalorder %s65, %s68
    %p77 = scmp.eq.s32.totalorder %s20, 3
    %p78 = por %p76, %p77
    %p79 = scmp.ne.s32.totalorder %s68, %s69
    %p80 = scmp.eq.s32.totalorder %s20, 0
    %p81 = por %p79, %p80
    %p82 = scmp.ne.s32.totalorder %s68, %s69
    %p83 = scmp.eq.s32.totalorder %s21, 3
    %p84 = por %p82, %p83
    %p86 = scmp.ne.s32.totalorder %s69, %s85
    %p87 = scmp.eq.s32.totalorder %s21, 0
    %p88 = por %p86, %p87
    %s89 = ssub.s32 %s22, %s34
    %p90 = scmp.eq.s32.totalorder %s89, 0
    %s92 = sadd.s32 %s91, 1
    %s93 = scalar_select %p90, %s91, %s92
    %p96 = pneg %p90
    %p97 = scmp.eq.s32.totalorder %s15, 3
    %p98 = por %p96, %p97
    %p99 = scmp.ne.s32.totalorder %s91, %s94
    %p100 = scmp.eq.s32.totalorder %s15, 0
    %p101 = por %p99, %p100
    %p102 = scmp.ne.s32.totalorder %s91, %s94
    %p103 = scmp.eq.s32.totalorder %s20, 3
    %p104 = por %p102, %p103
    %p105 = scmp.ne.s32.totalorder %s94, %s95
    %p106 = scmp.eq.s32.totalorder %s20, 0
    %p107 = por %p105, %p106
    %p108 = scmp.ne.s32.totalorder %s94, %s95
    %p109 = scmp.eq.s32.totalorder %s21, 3
    %p110 = por %p108, %p109
    %p112 = scmp.ne.s32.totalorder %s95, %s111
    %p113 = scmp.eq.s32.totalorder %s21, 0
    %p114 = por %p112, %p113
    %s116 = sadd.s32 %s115, 1
    %p119 = scmp.eq.s32.totalorder %s15, 3
    %p120 = scmp.ne.s32.totalorder %s115, %s117
    %p121 = scmp.eq.s32.totalorder %s15, 0
    %p122 = por %p120, %p121
    %p123 = scmp.ne.s32.totalorder %s115, %s117
    %p124 = scmp.eq.s32.totalorder %s20, 3
    %p125 = por %p123, %p124
    %p126 = scmp.ne.s32.totalorder %s117, %s118
    %p127 = scmp.eq.s32.totalorder %s20, 0
    %p128 = por %p126, %p127
    %p129 = scmp.ne.s32.totalorder %s117, %s118
    %p130 = scmp.eq.s32.totalorder %s21, 3
    %p131 = por %p129, %p130
    %p133 = scmp.ne.s32.totalorder %s118, %s132
    %p134 = scmp.eq.s32.totalorder %s21, 0
    %p135 = por %p133, %p134
    %s137 = sadd.s32 %s136, 1
    %p140 = scmp.eq.s32.totalorder %s15, 3
    %p141 = scmp.ne.s32.totalorder %s136, %s138
    %p142 = scmp.eq.s32.totalorder %s15, 0
    %p143 = por %p141, %p142
    %p144 = scmp.ne.s32.totalorder %s136, %s138
    %p145 = scmp.eq.s32.totalorder %s20, 3
    %p146 = por %p144, %p145
    %p147 = scmp.ne.s32.totalorder %s138, %s139
    %p148 = scmp.eq.s32.totalorder %s20, 0
    %p149 = por %p147, %p148
    %p150 = scmp.ne.s32.totalorder %s138, %s139
    %p151 = scmp.eq.s32.totalorder %s21, 3
    %p152 = por %p150, %p151
    %p154 = scmp.ne.s32.totalorder %s139, %s153
    %p155 = scmp.eq.s32.totalorder %s21, 0
    %p156 = por %p154, %p155
    %s158 = sadd.s32 %s157, 1
    %p161 = scmp.eq.s32.totalorder %s15, 3
    %p162 = scmp.ne.s32.totalorder %s157, %s159
    %p163 = scmp.eq.s32.totalorder %s15, 0
    %p164 = por %p162, %p163
    %p165 = scmp.ne.s32.totalorder %s157, %s159
    %p166 = scmp.eq.s32.totalorder %s20, 3
    %p167 = por %p165, %p166
    %p168 = scmp.ne.s32.totalorder %s159, %s160
    %p169 = scmp.eq.s32.totalorder %s20, 0
    %p170 = por %p168, %p169
    %p171 = scmp.ne.s32.totalorder %s159, %s160
    %p172 = scmp.eq.s32.totalorder %s21, 3
    %p173 = por %p171, %p172
    %p175 = scmp.ne.s32.totalorder %s160, %s174
    %p176 = scmp.eq.s32.totalorder %s21, 0
    %p177 = por %p175, %p176
    %s178 = ssub.s32 %s22, %s34
    %s179 = ssub.s32 %s23, %s30
    %s180 = sor.u32 %s178, %s179
    %p181 = scmp.eq.s32.totalorder %s180, 0
    %s183 = sadd.s32 %s182, 1
    %s184 = scalar_select %p181, %s182, %s183
    %p187 = pneg %p181
    %p188 = scmp.eq.s32.totalorder %s15, 3
    %p189 = por %p187, %p188
    %p190 = scmp.ne.s32.totalorder %s182, %s185
    %p191 = scmp.eq.s32.totalorder %s15, 0
    %p192 = por %p190, %p191
    %p193 = scmp.ne.s32.totalorder %s182, %s185
    %p194 = scmp.eq.s32.totalorder %s20, 3
    %p195 = por %p193, %p194
    %p196 = scmp.ne.s32.totalorder %s185, %s186
    %p197 = scmp.eq.s32.totalorder %s20, 0
    %p198 = por %p196, %p197
    %p199 = scmp.ne.s32.totalorder %s185, %s186
    %p200 = scmp.eq.s32.totalorder %s21, 3
    %p201 = por %p199, %p200
    %p203 = scmp.ne.s32.totalorder %s186, %s202
    %p204 = scmp.eq.s32.totalorder %s21, 0
    %p205 = por %p203, %p204
    %s206 = smul.u32 %s22, 2
    %s207 = sadd.s32 %s206, %s23
    %s208 = smul.u32 %s34, 2
    %s209 = sadd.s32 %s208, %s30
    %s210 = ssub.s32 %s207, %s209
    %p211 = scmp.eq.s32.totalorder %s210, 0
    %s213 = sadd.s32 %s212, 1
    %s214 = scalar_select %p211, %s212, %s213
    %p217 = pneg %p211
    %p218 = scmp.eq.s32.totalorder %s15, 3
    %p219 = por %p217, %p218
    %p220 = scmp.ne.s32.totalorder %s212, %s215
    %p221 = scmp.eq.s32.totalorder %s15, 0
    %p222 = por %p220, %p221
    %p223 = scmp.ne.s32.totalorder %s212, %s215
    %p224 = scmp.eq.s32.totalorder %s20, 3
    %p225 = por %p223, %p224
    %p226 = scmp.ne.s32.totalorder %s215, %s216
    %p227 = scmp.eq.s32.totalorder %s20, 0
    %p228 = por %p226, %p227
    %p229 = scmp.ne.s32.totalorder %s215, %s216
    %p230 = scmp.eq.s32.totalorder %s21, 3
    %p231 = por %p229, %p230
    %p233 = scmp.ne.s32.totalorder %s216, %s232
    %p234 = scmp.eq.s32.totalorder %s21, 0
    %p235 = por %p233, %p234
    %s236 = smul.u32 %s22, 2
    %s237 = sadd.s32 %s236, %s23
    %s238 = smul.u32 %s34, 2
    %s239 = sadd.s32 %s238, %s30
    %s240 = ssub.s32 %s237, %s239
    %p241 = scmp.eq.s32.totalorder %s240, 0
    %s243 = sadd.s32 %s242, 1
    %s244 = scalar_select %p241, %s242, %s243
    %p247 = pneg %p241
    %p248 = scmp.eq.s32.totalorder %s15, 3
    %p249 = por %p247, %p248
    %p250 = scmp.ne.s32.totalorder %s242, %s245
    %p251 = scmp.eq.s32.totalorder %s15, 0
    %p252 = por %p250, %p251
    %p253 = scmp.ne.s32.totalorder %s242, %s245
    %p254 = scmp.eq.s32.totalorder %s20, 3
    %p255 = por %p253, %p254
    %p256 = scmp.ne.s32.totalorder %s245, %s246
    %p257 = scmp.eq.s32.totalorder %s20, 0
    %p258 = por %p256, %p257
    %p259 = scmp.ne.s32.totalorder %s245, %s246
    %p260 = scmp.eq.s32.totalorder %s21, 3
    %p261 = por %p259, %p260
    %p263 = scmp.ne.s32.totalorder %s246, %s262
    %p264 = scmp.eq.s32.totalorder %s21, 0
    %p265 = por %p263, %p264
    %p266 = scmp.le.s32.totalorder 1, %s15
    %p267 = scmp.lt.s32.totalorder %s15, 5
    %p268 = pnand %p266, %p267
    %p269 = pneg %p268
    // Predicated region
    $region9: #{lorm_forward.1} parent=5 // pred_check
      _
    $region10: #{lorm_forward.1} parent=5 // pred_check_branch
      %271 = sbr.rel (%p268) target = $region12
    $region11: #{lorm_forward.1} parent=5 // pred_region
      %s272 = ssub.s32 %s15, 1
      // Predicated region
      $region13: #{lorm_forward.1} parent=11 // pred_check
        %p273 = pneg %p81
      $region14: #{lorm_forward.1} parent=11 // pred_check_branch
        %275 = sbr.rel (%p273) target = $region16
      $region15: #{lorm_forward.1} parent=11 // pred_region
        %p276 = scmp.lt.s32.totalorder %s24, 1
        %s277 = scalar_select %p276, %s24, 1
        %s278 = smul.addr %s277, 64
        %s279 = smul.addr %s278, 4
        %s280 = scalar_lea.vmem %s1, %s279
      $region16: #{lorm_forward.1} parent=11 // pred_fallthru
        _
      // Predicated region
      $region17: #{lorm_forward.1} parent=11 // pred_check
        %p281 = pneg %p107
      $region18: #{lorm_forward.1} parent=11 // pred_check_branch
        %283 = sbr.rel (%p281) target = $region20
      $region19: #{lorm_forward.1} parent=11 // pred_region
        %p284 = scmp.lt.s32.totalorder %s24, 1
        %s285 = scalar_select %p284, %s24, 1
        %s286 = smul.addr %s285, 64
        %s287 = smul.addr %s286, 4
        %s288 = scalar_lea.vmem %s2, %s287
      $region20: #{lorm_forward.1} parent=11 // pred_fallthru
        _
      // Predicated region
      $region21: #{lorm_forward.1} parent=11 // pred_check
        %p289 = pneg %p128
      $region22: #{lorm_forward.1} parent=11 // pred_check_branch
        %291 = sbr.rel (%p289) target = $region24
      $region23: #{lorm_forward.1} parent=11 // pred_region
        _
      $region24: #{lorm_forward.1} parent=11 // pred_fallthru
        _
      // Predicated region
      $region25: #{lorm_forward.1} parent=11 // pred_check
        %p292 = pneg %p149
      $region26: #{lorm_forward.1} parent=11 // pred_check_branch
        %294 = sbr.rel (%p292) target = $region28
      $region27: #{lorm_forward.1} parent=11 // pred_region
        _
      $region28: #{lorm_forward.1} parent=11 // pred_fallthru
        _
      // Predicated region
      $region29: #{lorm_forward.1} parent=11 // pred_check
        %p295 = pneg %p170
      $region30: #{lorm_forward.1} parent=11 // pred_check_branch
        %297 = sbr.rel (%p295) target = $region32
      $region31: #{lorm_forward.1} parent=11 // pred_region
        _
      $region32: #{lorm_forward.1} parent=11 // pred_fallthru
        _
    $region12: #{lorm_forward.1} parent=5 // pred_fallthru
      _
    %p298 = scmp.lt.s32.totalorder %s15, 4
    // Predicated region
    $region33: #{lorm_forward.1} parent=5 // pred_check
      %p299 = pneg %p298
    $region34: #{lorm_forward.1} parent=5 // pred_check_branch
      %301 = sbr.rel (%p299) target = $region36
    $region35: #{lorm_forward.1} parent=5 // pred_region
      // Predicated region
      $region37: #{lorm_forward.1} parent=35 // pred_check
        %p302 = pneg %p49
      $region38: #{lorm_forward.1} parent=35 // pred_check_branch
        %304 = sbr.rel (%p302) target = $region40
      $region39: #{lorm_forward.1} parent=35 // pred_region
        %s305 = smul.u32 32, %s23
        %p306 = scmp.lt.s32.totalorder %s22, 1
        %s307 = scalar_select %p306, %s22, 1
        %p308 = scmp.lt.s32.totalorder %s305, 63
        %s309 = scalar_select %p308, %s305, 63
        %s310 = smul.addr %s307, 64
        %s311 = sadd.s32 %s309, %s310
        %s312 = smul.addr %s311, 8
        %s313 = scalar_lea.vmem %s0, %s312
        %s314 = smul.u32 32, %s23
      $region40: #{lorm_forward.1} parent=35 // pred_fallthru
        _
      // Predicated region
      $region41: #{lorm_forward.1} parent=35 // pred_check
        %p315 = pneg %p192
      $region42: #{lorm_forward.1} parent=35 // pred_check_branch
        %317 = sbr.rel (%p315) target = $region44
      $region43: #{lorm_forward.1} parent=35 // pred_region
        %s318 = smul.u32 32, %s23
        %p319 = scmp.lt.s32.totalorder %s22, 1
        %s320 = scalar_select %p319, %s22, 1
        %p321 = scmp.lt.s32.totalorder %s318, 63
        %s322 = scalar_select %p321, %s318, 63
        %s323 = smul.addr %s320, 64
        %s324 = sadd.s32 %s322, %s323
        %s325 = smul.addr %s324, 8
        %s326 = scalar_lea.vmem %s6, %s325
        %s327 = smul.u32 32, %s23
      $region44: #{lorm_forward.1} parent=35 // pred_fallthru
        _
    $region36: #{lorm_forward.1} parent=5 // pred_fallthru
      _
    %p328 = scmp.le.s32.totalorder 1, %s15
    %p329 = scmp.lt.s32.totalorder %s15, 5
    %p330 = pnand %p328, %p329
    %p331 = pneg %p330
    // Predicated region
    $region45: #{lorm_forward.1} parent=5 // pred_check
      _
    $region46: #{lorm_forward.1} parent=5 // pred_check_branch
      %333 = sbr.rel (%p330) target = $region48
    $region47: #{lorm_forward.1} parent=5 // pred_region
      %s334 = ssub.s32 %s15, 1
      %s335 = smul.u32 32, %s25
      %p336 = scmp.lt.s32.totalorder %s24, 1
      %s337 = scalar_select %p336, %s24, 1
      %p338 = scmp.lt.s32.totalorder %s335, 63
      %s339 = scalar_select %p338, %s335, 63
      %s340 = smul.addr %s337, 64
      %s341 = sadd.s32 %s339, %s340
      %s342 = smul.addr %s341, 8
      %s343 = scalar_lea.vmem %s0, %s342
      %p344 = pneg %p55
      %p345 = pneg %p52
      %p346 = scmp.lt.s32.totalorder %s24, 1
      %s347 = scalar_select %p346, %s24, 1
      %s348 = smul.addr %s347, 64
      %s349 = smul.addr %s348, 4
      %s350 = scalar_lea.vmem %s1, %s349
      %p351 = pneg %p81
      %p352 = pneg %p78
      %p353 = scmp.lt.s32.totalorder %s24, 1
      %s354 = scalar_select %p353, %s24, 1
      %s355 = smul.addr %s354, 64
      %s356 = smul.addr %s355, 4
      %s357 = scalar_lea.vmem %s2, %s356
      %p358 = pneg %p107
      %p359 = pneg %p104
      %p360 = pneg %p128
      %p361 = pneg %p125
      %p362 = pneg %p149
      %p363 = pneg %p146
      %p364 = pneg %p170
      %p365 = pneg %p167
      %s366 = smul.u32 32, %s25
      %p367 = scmp.lt.s32.totalorder %s24, 1
      %s368 = scalar_select %p367, %s24, 1
      %p369 = scmp.lt.s32.totalorder %s366, 63
      %s370 = scalar_select %p369, %s366, 63
      %s371 = smul.addr %s368, 64
      %s372 = sadd.s32 %s370, %s371
      %s373 = smul.addr %s372, 8
      %s374 = scalar_lea.vmem %s6, %s373
      %p375 = pneg %p198
      %p376 = pneg %p195
      %p377 = pneg %p228
      %p378 = pneg %p225
      %s379 = smul.u32 %s24, 2
      %s380 = sadd.s32 %s379, %s25
      %p381 = scmp.lt.s32.totalorder %s380, 3
      %s382 = scalar_select %p381, %s380, 3
      %s383 = scalar_lea.vmem %s7, %s382
      %p384 = pneg %p258
      %p385 = pneg %p255
      %s386 = smul.u32 %s24, 2
      %s387 = sadd.s32 %s386, %s25
      %p388 = scmp.lt.s32.totalorder %s387, 3
      %s389 = scalar_select %p388, %s387, 3
      %s390 = scalar_lea.vmem %s8, %s389
      %s391 = smul.u32 32, %s25
      %p392 = scmp.lt.s32.totalorder %s24, 1
      %s393 = scalar_select %p392, %s24, 1
      %p394 = scmp.lt.s32.totalorder %s391, 63
      %s395 = scalar_select %p394, %s391, 63
      %s396 = smul.addr %s393, 64
      %s397 = sadd.s32 %s395, %s396
      %s398 = smul.addr %s397, 8
      %s399 = scalar_lea.vmem %s0, %s398
      %s400 = smul.u32 32, %s25
      %p401 = scmp.lt.s32.totalorder %s24, 1
      %s402 = scalar_select %p401, %s24, 1
      %s403 = smul.addr %s402, 64
      %s404 = smul.addr %s403, 4
      %s405 = scalar_lea.vmem %s1, %s404
      %p406 = scmp.lt.s32.totalorder %s24, 1
      %s407 = scalar_select %p406, %s24, 1
      %s408 = smul.addr %s407, 64
      %s409 = smul.addr %s408, 4
      %s410 = scalar_lea.vmem %s2, %s409
      %s411 = smul.u32 32, %s25
      %p412 = scmp.lt.s32.totalorder %s24, 1
      %s413 = scalar_select %p412, %s24, 1
      %p414 = scmp.lt.s32.totalorder %s411, 63
      %s415 = scalar_select %p414, %s411, 63
      %s416 = smul.addr %s413, 64
      %s417 = sadd.s32 %s415, %s416
      %s418 = smul.addr %s417, 8
      %s419 = scalar_lea.vmem %s6, %s418
      %s420 = smul.u32 32, %s25
      %s421 = smul.u32 %s24, 2
      %s422 = sadd.s32 %s421, %s25
      %p423 = scmp.lt.s32.totalorder %s422, 3
      %s424 = scalar_select %p423, %s422, 3
      %s425 = scalar_lea.vmem %s7, %s424
      %s426 = smul.u32 %s24, 2
      %s427 = sadd.s32 %s426, %s25
      %s428 = smul.u32 %s24, 2
      %s429 = sadd.s32 %s428, %s25
      %p430 = scmp.lt.s32.totalorder %s429, 3
      %s431 = scalar_select %p430, %s429, 3
      %s432 = scalar_lea.vmem %s8, %s431
      %s433 = smul.u32 %s24, 2
      %s434 = sadd.s32 %s433, %s25
      %v436 = vld [vmem:[%s399] sm:$0xff]
      %v437 = vld [vmem:[%s399 + $0x8] sm:$0xff]
      %v438 = vld [vmem:[%s399 + $0x10] sm:$0xff]
      %v439 = vld [vmem:[%s399 + $0x18] sm:$0xff]
      %v440 = vld [vmem:[%s399 + $0x20] sm:$0xff]
      %v441 = vld [vmem:[%s399 + $0x28] sm:$0xff]
      %v442 = vld [vmem:[%s399 + $0x30] sm:$0xff]
      %v443 = vld [vmem:[%s399 + $0x38] sm:$0xff]
      %v444 = vld [vmem:[%s399 + $0x40] sm:$0xff]
      %v445 = vld [vmem:[%s399 + $0x48] sm:$0xff]
      %v446 = vld [vmem:[%s399 + $0x50] sm:$0xff]
      %v447 = vld [vmem:[%s399 + $0x58] sm:$0xff]
      %v448 = vld [vmem:[%s399 + $0x60] sm:$0xff]
      %v449 = vld [vmem:[%s399 + $0x68] sm:$0xff]
      %v450 = vld [vmem:[%s399 + $0x70] sm:$0xff]
      %v451 = vld [vmem:[%s399 + $0x78] sm:$0xff]
      %v452 = vld [vmem:[%s399 + $0x80] sm:$0xff]
      %v453 = vld [vmem:[%s399 + $0x88] sm:$0xff]
      %v454 = vld [vmem:[%s399 + $0x90] sm:$0xff]
      %v455 = vld [vmem:[%s399 + $0x98] sm:$0xff]
      %v456 = vld [vmem:[%s399 + $0xa0] sm:$0xff]
      %v457 = vld [vmem:[%s399 + $0xa8] sm:$0xff]
      %v458 = vld [vmem:[%s399 + $0xb0] sm:$0xff]
      %v459 = vld [vmem:[%s399 + $0xb8] sm:$0xff]
      %v460 = vld [vmem:[%s399 + $0xc0] sm:$0xff]
      %v461 = vld [vmem:[%s399 + $0xc8] sm:$0xff]
      %v462 = vld [vmem:[%s399 + $0xd0] sm:$0xff]
      %v463 = vld [vmem:[%s399 + $0xd8] sm:$0xff]
      %v464 = vld [vmem:[%s399 + $0xe0] sm:$0xff]
      %v465 = vld [vmem:[%s399 + $0xe8] sm:$0xff]
      %v466 = vld [vmem:[%s399 + $0xf0] sm:$0xff]
      %v467 = vld [vmem:[%s399 + $0xf8] sm:$0xff]
      %v468 = vpack.c.bf16 %v437, %v436
      %v469 = vpack.c.bf16 %v439, %v438
      %v470 = vpack.c.bf16 %v441, %v440
      %v471 = vpack.c.bf16 %v443, %v442
      %v472 = vpack.c.bf16 %v445, %v444
      %v473 = vpack.c.bf16 %v447, %v446
      %v474 = vpack.c.bf16 %v449, %v448
      %v475 = vpack.c.bf16 %v451, %v450
      %v476 = vpack.c.bf16 %v453, %v452
      %v477 = vpack.c.bf16 %v455, %v454
      %v478 = vpack.c.bf16 %v457, %v456
      %v479 = vpack.c.bf16 %v459, %v458
      %v480 = vpack.c.bf16 %v461, %v460
      %v481 = vpack.c.bf16 %v463, %v462
      %v482 = vpack.c.bf16 %v465, %v464
      %v483 = vpack.c.bf16 %v467, %v466
      %v484 = vld [vmem:[%s3] sm:$0xf]
      %v485 = vld [vmem:[%s3 + $0x4] sm:$0xf]
      %v486 = vld [vmem:[%s3 + $0x8] sm:$0xf]
      %v487 = vld [vmem:[%s3 + $0xc] sm:$0xf]
      %v488 = vld [vmem:[%s3 + $0x10] sm:$0xf]
      %v489 = vld [vmem:[%s3 + $0x14] sm:$0xf]
      %v490 = vld [vmem:[%s3 + $0x18] sm:$0xf]
      %v491 = vld [vmem:[%s3 + $0x1c] sm:$0xf]
      %v492 = vld [vmem:[%s3 + $0x20] sm:$0xf]
      %v493 = vld [vmem:[%s3 + $0x24] sm:$0xf]
      %v494 = vld [vmem:[%s3 + $0x28] sm:$0xf]
      %v495 = vld [vmem:[%s3 + $0x2c] sm:$0xf]
      %v496 = vld [vmem:[%s3 + $0x30] sm:$0xf]
      %v497 = vld [vmem:[%s3 + $0x34] sm:$0xf]
      %v498 = vld [vmem:[%s3 + $0x38] sm:$0xf]
      %v499 = vld [vmem:[%s3 + $0x3c] sm:$0xf]
      %v500 = vld [vmem:[%s4] sm:$0x1]
      %v502 = vlaneseq
      %v503 = vshrl.u32 %v502, 7
      %v504 = vsub.s32 0, %v503
      %v505 = vrot.slane %v500, %v504
      %v523 = vunpack.c.l.b16 %v484
      %v524 = vunpack.c.l.b16 %v485
      %v525 = vunpack.c.l.b16 %v486
      %v526 = vunpack.c.l.b16 %v487
      %v527 = vunpack.c.l.b16 %v488
      %v528 = vunpack.c.l.b16 %v489
      %v529 = vunpack.c.l.b16 %v490
      %v530 = vunpack.c.l.b16 %v491
      %v531 = vunpack.c.l.b16 %v492
      %v532 = vunpack.c.l.b16 %v493
      %v533 = vunpack.c.l.b16 %v494
      %v534 = vunpack.c.l.b16 %v495
      %v535 = vunpack.c.l.b16 %v496
      %v536 = vunpack.c.l.b16 %v497
      %v537 = vunpack.c.l.b16 %v498
      %v538 = vunpack.c.l.b16 %v499
      %v539 = vpack.c.b16 %v524, %v523
      %v540 = vpack.c.b16 %v526, %v525
      %v541 = vpack.c.b16 %v528, %v527
      %v542 = vpack.c.b16 %v530, %v529
      %v543 = vpack.c.b16 %v532, %v531
      %v544 = vpack.c.b16 %v534, %v533
      %v545 = vpack.c.b16 %v536, %v535
      %v546 = vpack.c.b16 %v538, %v537
      %555 = vmatprep.subr.bf16.mxu0 0
      %556 = vmatpush1.bf16.msra.mxu0 %v539
      %557 = vmatprep.subr.bf16.mxu0 0
      %558 = vmatpush1.bf16.msra.mxu0 %v540
      %559 = vmatprep.subr.bf16.mxu0 0
      %560 = vmatpush1.bf16.msra.mxu0 %v541
      %561 = vmatprep.subr.bf16.mxu0 0
      %562 = vmatpush1.bf16.msra.mxu0 %v542
      %563 = vmatprep.subr.bf16.mxu0 0
      %564 = vmatpush1.bf16.msra.mxu0 %v543
      %565 = vmatprep.subr.bf16.mxu0 0
      %566 = vmatpush1.bf16.msra.mxu0 %v544
      %567 = vmatprep.subr.bf16.mxu0 0
      %568 = vmatpush1.bf16.msra.mxu0 %v545
      %569 = vmatprep.subr.bf16.mxu0 0
      %570 = vmatpush1.bf16.msra.mxu0 %v546
      %571 = vmatprep.subr.bf16.mxu0 0
      %572 = vmatpush1.bf16.msra.mxu0 0
      %573 = vmatprep.subr.bf16.mxu0 0
      %574 = vmatpush1.bf16.msra.mxu0 0
      %575 = vmatprep.subr.bf16.mxu0 0
      %576 = vmatpush1.bf16.msra.mxu0 0
      %577 = vmatprep.subr.bf16.mxu0 0
      %578 = vmatpush1.bf16.msra.mxu0 0
      %579 = vmatprep.subr.bf16.mxu0 0
      %580 = vmatpush1.bf16.msra.mxu0 0
      %581 = vmatprep.subr.bf16.mxu0 0
      %582 = vmatpush1.bf16.msra.mxu0 0
      %583 = vmatprep.subr.bf16.mxu0 0
      %584 = vmatpush1.bf16.msra.mxu0 0
      %585 = vmatprep.subr.bf16.mxu0 0
      %586 = vmatpush1.bf16.msra.mxu0 0
      %587 = vmatprep.mubr.bf16.mxu0 0
      %588 = vmatmul.mubr.bf16.gmra.mrb[0].mxu0 %v468
      %v589 = vpop.f32.mrb[0].mxu0
      %v590 = vadd.f32 %v505, %v589
      %v591 = vpop.f32.mrb[0].mxu0
      %v592 = vpop.f32.mrb[0].mxu0
      %v593 = vadd.f32 %v505, %v592
      %v594 = vpop.f32.mrb[0].mxu0
      %595 = vmatprep.mubr.bf16.mxu0 0
      %596 = vmatmul.mubr.bf16.gmra.mrb[0].mxu0 %v469
      %v597 = vpop.f32.mrb[0].mxu0
      %v598 = vadd.f32 %v505, %v597
      %v599 = vpop.f32.mrb[0].mxu0
      %v600 = vpop.f32.mrb[0].mxu0
      %v601 = vadd.f32 %v505, %v600
      %v602 = vpop.f32.mrb[0].mxu0
      %603 = vmatprep.mubr.bf16.mxu0 0
      %604 = vmatmul.mubr.bf16.gmra.mrb[0].mxu0 %v470
      %v605 = vpop.f32.mrb[0].mxu0
      %v606 = vadd.f32 %v505, %v605
      %v607 = vpop.f32.mrb[0].mxu0
      %v608 = vpop.f32.mrb[0].mxu0
      %v609 = vadd.f32 %v505, %v608
      %v610 = vpop.f32.mrb[0].mxu0
      %611 = vmatprep.mubr.bf16.mxu0 0
      %612 = vmatmul.mubr.bf16.gmra.mrb[0].mxu0 %v471
      %v613 = vpop.f32.mrb[0].mxu0
      %v614 = vadd.f32 %v505, %v613
      %v615 = vpop.f32.mrb[0].mxu0
      %v616 = vpop.f32.mrb[0].mxu0
      %v617 = vadd.f32 %v505, %v616
      %v618 = vpop.f32.mrb[0].mxu0
      %619 = vmatprep.mubr.bf16.mxu0 0
      %620 = vmatmul.mubr.bf16.gmra.mrb[0].mxu0 %v472
      %v621 = vpop.f32.mrb[0].mxu0
      %v622 = vadd.f32 %v505, %v621
      %v623 = vpop.f32.mrb[0].mxu0
      %v624 = vpop.f32.mrb[0].mxu0
      %v625 = vadd.f32 %v505, %v624
      %v626 = vpop.f32.mrb[0].mxu0
      %627 = vmatprep.mubr.bf16.mxu0 0
      %628 = vmatmul.mubr.bf16.gmra.mrb[0].mxu0 %v473
      %v629 = vpop.f32.mrb[0].mxu0
      %v630 = vadd.f32 %v505, %v629
      %v631 = vpop.f32.mrb[0].mxu0
      %v632 = vpop.f32.mrb[0].mxu0
      %v633 = vadd.f32 %v505, %v632
      %v634 = vpop.f32.mrb[0].mxu0
      %635 = vmatprep.mubr.bf16.mxu0 0
      %636 = vmatmul.mubr.bf16.gmra.mrb[0].mxu0 %v474
      %v637 = vpop.f32.mrb[0].mxu0
      %v638 = vadd.f32 %v505, %v637
      %v639 = vpop.f32.mrb[0].mxu0
      %v640 = vpop.f32.mrb[0].mxu0
      %v641 = vadd.f32 %v505, %v640
      %v642 = vpop.f32.mrb[0].mxu0
      %643 = vmatprep.mubr.bf16.mxu0 0
      %644 = vmatmul.mubr.bf16.gmra.mrb[0].mxu0 %v475
      %v645 = vpop.f32.mrb[0].mxu0
      %v646 = vadd.f32 %v505, %v645
      %v647 = vpop.f32.mrb[0].mxu0
      %v648 = vpop.f32.mrb[0].mxu0
      %v649 = vadd.f32 %v505, %v648
      %v650 = vpop.f32.mrb[0].mxu0
      %651 = vmatprep.mubr.bf16.mxu0 0
      %652 = vmatmul.mubr.bf16.gmra.mrb[0].mxu0 %v476
      %v653 = vpop.f32.mrb[0].mxu0
      %v654 = vadd.f32 %v505, %v653
      %v655 = vpop.f32.mrb[0].mxu0
      %v656 = vpop.f32.mrb[0].mxu0
      %v657 = vadd.f32 %v505, %v656
      %v658 = vpop.f32.mrb[0].mxu0
      %659 = vmatprep.mubr.bf16.mxu0 0
      %660 = vmatmul.mubr.bf16.gmra.mrb[0].mxu0 %v477
      %v661 = vpop.f32.mrb[0].mxu0
      %v662 = vadd.f32 %v505, %v661
      %v663 = vpop.f32.mrb[0].mxu0
      %v664 = vpop.f32.mrb[0].mxu0
      %v665 = vadd.f32 %v505, %v664
      %v666 = vpop.f32.mrb[0].mxu0
      %667 = vmatprep.mubr.bf16.mxu0 0
      %668 = vmatmul.mubr.bf16.gmra.mrb[0].mxu0 %v478
      %v669 = vpop.f32.mrb[0].mxu0
      %v670 = vadd.f32 %v505, %v669
      %v671 = vpop.f32.mrb[0].mxu0
      %v672 = vpop.f32.mrb[0].mxu0
      %v673 = vadd.f32 %v505, %v672
      %v674 = vpop.f32.mrb[0].mxu0
      %675 = vmatprep.mubr.bf16.mxu0 0
      %676 = vmatmul.mubr.bf16.gmra.mrb[0].mxu0 %v479
      %v677 = vpop.f32.mrb[0].mxu0
      %v678 = vadd.f32 %v505, %v677
      %v679 = vpop.f32.mrb[0].mxu0
      %v680 = vpop.f32.mrb[0].mxu0
      %v681 = vadd.f32 %v505, %v680
      %v682 = vpop.f32.mrb[0].mxu0
      %683 = vmatprep.mubr.bf16.mxu0 0
      %684 = vmatmul.mubr.bf16.gmra.mrb[0].mxu0 %v480
      %v685 = vpop.f32.mrb[0].mxu0
      %v686 = vadd.f32 %v505, %v685
      %v687 = vpop.f32.mrb[0].mxu0
      %v688 = vpop.f32.mrb[0].mxu0
      %v689 = vadd.f32 %v505, %v688
      %v690 = vpop.f32.mrb[0].mxu0
      %691 = vmatprep.mubr.bf16.mxu0 0
      %692 = vmatmul.mubr.bf16.gmra.mrb[0].mxu0 %v481
      %v693 = vpop.f32.mrb[0].mxu0
      %v694 = vadd.f32 %v505, %v693
      %v695 = vpop.f32.mrb[0].mxu0
      %v696 = vpop.f32.mrb[0].mxu0
      %v697 = vadd.f32 %v505, %v696
      %v698 = vpop.f32.mrb[0].mxu0
      %699 = vmatprep.mubr.bf16.mxu0 0
      %700 = vmatmul.mubr.bf16.gmra.mrb[0].mxu0 %v482
      %v701 = vpop.f32.mrb[0].mxu0
      %v702 = vadd.f32 %v505, %v701
      %v703 = vpop.f32.mrb[0].mxu0
      %v704 = vpop.f32.mrb[0].mxu0
      %v705 = vadd.f32 %v505, %v704
      %v706 = vpop.f32.mrb[0].mxu0
      %707 = vmatprep.mubr.bf16.mxu0 0
      %708 = vmatmul.mubr.bf16.gmra.mrb[0].mxu0 %v483
      %v709 = vpop.f32.mrb[0].mxu0
      %v710 = vadd.f32 %v505, %v709
      %v711 = vpop.f32.mrb[0].mxu0
      %v712 = vpop.f32.mrb[0].mxu0
      %v713 = vadd.f32 %v505, %v712
      %v714 = vpop.f32.mrb[0].mxu0
      %715 = vdwg.mxu0
      %v716 = vmul.f32 %v590, %v590
      %v717 = vmul.f32 %v593, %v593
      %v718 = vmul.f32 %v598, %v598
      %v719 = vmul.f32 %v601, %v601
      %v720 = vmul.f32 %v606, %v606
      %v721 = vmul.f32 %v609, %v609
      %v722 = vmul.f32 %v614, %v614
      %v723 = vmul.f32 %v617, %v617
      %v724 = vmul.f32 %v622, %v622
      %v725 = vmul.f32 %v625, %v625
      %v726 = vmul.f32 %v630, %v630
      %v727 = vmul.f32 %v633, %v633
      %v728 = vmul.f32 %v638, %v638
      %v729 = vmul.f32 %v641, %v641
      %v730 = vmul.f32 %v646, %v646
      %v731 = vmul.f32 %v649, %v649
      %v732 = vmul.f32 %v654, %v654
      %v733 = vmul.f32 %v657, %v657
      %v734 = vmul.f32 %v662, %v662
      %v735 = vmul.f32 %v665, %v665
      %v736 = vmul.f32 %v670, %v670
      %v737 = vmul.f32 %v673, %v673
      %v738 = vmul.f32 %v678, %v678
      %v739 = vmul.f32 %v681, %v681
      %v740 = vmul.f32 %v686, %v686
      %v741 = vmul.f32 %v689, %v689
      %v742 = vmul.f32 %v694, %v694
      %v743 = vmul.f32 %v697, %v697
      %v744 = vmul.f32 %v702, %v702
      %v745 = vmul.f32 %v705, %v705
      %v746 = vmul.f32 %v710, %v710
      %v747 = vmul.f32 %v713, %v713
      %748 = vadd.xlane.f32.xlu0 %v716
      %v749 = vpop.xlane.xlu0 %748
      %750 = vadd.xlane.f32.xlu0 %v717
      %v751 = vpop.xlane.xlu0 %750
      %752 = vadd.xlane.f32.xlu0 %v718
      %v753 = vpop.xlane.xlu0 %752
      %754 = vadd.xlane.f32.xlu0 %v719
      %v755 = vpop.xlane.xlu0 %754
      %756 = vadd.xlane.f32.xlu0 %v720
      %v757 = vpop.xlane.xlu0 %756
      %758 = vadd.xlane.f32.xlu0 %v721
      %v759 = vpop.xlane.xlu0 %758
      %760 = vadd.xlane.f32.xlu0 %v722
      %v761 = vpop.xlane.xlu0 %760
      %762 = vadd.xlane.f32.xlu0 %v723
      %v763 = vpop.xlane.xlu0 %762
      %764 = vadd.xlane.f32.xlu0 %v724
      %v765 = vpop.xlane.xlu0 %764
      %766 = vadd.xlane.f32.xlu0 %v725
      %v767 = vpop.xlane.xlu0 %766
      %768 = vadd.xlane.f32.xlu0 %v726
      %v769 = vpop.xlane.xlu0 %768
      %770 = vadd.xlane.f32.xlu0 %v727
      %v771 = vpop.xlane.xlu0 %770
      %772 = vadd.xlane.f32.xlu0 %v728
      %v773 = vpop.xlane.xlu0 %772
      %774 = vadd.xlane.f32.xlu0 %v729
      %v775 = vpop.xlane.xlu0 %774
      %776 = vadd.xlane.f32.xlu0 %v730
      %v777 = vpop.xlane.xlu0 %776
      %778 = vadd.xlane.f32.xlu0 %v731
      %v779 = vpop.xlane.xlu0 %778
      %780 = vadd.xlane.f32.xlu0 %v732
      %v781 = vpop.xlane.xlu0 %780
      %782 = vadd.xlane.f32.xlu0 %v733
      %v783 = vpop.xlane.xlu0 %782
      %784 = vadd.xlane.f32.xlu0 %v734
      %v785 = vpop.xlane.xlu0 %784
      %786 = vadd.xlane.f32.xlu0 %v735
      %v787 = vpop.xlane.xlu0 %786
      %788 = vadd.xlane.f32.xlu0 %v736
      %v789 = vpop.xlane.xlu0 %788
      %790 = vadd.xlane.f32.xlu0 %v737
      %v791 = vpop.xlane.xlu0 %790
      %792 = vadd.xlane.f32.xlu0 %v738
      %v793 = vpop.xlane.xlu0 %792
      %794 = vadd.xlane.f32.xlu0 %v739
      %v795 = vpop.xlane.xlu0 %794
      %796 = vadd.xlane.f32.xlu0 %v740
      %v797 = vpop.xlane.xlu0 %796
      %798 = vadd.xlane.f32.xlu0 %v741
      %v799 = vpop.xlane.xlu0 %798
      %800 = vadd.xlane.f32.xlu0 %v742
      %v801 = vpop.xlane.xlu0 %800
      %802 = vadd.xlane.f32.xlu0 %v743
      %v803 = vpop.xlane.xlu0 %802
      %804 = vadd.xlane.f32.xlu0 %v744
      %v805 = vpop.xlane.xlu0 %804
      %806 = vadd.xlane.f32.xlu0 %v745
      %v807 = vpop.xlane.xlu0 %806
      %808 = vadd.xlane.f32.xlu0 %v746
      %v809 = vpop.xlane.xlu0 %808
      %810 = vadd.xlane.f32.xlu0 %v747
      %v811 = vpop.xlane.xlu0 %810
      %v812 = vmax.f32 %v749, 1e-30
      %v813 = vmax.f32 %v751, 1e-30
      %v814 = vmax.f32 %v753, 1e-30
      %v815 = vmax.f32 %v755, 1e-30
      %v816 = vmax.f32 %v757, 1e-30
      %v817 = vmax.f32 %v759, 1e-30
      %v818 = vmax.f32 %v761, 1e-30
      %v819 = vmax.f32 %v763, 1e-30
      %v820 = vmax.f32 %v765, 1e-30
      %v821 = vmax.f32 %v767, 1e-30
      %v822 = vmax.f32 %v769, 1e-30
      %v823 = vmax.f32 %v771, 1e-30
      %v824 = vmax.f32 %v773, 1e-30
      %v825 = vmax.f32 %v775, 1e-30
      %v826 = vmax.f32 %v777, 1e-30
      %v827 = vmax.f32 %v779, 1e-30
      %v828 = vmax.f32 %v781, 1e-30
      %v829 = vmax.f32 %v783, 1e-30
      %v830 = vmax.f32 %v785, 1e-30
      %v831 = vmax.f32 %v787, 1e-30
      %v832 = vmax.f32 %v789, 1e-30
      %v833 = vmax.f32 %v791, 1e-30
      %v834 = vmax.f32 %v793, 1e-30
      %v835 = vmax.f32 %v795, 1e-30
      %v836 = vmax.f32 %v797, 1e-30
      %v837 = vmax.f32 %v799, 1e-30
      %v838 = vmax.f32 %v801, 1e-30
      %v839 = vmax.f32 %v803, 1e-30
      %v840 = vmax.f32 %v805, 1e-30
      %v841 = vmax.f32 %v807, 1e-30
      %v842 = vmax.f32 %v809, 1e-30
      %v843 = vmax.f32 %v811, 1e-30
      %v844 = vrsqrt.pop %v812
      %v845 = vrsqrt.pop %v813
      %v846 = vrsqrt.pop %v814
      %v847 = vrsqrt.pop %v815
      %v848 = vrsqrt.pop %v816
      %v849 = vrsqrt.pop %v817
      %v850 = vrsqrt.pop %v818
      %v851 = vrsqrt.pop %v819
      %v852 = vrsqrt.pop %v820
      %v853 = vrsqrt.pop %v821
      %v854 = vrsqrt.pop %v822
      %v855 = vrsqrt.pop %v823
      %v856 = vrsqrt.pop %v824
      %v857 = vrsqrt.pop %v825
      %v858 = vrsqrt.pop %v826
      %v859 = vrsqrt.pop %v827
      %v860 = vrsqrt.pop %v828
      %v861 = vrsqrt.pop %v829
      %v862 = vrsqrt.pop %v830
      %v863 = vrsqrt.pop %v831
      %v864 = vrsqrt.pop %v832
      %v865 = vrsqrt.pop %v833
      %v866 = vrsqrt.pop %v834
      %v867 = vrsqrt.pop %v835
      %v868 = vrsqrt.pop %v836
      %v869 = vrsqrt.pop %v837
      %v870 = vrsqrt.pop %v838
      %v871 = vrsqrt.pop %v839
      %v872 = vrsqrt.pop %v840
      %v873 = vrsqrt.pop %v841
      %v874 = vrsqrt.pop %v842
      %v875 = vrsqrt.pop %v843
      %v876 = vmul.f32 %v590, %v844
      %v877 = vmul.f32 %v593, %v845
      %v878 = vmul.f32 %v598, %v846
      %v879 = vmul.f32 %v601, %v847
      %v880 = vmul.f32 %v606, %v848
      %v881 = vmul.f32 %v609, %v849
      %v882 = vmul.f32 %v614, %v850
      %v883 = vmul.f32 %v617, %v851
      %v884 = vmul.f32 %v622, %v852
      %v885 = vmul.f32 %v625, %v853
      %v886 = vmul.f32 %v630, %v854
      %v887 = vmul.f32 %v633, %v855
      %v888 = vmul.f32 %v638, %v856
      %v889 = vmul.f32 %v641, %v857
      %v890 = vmul.f32 %v646, %v858
      %v891 = vmul.f32 %v649, %v859
      %v892 = vmul.f32 %v654, %v860
      %v893 = vmul.f32 %v657, %v861
      %v894 = vmul.f32 %v662, %v862
      %v895 = vmul.f32 %v665, %v863
      %v896 = vmul.f32 %v670, %v864
      %v897 = vmul.f32 %v673, %v865
      %v898 = vmul.f32 %v678, %v866
      %v899 = vmul.f32 %v681, %v867
      %v900 = vmul.f32 %v686, %v868
      %v901 = vmul.f32 %v689, %v869
      %v902 = vmul.f32 %v694, %v870
      %v903 = vmul.f32 %v697, %v871
      %v904 = vmul.f32 %v702, %v872
      %v905 = vmul.f32 %v705, %v873
      %v906 = vmul.f32 %v710, %v874
      %v907 = vmul.f32 %v713, %v875
      %v908 = vpack.c.bf16 %v877, %v876
      %v909 = vpack.c.bf16 %v879, %v878
      %v910 = vpack.c.bf16 %v881, %v880
      %v911 = vpack.c.bf16 %v883, %v882
      %v912 = vpack.c.bf16 %v885, %v884
      %v913 = vpack.c.bf16 %v887, %v886
      %v914 = vpack.c.bf16 %v889, %v888
      %v915 = vpack.c.bf16 %v891, %v890
      %v916 = vpack.c.bf16 %v893, %v892
      %v917 = vpack.c.bf16 %v895, %v894
      %v918 = vpack.c.bf16 %v897, %v896
      %v919 = vpack.c.bf16 %v899, %v898
      %v920 = vpack.c.bf16 %v901, %v900
      %v921 = vpack.c.bf16 %v903, %v902
      %v922 = vpack.c.bf16 %v905, %v904
      %v923 = vpack.c.bf16 %v907, %v906
      %v924 = vld [vmem:[%s410] sm:$0xff]
      %v925 = vld [vmem:[%s410 + $0x8] sm:$0xff]
      %v926 = vld [vmem:[%s410 + $0x10] sm:$0xff]
      %v927 = vld [vmem:[%s410 + $0x18] sm:$0xff]
      %v928 = vld [vmem:[%s410 + $0x20] sm:$0xff]
      %v929 = vld [vmem:[%s410 + $0x28] sm:$0xff]
      %v930 = vld [vmem:[%s410 + $0x30] sm:$0xff]
      %v931 = vld [vmem:[%s410 + $0x38] sm:$0xff]
      %v932 = vld [vmem:[%s410 + $0x40] sm:$0xff]
      %v933 = vld [vmem:[%s410 + $0x48] sm:$0xff]
      %v934 = vld [vmem:[%s410 + $0x50] sm:$0xff]
      %v935 = vld [vmem:[%s410 + $0x58] sm:$0xff]
      %v936 = vld [vmem:[%s410 + $0x60] sm:$0xff]
      %v937 = vld [vmem:[%s410 + $0x68] sm:$0xff]
      %v938 = vld [vmem:[%s410 + $0x70] sm:$0xff]
      %v939 = vld [vmem:[%s410 + $0x78] sm:$0xff]
      %v940 = vld [vmem:[%s410 + $0x80] sm:$0xff]
      %v941 = vld [vmem:[%s410 + $0x88] sm:$0xff]
      %v942 = vld [vmem:[%s410 + $0x90] sm:$0xff]
      %v943 = vld [vmem:[%s410 + $0x98] sm:$0xff]
      %v944 = vld [vmem:[%s410 + $0xa0] sm:$0xff]
      %v945 = vld [vmem:[%s410 + $0xa8] sm:$0xff]
      %v946 = vld [vmem:[%s410 + $0xb0] sm:$0xff]
      %v947 = vld [vmem:[%s410 + $0xb8] sm:$0xff]
      %v948 = vld [vmem:[%s410 + $0xc0] sm:$0xff]
      %v949 = vld [vmem:[%s410 + $0xc8] sm:$0xff]
      %v950 = vld [vmem:[%s410 + $0xd0] sm:$0xff]
      %v951 = vld [vmem:[%s410 + $0xd8] sm:$0xff]
      %v952 = vld [vmem:[%s410 + $0xe0] sm:$0xff]
      %v953 = vld [vmem:[%s410 + $0xe8] sm:$0xff]
      %v954 = vld [vmem:[%s410 + $0xf0] sm:$0xff]
      %v955 = vld [vmem:[%s410 + $0xf8] sm:$0xff]
      %v956 = vld [vmem:[%s5] sm:$0xf]
      %v958 = vlaneseq
      %v959 = vshrl.u32 %v958, 7
      %v960 = vsub.s32 0, %v959
      %v961 = vrot.slane %v956, %v960
      %v962 = vlaneseq
      %v963 = vshrl.u32 %v962, 7
      %v964 = vsub.s32 1, %v963
      %v965 = vrot.slane %v956, %v964
      %v966 = vlaneseq
      %v967 = vshrl.u32 %v966, 7
      %v968 = vsub.s32 2, %v967
      %v969 = vrot.slane %v956, %v968
      %v970 = vlaneseq
      %v971 = vshrl.u32 %v970, 7
      %v972 = vsub.s32 3, %v971
      %v973 = vrot.slane %v956, %v972
      %v1010 = vunpack.c.l.b16 %v924
      %v1011 = vunpack.c.h.b16 %v924
      %v1012 = vunpack.c.l.b16 %v925
      %v1013 = vunpack.c.h.b16 %v925
      %v1014 = vunpack.c.l.b16 %v926
      %v1015 = vunpack.c.h.b16 %v926
      %v1016 = vunpack.c.l.b16 %v927
      %v1017 = vunpack.c.h.b16 %v927
      %v1018 = vunpack.c.l.b16 %v928
      %v1019 = vunpack.c.h.b16 %v928
      %v1020 = vunpack.c.l.b16 %v929
      %v1021 = vunpack.c.h.b16 %v929
      %v1022 = vunpack.c.l.b16 %v930
      %v1023 = vunpack.c.h.b16 %v930
      %v1024 = vunpack.c.l.b16 %v931
      %v1025 = vunpack.c.h.b16 %v931
      %v1026 = vunpack.c.l.b16 %v932
      %v1027 = vunpack.c.h.b16 %v932
      %v1028 = vunpack.c.l.b16 %v933
      %v1029 = vunpack.c.h.b16 %v933
      %v1030 = vunpack.c.l.b16 %v934
      %v1031 = vunpack.c.h.b16 %v934
      %v1032 = vunpack.c.l.b16 %v935
      %v1033 = vunpack.c.h.b16 %v935
      %v1034 = vunpack.c.l.b16 %v936
      %v1035 = vunpack.c.h.b16 %v936
      %v1036 = vunpack.c.l.b16 %v937
      %v1037 = vunpack.c.h.b16 %v937
      %v1038 = vunpack.c.l.b16 %v938
      %v1039 = vunpack.c.h.b16 %v938
      %v1040 = vunpack.c.l.b16 %v939
      %v1041 = vunpack.c.h.b16 %v939
      %v1042 = vunpack.c.l.b16 %v940
      %v1043 = vunpack.c.h.b16 %v940
      %v1044 = vunpack.c.l.b16 %v941
      %v1045 = vunpack.c.h.b16 %v941
      %v1046 = vunpack.c.l.b16 %v942
      %v1047 = vunpack.c.h.b16 %v942
      %v1048 = vunpack.c.l.b16 %v943
      %v1049 = vunpack.c.h.b16 %v943
      %v1050 = vunpack.c.l.b16 %v944
      %v1051 = vunpack.c.h.b16 %v944
      %v1052 = vunpack.c.l.b16 %v945
      %v1053 = vunpack.c.h.b16 %v945
      %v1054 = vunpack.c.l.b16 %v946
      %v1055 = vunpack.c.h.b16 %v946
      %v1056 = vunpack.c.l.b16 %v947
      %v1057 = vunpack.c.h.b16 %v947
      %v1058 = vunpack.c.l.b16 %v948
      %v1059 = vunpack.c.h.b16 %v948
      %v1060 = vunpack.c.l.b16 %v949
      %v1061 = vunpack.c.h.b16 %v949
      %v1062 = vunpack.c.l.b16 %v950
      %v1063 = vunpack.c.h.b16 %v950
      %v1064 = vunpack.c.l.b16 %v951
      %v1065 = vunpack.c.h.b16 %v951
      %v1066 = vunpack.c.l.b16 %v952
      %v1067 = vunpack.c.h.b16 %v952
      %v1068 = vunpack.c.l.b16 %v953
      %v1069 = vunpack.c.h.b16 %v953
      %v1070 = vunpack.c.l.b16 %v954
      %v1071 = vunpack.c.h.b16 %v954
      %v1072 = vunpack.c.l.b16 %v955
      %v1073 = vunpack.c.h.b16 %v955
      %v1074 = vpack.c.b16 %v1014, %v1010
      %v1075 = vpack.c.b16 %v1015, %v1011
      %v1076 = vpack.c.b16 %v1016, %v1012
      %v1077 = vpack.c.b16 %v1017, %v1013
      %v1078 = vpack.c.b16 %v1022, %v1018
      %v1079 = vpack.c.b16 %v1023, %v1019
      %v1080 = vpack.c.b16 %v1024, %v1020
      %v1081 = vpack.c.b16 %v1025, %v1021
      %v1082 = vpack.c.b16 %v1030, %v1026
      %v1083 = vpack.c.b16 %v1031, %v1027
      %v1084 = vpack.c.b16 %v1032, %v1028
      %v1085 = vpack.c.b16 %v1033, %v1029
      %v1086 = vpack.c.b16 %v1038, %v1034
      %v1087 = vpack.c.b16 %v1039, %v1035
      %v1088 = vpack.c.b16 %v1040, %v1036
      %v1089 = vpack.c.b16 %v1041, %v1037
      %v1090 = vpack.c.b16 %v1046, %v1042
      %v1091 = vpack.c.b16 %v1047, %v1043
      %v1092 = vpack.c.b16 %v1048, %v1044
      %v1093 = vpack.c.b16 %v1049, %v1045
      %v1094 = vpack.c.b16 %v1054, %v1050
      %v1095 = vpack.c.b16 %v1055, %v1051
      %v1096 = vpack.c.b16 %v1056, %v1052
      %v1097 = vpack.c.b16 %v1057, %v1053
      %v1098 = vpack.c.b16 %v1062, %v1058
      %v1099 = vpack.c.b16 %v1063, %v1059
      %v1100 = vpack.c.b16 %v1064, %v1060
      %v1101 = vpack.c.b16 %v1065, %v1061
      %v1102 = vpack.c.b16 %v1070, %v1066
      %v1103 = vpack.c.b16 %v1071, %v1067
      %v1104 = vpack.c.b16 %v1072, %v1068
      %v1105 = vpack.c.b16 %v1073, %v1069
      %1138 = vmatprep.subr.bf16.mxu0 %v1075
      %1139 = vmatpush1.bf16.msra.mxu0 %v1074
      %1140 = vmatprep.subr.bf16.mxu0 %v1079
      %1141 = vmatpush1.bf16.msra.mxu0 %v1078
      %1142 = vmatprep.subr.bf16.mxu0 %v1083
      %1143 = vmatpush1.bf16.msra.mxu0 %v1082
      %1144 = vmatprep.subr.bf16.mxu0 %v1087
      %1145 = vmatpush1.bf16.msra.mxu0 %v1086
      %1146 = vmatprep.subr.bf16.mxu0 %v1091
      %1147 = vmatpush1.bf16.msra.mxu0 %v1090
      %1148 = vmatprep.subr.bf16.mxu0 %v1095
      %1149 = vmatpush1.bf16.msra.mxu0 %v1094
      %1150 = vmatprep.subr.bf16.mxu0 %v1099
      %1151 = vmatpush1.bf16.msra.mxu0 %v1098
      %1152 = vmatprep.subr.bf16.mxu0 %v1103
      %1153 = vmatpush1.bf16.msra.mxu0 %v1102
      %1154 = vmatprep.subr.bf16.mxu0 0
      %1155 = vmatpush1.bf16.msra.mxu0 0
      %1156 = vmatprep.subr.bf16.mxu0 0
      %1157 = vmatpush1.bf16.msra.mxu0 0
      %1158 = vmatprep.subr.bf16.mxu0 0
      %1159 = vmatpush1.bf16.msra.mxu0 0
      %1160 = vmatprep.subr.bf16.mxu0 0
      %1161 = vmatpush1.bf16.msra.mxu0 0
      %1162 = vmatprep.subr.bf16.mxu0 0
      %1163 = vmatpush1.bf16.msra.mxu0 0
      %1164 = vmatprep.subr.bf16.mxu0 0
      %1165 = vmatpush1.bf16.msra.mxu0 0
      %1166 = vmatprep.subr.bf16.mxu0 0
      %1167 = vmatpush1.bf16.msra.mxu0 0
      %1168 = vmatprep.subr.bf16.mxu0 0
      %1169 = vmatpush1.bf16.msra.mxu0 0
      %1170 = vmatprep.mubr.bf16.mxu0 0
      %1171 = vmatmul.mubr.bf16.gmra.mrb[0].mxu0 %v908
      %v1172 = vpop.f32.mrb[0].mxu0
      %v1173 = vadd.f32 %v961, %v1172
      %v1174 = vpop.f32.mrb[0].mxu0
      %v1175 = vadd.f32 %v965, %v1174
      %v1176 = vpop.f32.mrb[0].mxu0
      %v1177 = vadd.f32 %v961, %v1176
      %v1178 = vpop.f32.mrb[0].mxu0
      %v1179 = vadd.f32 %v965, %v1178
      %1180 = vmatprep.mubr.bf16.mxu0 0
      %1181 = vmatmul.mubr.bf16.gmra.mrb[0].mxu0 %v909
      %v1182 = vpop.f32.mrb[0].mxu0
      %v1183 = vadd.f32 %v961, %v1182
      %v1184 = vpop.f32.mrb[0].mxu0
      %v1185 = vadd.f32 %v965, %v1184
      %v1186 = vpop.f32.mrb[0].mxu0
      %v1187 = vadd.f32 %v961, %v1186
      %v1188 = vpop.f32.mrb[0].mxu0
      %v1189 = vadd.f32 %v965, %v1188
      %1190 = vmatprep.mubr.bf16.mxu0 0
      %1191 = vmatmul.mubr.bf16.gmra.mrb[0].mxu0 %v910
      %v1192 = vpop.f32.mrb[0].mxu0
      %v1193 = vadd.f32 %v961, %v1192
      %v1194 = vpop.f32.mrb[0].mxu0
      %v1195 = vadd.f32 %v965, %v1194
      %v1196 = vpop.f32.mrb[0].mxu0
      %v1197 = vadd.f32 %v961, %v1196
      %v1198 = vpop.f32.mrb[0].mxu0
      %v1199 = vadd.f32 %v965, %v1198
      %1200 = vmatprep.mubr.bf16.mxu0 0
      %1201 = vmatmul.mubr.bf16.gmra.mrb[0].mxu0 %v911
      %v1202 = vpop.f32.mrb[0].mxu0
      %v1203 = vadd.f32 %v961, %v1202
      %v1204 = vpop.f32.mrb[0].mxu0
      %v1205 = vadd.f32 %v965, %v1204
      %v1206 = vpop.f32.mrb[0].mxu0
      %v1207 = vadd.f32 %v961, %v1206
      %v1208 = vpop.f32.mrb[0].mxu0
      %v1209 = vadd.f32 %v965, %v1208
      %1210 = vmatprep.mubr.bf16.mxu0 0
      %1211 = vmatmul.mubr.bf16.gmra.mrb[0].mxu0 %v912
      %v1212 = vpop.f32.mrb[0].mxu0
      %v1213 = vadd.f32 %v961, %v1212
      %v1214 = vpop.f32.mrb[0].mxu0
      %v1215 = vadd.f32 %v965, %v1214
      %v1216 = vpop.f32.mrb[0].mxu0
      %v1217 = vadd.f32 %v961, %v1216
      %v1218 = vpop.f32.mrb[0].mxu0
      %v1219 = vadd.f32 %v965, %v1218
      %1220 = vmatprep.mubr.bf16.mxu0 0
      %1221 = vmatmul.mubr.bf16.gmra.mrb[0].mxu0 %v913
      %v1222 = vpop.f32.mrb[0].mxu0
      %v1223 = vadd.f32 %v961, %v1222
      %v1224 = vpop.f32.mrb[0].mxu0
      %v1225 = vadd.f32 %v965, %v1224
      %v1226 = vpop.f32.mrb[0].mxu0
      %v1227 = vadd.f32 %v961, %v1226
      %v1228 = vpop.f32.mrb[0].mxu0
      %v1229 = vadd.f32 %v965, %v1228
      %1230 = vmatprep.mubr.bf16.mxu0 0
      %1231 = vmatmul.mubr.bf16.gmra.mrb[0].mxu0 %v914
      %v1232 = vpop.f32.mrb[0].mxu0
      %v1233 = vadd.f32 %v961, %v1232
      %v1234 = vpop.f32.mrb[0].mxu0
      %v1235 = vadd.f32 %v965, %v1234
      %v1236 = vpop.f32.mrb[0].mxu0
      %v1237 = vadd.f32 %v961, %v1236
      %v1238 = vpop.f32.mrb[0].mxu0
      %v1239 = vadd.f32 %v965, %v1238
      %1240 = vmatprep.mubr.bf16.mxu0 0
      %1241 = vmatmul.mubr.bf16.gmra.mrb[0].mxu0 %v915
      %v1242 = vpop.f32.mrb[0].mxu0
      %v1243 = vadd.f32 %v961, %v1242
      %v1244 = vpop.f32.mrb[0].mxu0
      %v1245 = vadd.f32 %v965, %v1244
      %v1246 = vpop.f32.mrb[0].mxu0
      %v1247 = vadd.f32 %v961, %v1246
      %v1248 = vpop.f32.mrb[0].mxu0
      %v1249 = vadd.f32 %v965, %v1248
      %1250 = vmatprep.mubr.bf16.mxu0 0
      %1251 = vmatmul.mubr.bf16.gmra.mrb[0].mxu0 %v916
      %v1252 = vpop.f32.mrb[0].mxu0
      %v1253 = vadd.f32 %v961, %v1252
      %v1254 = vpop.f32.mrb[0].mxu0
      %v1255 = vadd.f32 %v965, %v1254
      %v1256 = vpop.f32.mrb[0].mxu0
      %v1257 = vadd.f32 %v961, %v1256
      %v1258 = vpop.f32.mrb[0].mxu0
      %v1259 = vadd.f32 %v965, %v1258
      %1260 = vmatprep.mubr.bf16.mxu0 0
      %1261 = vmatmul.mubr.bf16.gmra.mrb[0].mxu0 %v917
      %v1262 = vpop.f32.mrb[0].mxu0
      %v1263 = vadd.f32 %v961, %v1262
      %v1264 = vpop.f32.mrb[0].mxu0
      %v1265 = vadd.f32 %v965, %v1264
      %v1266 = vpop.f32.mrb[0].mxu0
      %v1267 = vadd.f32 %v961, %v1266
      %v1268 = vpop.f32.mrb[0].mxu0
      %v1269 = vadd.f32 %v965, %v1268
      %1270 = vmatprep.mubr.bf16.mxu0 0
      %1271 = vmatmul.mubr.bf16.gmra.mrb[0].mxu0 %v918
      %v1272 = vpop.f32.mrb[0].mxu0
      %v1273 = vadd.f32 %v961, %v1272
      %v1274 = vpop.f32.mrb[0].mxu0
      %v1275 = vadd.f32 %v965, %v1274
      %v1276 = vpop.f32.mrb[0].mxu0
      %v1277 = vadd.f32 %v961, %v1276
      %v1278 = vpop.f32.mrb[0].mxu0
      %v1279 = vadd.f32 %v965, %v1278
      %1280 = vmatprep.mubr.bf16.mxu0 0
      %1281 = vmatmul.mubr.bf16.gmra.mrb[0].mxu0 %v919
      %v1282 = vpop.f32.mrb[0].mxu0
      %v1283 = vadd.f32 %v961, %v1282
      %v1284 = vpop.f32.mrb[0].mxu0
      %v1285 = vadd.f32 %v965, %v1284
      %v1286 = vpop.f32.mrb[0].mxu0
      %v1287 = vadd.f32 %v961, %v1286
      %v1288 = vpop.f32.mrb[0].mxu0
      %v1289 = vadd.f32 %v965, %v1288
      %1290 = vmatprep.mubr.bf16.mxu0 0
      %1291 = vmatmul.mubr.bf16.gmra.mrb[0].mxu0 %v920
      %v1292 = vpop.f32.mrb[0].mxu0
      %v1293 = vadd.f32 %v961, %v1292
      %v1294 = vpop.f32.mrb[0].mxu0
      %v1295 = vadd.f32 %v965, %v1294
      %v1296 = vpop.f32.mrb[0].mxu0
      %v1297 = vadd.f32 %v961, %v1296
      %v1298 = vpop.f32.mrb[0].mxu0
      %v1299 = vadd.f32 %v965, %v1298
      %1300 = vmatprep.mubr.bf16.mxu0 0
      %1301 = vmatmul.mubr.bf16.gmra.mrb[0].mxu0 %v921
      %v1302 = vpop.f32.mrb[0].mxu0
      %v1303 = vadd.f32 %v961, %v1302
      %v1304 = vpop.f32.mrb[0].mxu0
      %v1305 = vadd.f32 %v965, %v1304
      %v1306 = vpop.f32.mrb[0].mxu0
      %v1307 = vadd.f32 %v961, %v1306
      %v1308 = vpop.f32.mrb[0].mxu0
      %v1309 = vadd.f32 %v965, %v1308
      %1310 = vmatprep.mubr.bf16.mxu0 0
      %1311 = vmatmul.mubr.bf16.gmra.mrb[0].mxu0 %v922
      %v1312 = vpop.f32.mrb[0].mxu0
      %v1313 = vadd.f32 %v961, %v1312
      %v1314 = vpop.f32.mrb[0].mxu0
      %v1315 = vadd.f32 %v965, %v1314
      %v1316 = vpop.f32.mrb[0].mxu0
      %v1317 = vadd.f32 %v961, %v1316
      %v1318 = vpop.f32.mrb[0].mxu0
      %v1319 = vadd.f32 %v965, %v1318
      %1320 = vmatprep.mubr.bf16.mxu0 0
      %1321 = vmatmul.mubr.bf16.gmra.mrb[0].mxu0 %v923
      %v1322 = vpop.f32.mrb[0].mxu0
      %v1323 = vadd.f32 %v961, %v1322
      %v1324 = vpop.f32.mrb[0].mxu0
      %v1325 = vadd.f32 %v965, %v1324
      %v1326 = vpop.f32.mrb[0].mxu0
      %v1327 = vadd.f32 %v961, %v1326
      %v1328 = vpop.f32.mrb[0].mxu0
      %v1329 = vadd.f32 %v965, %v1328
      %1330 = vdwg.mxu0
      %1331 = vmatprep.subr.bf16.mxu0 %v1077
      %1332 = vmatpush1.bf16.msra.mxu0 %v1076
      %1333 = vmatprep.subr.bf16.mxu0 %v1081
      %1334 = vmatpush1.bf16.msra.mxu0 %v1080
      %1335 = vmatprep.subr.bf16.mxu0 %v1085
      %1336 = vmatpush1.bf16.msra.mxu0 %v1084
      %1337 = vmatprep.subr.bf16.mxu0 %v1089
      %1338 = vmatpush1.bf16.msra.mxu0 %v1088
      %1339 = vmatprep.subr.bf16.mxu0 %v1093
      %1340 = vmatpush1.bf16.msra.mxu0 %v1092
      %1341 = vmatprep.subr.bf16.mxu0 %v1097
      %1342 = vmatpush1.bf16.msra.mxu0 %v1096
      %1343 = vmatprep.subr.bf16.mxu0 %v1101
      %1344 = vmatpush1.bf16.msra.mxu0 %v1100
      %1345 = vmatprep.subr.bf16.mxu0 %v1105
      %1346 = vmatpush1.bf16.msra.mxu0 %v1104
      %1347 = vmatprep.subr.bf16.mxu0 0
      %1348 = vmatpush1.bf16.msra.mxu0 0
      %1349 = vmatprep.subr.bf16.mxu0 0
      %1350 = vmatpush1.bf16.msra.mxu0 0
      %1351 = vmatprep.subr.bf16.mxu0 0
      %1352 = vmatpush1.bf16.msra.mxu0 0
      %1353 = vmatprep.subr.bf16.mxu0 0
      %1354 = vmatpush1.bf16.msra.mxu0 0
      %1355 = vmatprep.subr.bf16.mxu0 0
      %1356 = vmatpush1.bf16.msra.mxu0 0
      %1357 = vmatprep.subr.bf16.mxu0 0
      %1358 = vmatpush1.bf16.msra.mxu0 0
      %1359 = vmatprep.subr.bf16.mxu0 0
      %1360 = vmatpush1.bf16.msra.mxu0 0
      %1361 = vmatprep.subr.bf16.mxu0 0
      %1362 = vmatpush1.bf16.msra.mxu0 0
      %1363 = vmatprep.mubr.bf16.mxu0 0
      %1364 = vmatmul.mubr.bf16.gmra.mrb[0].mxu0 %v908
      %v1365 = vpop.f32.mrb[0].mxu0
      %v1366 = vadd.f32 %v969, %v1365
      %v1367 = vpop.f32.mrb[0].mxu0
      %v1368 = vadd.f32 %v973, %v1367
      %v1369 = vpop.f32.mrb[0].mxu0
      %v1370 = vadd.f32 %v969, %v1369
      %v1371 = vpop.f32.mrb[0].mxu0
      %v1372 = vadd.f32 %v973, %v1371
      %1373 = vmatprep.mubr.bf16.mxu0 0
      %1374 = vmatmul.mubr.bf16.gmra.mrb[0].mxu0 %v909
      %v1375 = vpop.f32.mrb[0].mxu0
      %v1376 = vadd.f32 %v969, %v1375
      %v1377 = vpop.f32.mrb[0].mxu0
      %v1378 = vadd.f32 %v973, %v1377
      %v1379 = vpop.f32.mrb[0].mxu0
      %v1380 = vadd.f32 %v969, %v1379
      %v1381 = vpop.f32.mrb[0].mxu0
      %v1382 = vadd.f32 %v973, %v1381
      %1383 = vmatprep.mubr.bf16.mxu0 0
      %1384 = vmatmul.mubr.bf16.gmra.mrb[0].mxu0 %v910
      %v1385 = vpop.f32.mrb[0].mxu0
      %v1386 = vadd.f32 %v969, %v1385
      %v1387 = vpop.f32.mrb[0].mxu0
      %v1388 = vadd.f32 %v973, %v1387
      %v1389 = vpop.f32.mrb[0].mxu0
      %v1390 = vadd.f32 %v969, %v1389
      %v1391 = vpop.f32.mrb[0].mxu0
      %v1392 = vadd.f32 %v973, %v1391
      %1393 = vmatprep.mubr.bf16.mxu0 0
      %1394 = vmatmul.mubr.bf16.gmra.mrb[0].mxu0 %v911
      %v1395 = vpop.f32.mrb[0].mxu0
      %v1396 = vadd.f32 %v969, %v1395
      %v1397 = vpop.f32.mrb[0].mxu0
      %v1398 = vadd.f32 %v973, %v1397
      %v1399 = vpop.f32.mrb[0].mxu0
      %v1400 = vadd.f32 %v969, %v1399
      %v1401 = vpop.f32.mrb[0].mxu0
      %v1402 = vadd.f32 %v973, %v1401
      %1403 = vmatprep.mubr.bf16.mxu0 0
      %1404 = vmatmul.mubr.bf16.gmra.mrb[0].mxu0 %v912
      %v1405 = vpop.f32.mrb[0].mxu0
      %v1406 = vadd.f32 %v969, %v1405
      %v1407 = vpop.f32.mrb[0].mxu0
      %v1408 = vadd.f32 %v973, %v1407
      %v1409 = vpop.f32.mrb[0].mxu0
      %v1410 = vadd.f32 %v969, %v1409
      %v1411 = vpop.f32.mrb[0].mxu0
      %v1412 = vadd.f32 %v973, %v1411
      %1413 = vmatprep.mubr.bf16.mxu0 0
      %1414 = vmatmul.mubr.bf16.gmra.mrb[0].mxu0 %v913
      %v1415 = vpop.f32.mrb[0].mxu0
      %v1416 = vadd.f32 %v969, %v1415
      %v1417 = vpop.f32.mrb[0].mxu0
      %v1418 = vadd.f32 %v973, %v1417
      %v1419 = vpop.f32.mrb[0].mxu0
      %v1420 = vadd.f32 %v969, %v1419
      %v1421 = vpop.f32.mrb[0].mxu0
      %v1422 = vadd.f32 %v973, %v1421
      %1423 = vmatprep.mubr.bf16.mxu0 0
      %1424 = vmatmul.mubr.bf16.gmra.mrb[0].mxu0 %v914
      %v1425 = vpop.f32.mrb[0].mxu0
      %v1426 = vadd.f32 %v969, %v1425
      %v1427 = vpop.f32.mrb[0].mxu0
      %v1428 = vadd.f32 %v973, %v1427
      %v1429 = vpop.f32.mrb[0].mxu0
      %v1430 = vadd.f32 %v969, %v1429
      %v1431 = vpop.f32.mrb[0].mxu0
      %v1432 = vadd.f32 %v973, %v1431
      %1433 = vmatprep.mubr.bf16.mxu0 0
      %1434 = vmatmul.mubr.bf16.gmra.mrb[0].mxu0 %v915
      %v1435 = vpop.f32.mrb[0].mxu0
      %v1436 = vadd.f32 %v969, %v1435
      %v1437 = vpop.f32.mrb[0].mxu0
      %v1438 = vadd.f32 %v973, %v1437
      %v1439 = vpop.f32.mrb[0].mxu0
      %v1440 = vadd.f32 %v969, %v1439
      %v1441 = vpop.f32.mrb[0].mxu0
      %v1442 = vadd.f32 %v973, %v1441
      %1443 = vmatprep.mubr.bf16.mxu0 0
      %1444 = vmatmul.mubr.bf16.gmra.mrb[0].mxu0 %v916
      %v1445 = vpop.f32.mrb[0].mxu0
      %v1446 = vadd.f32 %v969, %v1445
      %v1447 = vpop.f32.mrb[0].mxu0
      %v1448 = vadd.f32 %v973, %v1447
      %v1449 = vpop.f32.mrb[0].mxu0
      %v1450 = vadd.f32 %v969, %v1449
      %v1451 = vpop.f32.mrb[0].mxu0
      %v1452 = vadd.f32 %v973, %v1451
      %1453 = vmatprep.mubr.bf16.mxu0 0
      %1454 = vmatmul.mubr.bf16.gmra.mrb[0].mxu0 %v917
      %v1455 = vpop.f32.mrb[0].mxu0
      %v1456 = vadd.f32 %v969, %v1455
      %v1457 = vpop.f32.mrb[0].mxu0
      %v1458 = vadd.f32 %v973, %v1457
      %v1459 = vpop.f32.mrb[0].mxu0
      %v1460 = vadd.f32 %v969, %v1459
      %v1461 = vpop.f32.mrb[0].mxu0
      %v1462 = vadd.f32 %v973, %v1461
      %1463 = vmatprep.mubr.bf16.mxu0 0
      %1464 = vmatmul.mubr.bf16.gmra.mrb[0].mxu0 %v918
      %v1465 = vpop.f32.mrb[0].mxu0
      %v1466 = vadd.f32 %v969, %v1465
      %v1467 = vpop.f32.mrb[0].mxu0
      %v1468 = vadd.f32 %v973, %v1467
      %v1469 = vpop.f32.mrb[0].mxu0
      %v1470 = vadd.f32 %v969, %v1469
      %v1471 = vpop.f32.mrb[0].mxu0
      %v1472 = vadd.f32 %v973, %v1471
      %1473 = vmatprep.mubr.bf16.mxu0 0
      %1474 = vmatmul.mubr.bf16.gmra.mrb[0].mxu0 %v919
      %v1475 = vpop.f32.mrb[0].mxu0
      %v1476 = vadd.f32 %v969, %v1475
      %v1477 = vpop.f32.mrb[0].mxu0
      %v1478 = vadd.f32 %v973, %v1477
      %v1479 = vpop.f32.mrb[0].mxu0
      %v1480 = vadd.f32 %v969, %v1479
      %v1481 = vpop.f32.mrb[0].mxu0
      %v1482 = vadd.f32 %v973, %v1481
      %1483 = vmatprep.mubr.bf16.mxu0 0
      %1484 = vmatmul.mubr.bf16.gmra.mrb[0].mxu0 %v920
      %v1485 = vpop.f32.mrb[0].mxu0
      %v1486 = vadd.f32 %v969, %v1485
      %v1487 = vpop.f32.mrb[0].mxu0
      %v1488 = vadd.f32 %v973, %v1487
      %v1489 = vpop.f32.mrb[0].mxu0
      %v1490 = vadd.f32 %v969, %v1489
      %v1491 = vpop.f32.mrb[0].mxu0
      %v1492 = vadd.f32 %v973, %v1491
      %1493 = vmatprep.mubr.bf16.mxu0 0
      %1494 = vmatmul.mubr.bf16.gmra.mrb[0].mxu0 %v921
      %v1495 = vpop.f32.mrb[0].mxu0
      %v1496 = vadd.f32 %v969, %v1495
      %v1497 = vpop.f32.mrb[0].mxu0
      %v1498 = vadd.f32 %v973, %v1497
      %v1499 = vpop.f32.mrb[0].mxu0
      %v1500 = vadd.f32 %v969, %v1499
      %v1501 = vpop.f32.mrb[0].mxu0
      %v1502 = vadd.f32 %v973, %v1501
      %1503 = vmatprep.mubr.bf16.mxu0 0
      %1504 = vmatmul.mubr.bf16.gmra.mrb[0].mxu0 %v922
      %v1505 = vpop.f32.mrb[0].mxu0
      %v1506 = vadd.f32 %v969, %v1505
      %v1507 = vpop.f32.mrb[0].mxu0
      %v1508 = vadd.f32 %v973, %v1507
      %v1509 = vpop.f32.mrb[0].mxu0
      %v1510 = vadd.f32 %v969, %v1509
      %v1511 = vpop.f32.mrb[0].mxu0
      %v1512 = vadd.f32 %v973, %v1511
      %1513 = vmatprep.mubr.bf16.mxu0 0
      %1514 = vmatmul.mubr.bf16.gmra.mrb[0].mxu0 %v923
      %v1515 = vpop.f32.mrb[0].mxu0
      %v1516 = vadd.f32 %v969, %v1515
      %v1517 = vpop.f32.mrb[0].mxu0
      %v1518 = vadd.f32 %v973, %v1517
      %v1519 = vpop.f32.mrb[0].mxu0
      %v1520 = vadd.f32 %v969, %v1519
      %v1521 = vpop.f32.mrb[0].mxu0
      %v1522 = vadd.f32 %v973, %v1521
      %1523 = vdwg.mxu0
      %v1524 = vmax.f32 %v1173, %v1175
      %v1525 = vmax.f32 %v1524, %v1366
      %v1526 = vmax.f32 %v1525, %v1368
      %1527 = vmax.xlane.f32.xlu0 %v1526
      %v1528 = vpop.xlane.xlu0 %1527
      %v1529 = vmax.f32 %v1177, %v1179
      %v1530 = vmax.f32 %v1529, %v1370
      %v1531 = vmax.f32 %v1530, %v1372
      %1532 = vmax.xlane.f32.xlu0 %v1531
      %v1533 = vpop.xlane.xlu0 %1532
      %v1534 = vmax.f32 %v1183, %v1185
      %v1535 = vmax.f32 %v1534, %v1376
      %v1536 = vmax.f32 %v1535, %v1378
      %1537 = vmax.xlane.f32.xlu0 %v1536
      %v1538 = vpop.xlane.xlu0 %1537
      %v1539 = vmax.f32 %v1187, %v1189
      %v1540 = vmax.f32 %v1539, %v1380
      %v1541 = vmax.f32 %v1540, %v1382
      %1542 = vmax.xlane.f32.xlu0 %v1541
      %v1543 = vpop.xlane.xlu0 %1542
      %v1544 = vmax.f32 %v1193, %v1195
      %v1545 = vmax.f32 %v1544, %v1386
      %v1546 = vmax.f32 %v1545, %v1388
      %1547 = vmax.xlane.f32.xlu0 %v1546
      %v1548 = vpop.xlane.xlu0 %1547
      %v1549 = vmax.f32 %v1197, %v1199
      %v1550 = vmax.f32 %v1549, %v1390
      %v1551 = vmax.f32 %v1550, %v1392
      %1552 = vmax.xlane.f32.xlu0 %v1551
      %v1553 = vpop.xlane.xlu0 %1552
      %v1554 = vmax.f32 %v1203, %v1205
      %v1555 = vmax.f32 %v1554, %v1396
      %v1556 = vmax.f32 %v1555, %v1398
      %1557 = vmax.xlane.f32.xlu0 %v1556
      %v1558 = vpop.xlane.xlu0 %1557
      %v1559 = vmax.f32 %v1207, %v1209
      %v1560 = vmax.f32 %v1559, %v1400
      %v1561 = vmax.f32 %v1560, %v1402
      %1562 = vmax.xlane.f32.xlu0 %v1561
      %v1563 = vpop.xlane.xlu0 %1562
      %v1564 = vmax.f32 %v1213, %v1215
      %v1565 = vmax.f32 %v1564, %v1406
      %v1566 = vmax.f32 %v1565, %v1408
      %1567 = vmax.xlane.f32.xlu0 %v1566
      %v1568 = vpop.xlane.xlu0 %1567
      %v1569 = vmax.f32 %v1217, %v1219
      %v1570 = vmax.f32 %v1569, %v1410
      %v1571 = vmax.f32 %v1570, %v1412
      %1572 = vmax.xlane.f32.xlu0 %v1571
      %v1573 = vpop.xlane.xlu0 %1572
      %v1574 = vmax.f32 %v1223, %v1225
      %v1575 = vmax.f32 %v1574, %v1416
      %v1576 = vmax.f32 %v1575, %v1418
      %1577 = vmax.xlane.f32.xlu0 %v1576
      %v1578 = vpop.xlane.xlu0 %1577
      %v1579 = vmax.f32 %v1227, %v1229
      %v1580 = vmax.f32 %v1579, %v1420
      %v1581 = vmax.f32 %v1580, %v1422
      %1582 = vmax.xlane.f32.xlu0 %v1581
      %v1583 = vpop.xlane.xlu0 %1582
      %v1584 = vmax.f32 %v1233, %v1235
      %v1585 = vmax.f32 %v1584, %v1426
      %v1586 = vmax.f32 %v1585, %v1428
      %1587 = vmax.xlane.f32.xlu0 %v1586
      %v1588 = vpop.xlane.xlu0 %1587
      %v1589 = vmax.f32 %v1237, %v1239
      %v1590 = vmax.f32 %v1589, %v1430
      %v1591 = vmax.f32 %v1590, %v1432
      %1592 = vmax.xlane.f32.xlu0 %v1591
      %v1593 = vpop.xlane.xlu0 %1592
      %v1594 = vmax.f32 %v1243, %v1245
      %v1595 = vmax.f32 %v1594, %v1436
      %v1596 = vmax.f32 %v1595, %v1438
      %1597 = vmax.xlane.f32.xlu0 %v1596
      %v1598 = vpop.xlane.xlu0 %1597
      %v1599 = vmax.f32 %v1247, %v1249
      %v1600 = vmax.f32 %v1599, %v1440
      %v1601 = vmax.f32 %v1600, %v1442
      %1602 = vmax.xlane.f32.xlu0 %v1601
      %v1603 = vpop.xlane.xlu0 %1602
      %v1604 = vmax.f32 %v1253, %v1255
      %v1605 = vmax.f32 %v1604, %v1446
      %v1606 = vmax.f32 %v1605, %v1448
      %1607 = vmax.xlane.f32.xlu0 %v1606
      %v1608 = vpop.xlane.xlu0 %1607
      %v1609 = vmax.f32 %v1257, %v1259
      %v1610 = vmax.f32 %v1609, %v1450
      %v1611 = vmax.f32 %v1610, %v1452
      %1612 = vmax.xlane.f32.xlu0 %v1611
      %v1613 = vpop.xlane.xlu0 %1612
      %v1614 = vmax.f32 %v1263, %v1265
      %v1615 = vmax.f32 %v1614, %v1456
      %v1616 = vmax.f32 %v1615, %v1458
      %1617 = vmax.xlane.f32.xlu0 %v1616
      %v1618 = vpop.xlane.xlu0 %1617
      %v1619 = vmax.f32 %v1267, %v1269
      %v1620 = vmax.f32 %v1619, %v1460
      %v1621 = vmax.f32 %v1620, %v1462
      %1622 = vmax.xlane.f32.xlu0 %v1621
      %v1623 = vpop.xlane.xlu0 %1622
      %v1624 = vmax.f32 %v1273, %v1275
      %v1625 = vmax.f32 %v1624, %v1466
      %v1626 = vmax.f32 %v1625, %v1468
      %1627 = vmax.xlane.f32.xlu0 %v1626
      %v1628 = vpop.xlane.xlu0 %1627
      %v1629 = vmax.f32 %v1277, %v1279
      %v1630 = vmax.f32 %v1629, %v1470
      %v1631 = vmax.f32 %v1630, %v1472
      %1632 = vmax.xlane.f32.xlu0 %v1631
      %v1633 = vpop.xlane.xlu0 %1632
      %v1634 = vmax.f32 %v1283, %v1285
      %v1635 = vmax.f32 %v1634, %v1476
      %v1636 = vmax.f32 %v1635, %v1478
      %1637 = vmax.xlane.f32.xlu0 %v1636
      %v1638 = vpop.xlane.xlu0 %1637
      %v1639 = vmax.f32 %v1287, %v1289
      %v1640 = vmax.f32 %v1639, %v1480
      %v1641 = vmax.f32 %v1640, %v1482
      %1642 = vmax.xlane.f32.xlu0 %v1641
      %v1643 = vpop.xlane.xlu0 %1642
      %v1644 = vmax.f32 %v1293, %v1295
      %v1645 = vmax.f32 %v1644, %v1486
      %v1646 = vmax.f32 %v1645, %v1488
      %1647 = vmax.xlane.f32.xlu0 %v1646
      %v1648 = vpop.xlane.xlu0 %1647
      %v1649 = vmax.f32 %v1297, %v1299
      %v1650 = vmax.f32 %v1649, %v1490
      %v1651 = vmax.f32 %v1650, %v1492
      %1652 = vmax.xlane.f32.xlu0 %v1651
      %v1653 = vpop.xlane.xlu0 %1652
      %v1654 = vmax.f32 %v1303, %v1305
      %v1655 = vmax.f32 %v1654, %v1496
      %v1656 = vmax.f32 %v1655, %v1498
      %1657 = vmax.xlane.f32.xlu0 %v1656
      %v1658 = vpop.xlane.xlu0 %1657
      %v1659 = vmax.f32 %v1307, %v1309
      %v1660 = vmax.f32 %v1659, %v1500
      %v1661 = vmax.f32 %v1660, %v1502
      %1662 = vmax.xlane.f32.xlu0 %v1661
      %v1663 = vpop.xlane.xlu0 %1662
      %v1664 = vmax.f32 %v1313, %v1315
      %v1665 = vmax.f32 %v1664, %v1506
      %v1666 = vmax.f32 %v1665, %v1508
      %1667 = vmax.xlane.f32.xlu0 %v1666
      %v1668 = vpop.xlane.xlu0 %1667
      %v1669 = vmax.f32 %v1317, %v1319
      %v1670 = vmax.f32 %v1669, %v1510
      %v1671 = vmax.f32 %v1670, %v1512
      %1672 = vmax.xlane.f32.xlu0 %v1671
      %v1673 = vpop.xlane.xlu0 %1672
      %v1674 = vmax.f32 %v1323, %v1325
      %v1675 = vmax.f32 %v1674, %v1516
      %v1676 = vmax.f32 %v1675, %v1518
      %1677 = vmax.xlane.f32.xlu0 %v1676
      %v1678 = vpop.xlane.xlu0 %1677
      %v1679 = vmax.f32 %v1327, %v1329
      %v1680 = vmax.f32 %v1679, %v1520
      %v1681 = vmax.f32 %v1680, %v1522
      %1682 = vmax.xlane.f32.xlu0 %v1681
      %v1683 = vpop.xlane.xlu0 %1682
      %v1684 = vsub.f32 %v1173, %v1528
      %v1685 = vsub.f32 %v1175, %v1528
      %v1686 = vsub.f32 %v1366, %v1528
      %v1687 = vsub.f32 %v1368, %v1528
      %v1688 = vsub.f32 %v1177, %v1533
      %v1689 = vsub.f32 %v1179, %v1533
      %v1690 = vsub.f32 %v1370, %v1533
      %v1691 = vsub.f32 %v1372, %v1533
      %v1692 = vsub.f32 %v1183, %v1538
      %v1693 = vsub.f32 %v1185, %v1538
      %v1694 = vsub.f32 %v1376, %v1538
      %v1695 = vsub.f32 %v1378, %v1538
      %v1696 = vsub.f32 %v1187, %v1543
      %v1697 = vsub.f32 %v1189, %v1543
      %v1698 = vsub.f32 %v1380, %v1543
      %v1699 = vsub.f32 %v1382, %v1543
      %v1700 = vsub.f32 %v1193, %v1548
      %v1701 = vsub.f32 %v1195, %v1548
      %v1702 = vsub.f32 %v1386, %v1548
      %v1703 = vsub.f32 %v1388, %v1548
      %v1704 = vsub.f32 %v1197, %v1553
      %v1705 = vsub.f32 %v1199, %v1553
      %v1706 = vsub.f32 %v1390, %v1553
      %v1707 = vsub.f32 %v1392, %v1553
      %v1708 = vsub.f32 %v1203, %v1558
      %v1709 = vsub.f32 %v1205, %v1558
      %v1710 = vsub.f32 %v1396, %v1558
      %v1711 = vsub.f32 %v1398, %v1558
      %v1712 = vsub.f32 %v1207, %v1563
      %v1713 = vsub.f32 %v1209, %v1563
      %v1714 = vsub.f32 %v1400, %v1563
      %v1715 = vsub.f32 %v1402, %v1563
      %v1716 = vsub.f32 %v1213, %v1568
      %v1717 = vsub.f32 %v1215, %v1568
      %v1718 = vsub.f32 %v1406, %v1568
      %v1719 = vsub.f32 %v1408, %v1568
      %v1720 = vsub.f32 %v1217, %v1573
      %v1721 = vsub.f32 %v1219, %v1573
      %v1722 = vsub.f32 %v1410, %v1573
      %v1723 = vsub.f32 %v1412, %v1573
      %v1724 = vsub.f32 %v1223, %v1578
      %v1725 = vsub.f32 %v1225, %v1578
      %v1726 = vsub.f32 %v1416, %v1578
      %v1727 = vsub.f32 %v1418, %v1578
      %v1728 = vsub.f32 %v1227, %v1583
      %v1729 = vsub.f32 %v1229, %v1583
      %v1730 = vsub.f32 %v1420, %v1583
      %v1731 = vsub.f32 %v1422, %v1583
      %v1732 = vsub.f32 %v1233, %v1588
      %v1733 = vsub.f32 %v1235, %v1588
      %v1734 = vsub.f32 %v1426, %v1588
      %v1735 = vsub.f32 %v1428, %v1588
      %v1736 = vsub.f32 %v1237, %v1593
      %v1737 = vsub.f32 %v1239, %v1593
      %v1738 = vsub.f32 %v1430, %v1593
      %v1739 = vsub.f32 %v1432, %v1593
      %v1740 = vsub.f32 %v1243, %v1598
      %v1741 = vsub.f32 %v1245, %v1598
      %v1742 = vsub.f32 %v1436, %v1598
      %v1743 = vsub.f32 %v1438, %v1598
      %v1744 = vsub.f32 %v1247, %v1603
      %v1745 = vsub.f32 %v1249, %v1603
      %v1746 = vsub.f32 %v1440, %v1603
      %v1747 = vsub.f32 %v1442, %v1603
      %v1748 = vsub.f32 %v1253, %v1608
      %v1749 = vsub.f32 %v1255, %v1608
      %v1750 = vsub.f32 %v1446, %v1608
      %v1751 = vsub.f32 %v1448, %v1608
      %v1752 = vsub.f32 %v1257, %v1613
      %v1753 = vsub.f32 %v1259, %v1613
      %v1754 = vsub.f32 %v1450, %v1613
      %v1755 = vsub.f32 %v1452, %v1613
      %v1756 = vsub.f32 %v1263, %v1618
      %v1757 = vsub.f32 %v1265, %v1618
      %v1758 = vsub.f32 %v1456, %v1618
      %v1759 = vsub.f32 %v1458, %v1618
      %v1760 = vsub.f32 %v1267, %v1623
      %v1761 = vsub.f32 %v1269, %v1623
      %v1762 = vsub.f32 %v1460, %v1623
      %v1763 = vsub.f32 %v1462, %v1623
      %v1764 = vsub.f32 %v1273, %v1628
      %v1765 = vsub.f32 %v1275, %v1628
      %v1766 = vsub.f32 %v1466, %v1628
      %v1767 = vsub.f32 %v1468, %v1628
      %v1768 = vsub.f32 %v1277, %v1633
      %v1769 = vsub.f32 %v1279, %v1633
      %v1770 = vsub.f32 %v1470, %v1633
      %v1771 = vsub.f32 %v1472, %v1633
      %v1772 = vsub.f32 %v1283, %v1638
      %v1773 = vsub.f32 %v1285, %v1638
      %v1774 = vsub.f32 %v1476, %v1638
      %v1775 = vsub.f32 %v1478, %v1638
      %v1776 = vsub.f32 %v1287, %v1643
      %v1777 = vsub.f32 %v1289, %v1643
      %v1778 = vsub.f32 %v1480, %v1643
      %v1779 = vsub.f32 %v1482, %v1643
      %v1780 = vsub.f32 %v1293, %v1648
      %v1781 = vsub.f32 %v1295, %v1648
      %v1782 = vsub.f32 %v1486, %v1648
      %v1783 = vsub.f32 %v1488, %v1648
      %v1784 = vsub.f32 %v1297, %v1653
      %v1785 = vsub.f32 %v1299, %v1653
      %v1786 = vsub.f32 %v1490, %v1653
      %v1787 = vsub.f32 %v1492, %v1653
      %v1788 = vsub.f32 %v1303, %v1658
      %v1789 = vsub.f32 %v1305, %v1658
      %v1790 = vsub.f32 %v1496, %v1658
      %v1791 = vsub.f32 %v1498, %v1658
      %v1792 = vsub.f32 %v1307, %v1663
      %v1793 = vsub.f32 %v1309, %v1663
      %v1794 = vsub.f32 %v1500, %v1663
      %v1795 = vsub.f32 %v1502, %v1663
      %v1796 = vsub.f32 %v1313, %v1668
      %v1797 = vsub.f32 %v1315, %v1668
      %v1798 = vsub.f32 %v1506, %v1668
      %v1799 = vsub.f32 %v1508, %v1668
      %v1800 = vsub.f32 %v1317, %v1673
      %v1801 = vsub.f32 %v1319, %v1673
      %v1802 = vsub.f32 %v1510, %v1673
      %v1803 = vsub.f32 %v1512, %v1673
      %v1804 = vsub.f32 %v1323, %v1678
      %v1805 = vsub.f32 %v1325, %v1678
      %v1806 = vsub.f32 %v1516, %v1678
      %v1807 = vsub.f32 %v1518, %v1678
      %v1808 = vsub.f32 %v1327, %v1683
      %v1809 = vsub.f32 %v1329, %v1683
      %v1810 = vsub.f32 %v1520, %v1683
      %v1811 = vsub.f32 %v1522, %v1683
      %v1812 = vmul.f32 %v1684, 1.442695
      %v1813 = vpow.pop %v1812
      %v1814 = vmul.f32 %v1685, 1.442695
      %v1815 = vpow.pop %v1814
      %v1816 = vmul.f32 %v1686, 1.442695
      %v1817 = vpow.pop %v1816
      %v1818 = vmul.f32 %v1687, 1.442695
      %v1819 = vpow.pop %v1818
      %v1820 = vmul.f32 %v1688, 1.442695
      %v1821 = vpow.pop %v1820
      %v1822 = vmul.f32 %v1689, 1.442695
      %v1823 = vpow.pop %v1822
      %v1824 = vmul.f32 %v1690, 1.442695
      %v1825 = vpow.pop %v1824
      %v1826 = vmul.f32 %v1691, 1.442695
      %v1827 = vpow.pop %v1826
      %v1828 = vmul.f32 %v1692, 1.442695
      %v1829 = vpow.pop %v1828
      %v1830 = vmul.f32 %v1693, 1.442695
      %v1831 = vpow.pop %v1830
      %v1832 = vmul.f32 %v1694, 1.442695
      %v1833 = vpow.pop %v1832
      %v1834 = vmul.f32 %v1695, 1.442695
      %v1835 = vpow.pop %v1834
      %v1836 = vmul.f32 %v1696, 1.442695
      %v1837 = vpow.pop %v1836
      %v1838 = vmul.f32 %v1697, 1.442695
      %v1839 = vpow.pop %v1838
      %v1840 = vmul.f32 %v1698, 1.442695
      %v1841 = vpow.pop %v1840
      %v1842 = vmul.f32 %v1699, 1.442695
      %v1843 = vpow.pop %v1842
      %v1844 = vmul.f32 %v1700, 1.442695
      %v1845 = vpow.pop %v1844
      %v1846 = vmul.f32 %v1701, 1.442695
      %v1847 = vpow.pop %v1846
      %v1848 = vmul.f32 %v1702, 1.442695
      %v1849 = vpow.pop %v1848
      %v1850 = vmul.f32 %v1703, 1.442695
      %v1851 = vpow.pop %v1850
      %v1852 = vmul.f32 %v1704, 1.442695
      %v1853 = vpow.pop %v1852
      %v1854 = vmul.f32 %v1705, 1.442695
      %v1855 = vpow.pop %v1854
      %v1856 = vmul.f32 %v1706, 1.442695
      %v1857 = vpow.pop %v1856
      %v1858 = vmul.f32 %v1707, 1.442695
      %v1859 = vpow.pop %v1858
      %v1860 = vmul.f32 %v1708, 1.442695
      %v1861 = vpow.pop %v1860
      %v1862 = vmul.f32 %v1709, 1.442695
      %v1863 = vpow.pop %v1862
      %v1864 = vmul.f32 %v1710, 1.442695
      %v1865 = vpow.pop %v1864
      %v1866 = vmul.f32 %v1711, 1.442695
      %v1867 = vpow.pop %v1866
      %v1868 = vmul.f32 %v1712, 1.442695
      %v1869 = vpow.pop %v1868
      %v1870 = vmul.f32 %v1713, 1.442695
      %v1871 = vpow.pop %v1870
      %v1872 = vmul.f32 %v1714, 1.442695
      %v1873 = vpow.pop %v1872
      %v1874 = vmul.f32 %v1715, 1.442695
      %v1875 = vpow.pop %v1874
      %v1876 = vmul.f32 %v1716, 1.442695
      %v1877 = vpow.pop %v1876
      %v1878 = vmul.f32 %v1717, 1.442695
      %v1879 = vpow.pop %v1878
      %v1880 = vmul.f32 %v1718, 1.442695
      %v1881 = vpow.pop %v1880
      %v1882 = vmul.f32 %v1719, 1.442695
      %v1883 = vpow.pop %v1882
      %v1884 = vmul.f32 %v1720, 1.442695
      %v1885 = vpow.pop %v1884
      %v1886 = vmul.f32 %v1721, 1.442695
      %v1887 = vpow.pop %v1886
      %v1888 = vmul.f32 %v1722, 1.442695
      %v1889 = vpow.pop %v1888
      %v1890 = vmul.f32 %v1723, 1.442695
      %v1891 = vpow.pop %v1890
      %v1892 = vmul.f32 %v1724, 1.442695
      %v1893 = vpow.pop %v1892
      %v1894 = vmul.f32 %v1725, 1.442695
      %v1895 = vpow.pop %v1894
      %v1896 = vmul.f32 %v1726, 1.442695
      %v1897 = vpow.pop %v1896
      %v1898 = vmul.f32 %v1727, 1.442695
      %v1899 = vpow.pop %v1898
      %v1900 = vmul.f32 %v1728, 1.442695
      %v1901 = vpow.pop %v1900
      %v1902 = vmul.f32 %v1729, 1.442695
      %v1903 = vpow.pop %v1902
      %v1904 = vmul.f32 %v1730, 1.442695
      %v1905 = vpow.pop %v1904
      %v1906 = vmul.f32 %v1731, 1.442695
      %v1907 = vpow.pop %v1906
      %v1908 = vmul.f32 %v1732, 1.442695
      %v1909 = vpow.pop %v1908
      %v1910 = vmul.f32 %v1733, 1.442695
      %v1911 = vpow.pop %v1910
      %v1912 = vmul.f32 %v1734, 1.442695
      %v1913 = vpow.pop %v1912
      %v1914 = vmul.f32 %v1735, 1.442695
      %v1915 = vpow.pop %v1914
      %v1916 = vmul.f32 %v1736, 1.442695
      %v1917 = vpow.pop %v1916
      %v1918 = vmul.f32 %v1737, 1.442695
      %v1919 = vpow.pop %v1918
      %v1920 = vmul.f32 %v1738, 1.442695
      %v1921 = vpow.pop %v1920
      %v1922 = vmul.f32 %v1739, 1.442695
      %v1923 = vpow.pop %v1922
      %v1924 = vmul.f32 %v1740, 1.442695
      %v1925 = vpow.pop %v1924
      %v1926 = vmul.f32 %v1741, 1.442695
      %v1927 = vpow.pop %v1926
      %v1928 = vmul.f32 %v1742, 1.442695
      %v1929 = vpow.pop %v1928
      %v1930 = vmul.f32 %v1743, 1.442695
      %v1931 = vpow.pop %v1930
      %v1932 = vmul.f32 %v1744, 1.442695
      %v1933 = vpow.pop %v1932
      %v1934 = vmul.f32 %v1745, 1.442695
      %v1935 = vpow.pop %v1934
      %v1936 = vmul.f32 %v1746, 1.442695
      %v1937 = vpow.pop %v1936
      %v1938 = vmul.f32 %v1747, 1.442695
      %v1939 = vpow.pop %v1938
      %v1940 = vmul.f32 %v1748, 1.442695
      %v1941 = vpow.pop %v1940
      %v1942 = vmul.f32 %v1749, 1.442695
      %v1943 = vpow.pop %v1942
      %v1944 = vmul.f32 %v1750, 1.442695
      %v1945 = vpow.pop %v1944
      %v1946 = vmul.f32 %v1751, 1.442695
      %v1947 = vpow.pop %v1946
      %v1948 = vmul.f32 %v1752, 1.442695
      %v1949 = vpow.pop %v1948
      %v1950 = vmul.f32 %v1753, 1.442695
      %v1951 = vpow.pop %v1950
      %v1952 = vmul.f32 %v1754, 1.442695
      %v1953 = vpow.pop %v1952
      %v1954 = vmul.f32 %v1755, 1.442695
      %v1955 = vpow.pop %v1954
      %v1956 = vmul.f32 %v1756, 1.442695
      %v1957 = vpow.pop %v1956
      %v1958 = vmul.f32 %v1757, 1.442695
      %v1959 = vpow.pop %v1958
      %v1960 = vmul.f32 %v1758, 1.442695
      %v1961 = vpow.pop %v1960
      %v1962 = vmul.f32 %v1759, 1.442695
      %v1963 = vpow.pop %v1962
      %v1964 = vmul.f32 %v1760, 1.442695
      %v1965 = vpow.pop %v1964
      %v1966 = vmul.f32 %v1761, 1.442695
      %v1967 = vpow.pop %v1966
      %v1968 = vmul.f32 %v1762, 1.442695
      %v1969 = vpow.pop %v1968
      %v1970 = vmul.f32 %v1763, 1.442695
      %v1971 = vpow.pop %v1970
      %v1972 = vmul.f32 %v1764, 1.442695
      %v1973 = vpow.pop %v1972
      %v1974 = vmul.f32 %v1765, 1.442695
      %v1975 = vpow.pop %v1974
      %v1976 = vmul.f32 %v1766, 1.442695
      %v1977 = vpow.pop %v1976
      %v1978 = vmul.f32 %v1767, 1.442695
      %v1979 = vpow.pop %v1978
      %v1980 = vmul.f32 %v1768, 1.442695
      %v1981 = vpow.pop %v1980
      %v1982 = vmul.f32 %v1769, 1.442695
      %v1983 = vpow.pop %v1982
      %v1984 = vmul.f32 %v1770, 1.442695
      %v1985 = vpow.pop %v1984
      %v1986 = vmul.f32 %v1771, 1.442695
      %v1987 = vpow.pop %v1986
      %v1988 = vmul.f32 %v1772, 1.442695
      %v1989 = vpow.pop %v1988
      %v1990 = vmul.f32 %v1773, 1.442695
      %v1991 = vpow.pop %v1990
      %v1992 = vmul.f32 %v1774, 1.442695
      %v1993 = vpow.pop %v1992
      %v1994 = vmul.f32 %v1775, 1.442695
      %v1995 = vpow.pop %v1994
      %v1996 = vmul.f32 %v1776, 1.442695
      %v1997 = vpow.pop %v1996
      %v1998 = vmul.f32 %v1777, 1.442695
      %v1999 = vpow.pop %v1998
      %v2000 = vmul.f32 %v1778, 1.442695
      %v2001 = vpow.pop %v2000
      %v2002 = vmul.f32 %v1779, 1.442695
      %v2003 = vpow.pop %v2002
      %v2004 = vmul.f32 %v1780, 1.442695
      %v2005 = vpow.pop %v2004
      %v2006 = vmul.f32 %v1781, 1.442695
      %v2007 = vpow.pop %v2006
      %v2008 = vmul.f32 %v1782, 1.442695
      %v2009 = vpow.pop %v2008
      %v2010 = vmul.f32 %v1783, 1.442695
      %v2011 = vpow.pop %v2010
      %v2012 = vmul.f32 %v1784, 1.442695
      %v2013 = vpow.pop %v2012
      %v2014 = vmul.f32 %v1785, 1.442695
      %v2015 = vpow.pop %v2014
      %v2016 = vmul.f32 %v1786, 1.442695
      %v2017 = vpow.pop %v2016
      %v2018 = vmul.f32 %v1787, 1.442695
      %v2019 = vpow.pop %v2018
      %v2020 = vmul.f32 %v1788, 1.442695
      %v2021 = vpow.pop %v2020
      %v2022 = vmul.f32 %v1789, 1.442695
      %v2023 = vpow.pop %v2022
      %v2024 = vmul.f32 %v1790, 1.442695
      %v2025 = vpow.pop %v2024
      %v2026 = vmul.f32 %v1791, 1.442695
      %v2027 = vpow.pop %v2026
      %v2028 = vmul.f32 %v1792, 1.442695
      %v2029 = vpow.pop %v2028
      %v2030 = vmul.f32 %v1793, 1.442695
      %v2031 = vpow.pop %v2030
      %v2032 = vmul.f32 %v1794, 1.442695
      %v2033 = vpow.pop %v2032
      %v2034 = vmul.f32 %v1795, 1.442695
      %v2035 = vpow.pop %v2034
      %v2036 = vmul.f32 %v1796, 1.442695
      %v2037 = vpow.pop %v2036
      %v2038 = vmul.f32 %v1797, 1.442695
      %v2039 = vpow.pop %v2038
      %v2040 = vmul.f32 %v1798, 1.442695
      %v2041 = vpow.pop %v2040
      %v2042 = vmul.f32 %v1799, 1.442695
      %v2043 = vpow.pop %v2042
      %v2044 = vmul.f32 %v1800, 1.442695
      %v2045 = vpow.pop %v2044
      %v2046 = vmul.f32 %v1801, 1.442695
      %v2047 = vpow.pop %v2046
      %v2048 = vmul.f32 %v1802, 1.442695
      %v2049 = vpow.pop %v2048
      %v2050 = vmul.f32 %v1803, 1.442695
      %v2051 = vpow.pop %v2050
      %v2052 = vmul.f32 %v1804, 1.442695
      %v2053 = vpow.pop %v2052
      %v2054 = vmul.f32 %v1805, 1.442695
      %v2055 = vpow.pop %v2054
      %v2056 = vmul.f32 %v1806, 1.442695
      %v2057 = vpow.pop %v2056
      %v2058 = vmul.f32 %v1807, 1.442695
      %v2059 = vpow.pop %v2058
      %v2060 = vmul.f32 %v1808, 1.442695
      %v2061 = vpow.pop %v2060
      %v2062 = vmul.f32 %v1809, 1.442695
      %v2063 = vpow.pop %v2062
      %v2064 = vmul.f32 %v1810, 1.442695
      %v2065 = vpow.pop %v2064
      %v2066 = vmul.f32 %v1811, 1.442695
      %v2067 = vpow.pop %v2066
      %v2068 = vadd.f32 %v1813, %v1815
      %v2069 = vadd.f32 %v2068, %v1817
      %v2070 = vadd.f32 %v2069, %v1819
      %2071 = vadd.xlane.f32.xlu0 %v2070
      %v2072 = vpop.xlane.xlu0 %2071
      %v2073 = vadd.f32 %v1821, %v1823
      %v2074 = vadd.f32 %v2073, %v1825
      %v2075 = vadd.f32 %v2074, %v1827
      %2076 = vadd.xlane.f32.xlu0 %v2075
      %v2077 = vpop.xlane.xlu0 %2076
      %v2078 = vadd.f32 %v1829, %v1831
      %v2079 = vadd.f32 %v2078, %v1833
      %v2080 = vadd.f32 %v2079, %v1835
      %2081 = vadd.xlane.f32.xlu0 %v2080
      %v2082 = vpop.xlane.xlu0 %2081
      %v2083 = vadd.f32 %v1837, %v1839
      %v2084 = vadd.f32 %v2083, %v1841
      %v2085 = vadd.f32 %v2084, %v1843
      %2086 = vadd.xlane.f32.xlu0 %v2085
      %v2087 = vpop.xlane.xlu0 %2086
      %v2088 = vadd.f32 %v1845, %v1847
      %v2089 = vadd.f32 %v2088, %v1849
      %v2090 = vadd.f32 %v2089, %v1851
      %2091 = vadd.xlane.f32.xlu0 %v2090
      %v2092 = vpop.xlane.xlu0 %2091
      %v2093 = vadd.f32 %v1853, %v1855
      %v2094 = vadd.f32 %v2093, %v1857
      %v2095 = vadd.f32 %v2094, %v1859
      %2096 = vadd.xlane.f32.xlu0 %v2095
      %v2097 = vpop.xlane.xlu0 %2096
      %v2098 = vadd.f32 %v1861, %v1863
      %v2099 = vadd.f32 %v2098, %v1865
      %v2100 = vadd.f32 %v2099, %v1867
      %2101 = vadd.xlane.f32.xlu0 %v2100
      %v2102 = vpop.xlane.xlu0 %2101
      %v2103 = vadd.f32 %v1869, %v1871
      %v2104 = vadd.f32 %v2103, %v1873
      %v2105 = vadd.f32 %v2104, %v1875
      %2106 = vadd.xlane.f32.xlu0 %v2105
      %v2107 = vpop.xlane.xlu0 %2106
      %v2108 = vadd.f32 %v1877, %v1879
      %v2109 = vadd.f32 %v2108, %v1881
      %v2110 = vadd.f32 %v2109, %v1883
      %2111 = vadd.xlane.f32.xlu0 %v2110
      %v2112 = vpop.xlane.xlu0 %2111
      %v2113 = vadd.f32 %v1885, %v1887
      %v2114 = vadd.f32 %v2113, %v1889
      %v2115 = vadd.f32 %v2114, %v1891
      %2116 = vadd.xlane.f32.xlu0 %v2115
      %v2117 = vpop.xlane.xlu0 %2116
      %v2118 = vadd.f32 %v1893, %v1895
      %v2119 = vadd.f32 %v2118, %v1897
      %v2120 = vadd.f32 %v2119, %v1899
      %2121 = vadd.xlane.f32.xlu0 %v2120
      %v2122 = vpop.xlane.xlu0 %2121
      %v2123 = vadd.f32 %v1901, %v1903
      %v2124 = vadd.f32 %v2123, %v1905
      %v2125 = vadd.f32 %v2124, %v1907
      %2126 = vadd.xlane.f32.xlu0 %v2125
      %v2127 = vpop.xlane.xlu0 %2126
      %v2128 = vadd.f32 %v1909, %v1911
      %v2129 = vadd.f32 %v2128, %v1913
      %v2130 = vadd.f32 %v2129, %v1915
      %2131 = vadd.xlane.f32.xlu0 %v2130
      %v2132 = vpop.xlane.xlu0 %2131
      %v2133 = vadd.f32 %v1917, %v1919
      %v2134 = vadd.f32 %v2133, %v1921
      %v2135 = vadd.f32 %v2134, %v1923
      %2136 = vadd.xlane.f32.xlu0 %v2135
      %v2137 = vpop.xlane.xlu0 %2136
      %v2138 = vadd.f32 %v1925, %v1927
      %v2139 = vadd.f32 %v2138, %v1929
      %v2140 = vadd.f32 %v2139, %v1931
      %2141 = vadd.xlane.f32.xlu0 %v2140
      %v2142 = vpop.xlane.xlu0 %2141
      %v2143 = vadd.f32 %v1933, %v1935
      %v2144 = vadd.f32 %v2143, %v1937
      %v2145 = vadd.f32 %v2144, %v1939
      %2146 = vadd.xlane.f32.xlu0 %v2145
      %v2147 = vpop.xlane.xlu0 %2146
      %v2148 = vadd.f32 %v1941, %v1943
      %v2149 = vadd.f32 %v2148, %v1945
      %v2150 = vadd.f32 %v2149, %v1947
      %2151 = vadd.xlane.f32.xlu0 %v2150
      %v2152 = vpop.xlane.xlu0 %2151
      %v2153 = vadd.f32 %v1949, %v1951
      %v2154 = vadd.f32 %v2153, %v1953
      %v2155 = vadd.f32 %v2154, %v1955
      %2156 = vadd.xlane.f32.xlu0 %v2155
      %v2157 = vpop.xlane.xlu0 %2156
      %v2158 = vadd.f32 %v1957, %v1959
      %v2159 = vadd.f32 %v2158, %v1961
      %v2160 = vadd.f32 %v2159, %v1963
      %2161 = vadd.xlane.f32.xlu0 %v2160
      %v2162 = vpop.xlane.xlu0 %2161
      %v2163 = vadd.f32 %v1965, %v1967
      %v2164 = vadd.f32 %v2163, %v1969
      %v2165 = vadd.f32 %v2164, %v1971
      %2166 = vadd.xlane.f32.xlu0 %v2165
      %v2167 = vpop.xlane.xlu0 %2166
      %v2168 = vadd.f32 %v1973, %v1975
      %v2169 = vadd.f32 %v2168, %v1977
      %v2170 = vadd.f32 %v2169, %v1979
      %2171 = vadd.xlane.f32.xlu0 %v2170
      %v2172 = vpop.xlane.xlu0 %2171
      %v2173 = vadd.f32 %v1981, %v1983
      %v2174 = vadd.f32 %v2173, %v1985
      %v2175 = vadd.f32 %v2174, %v1987
      %2176 = vadd.xlane.f32.xlu0 %v2175
      %v2177 = vpop.xlane.xlu0 %2176
      %v2178 = vadd.f32 %v1989, %v1991
      %v2179 = vadd.f32 %v2178, %v1993
      %v2180 = vadd.f32 %v2179, %v1995
      %2181 = vadd.xlane.f32.xlu0 %v2180
      %v2182 = vpop.xlane.xlu0 %2181
      %v2183 = vadd.f32 %v1997, %v1999
      %v2184 = vadd.f32 %v2183, %v2001
      %v2185 = vadd.f32 %v2184, %v2003
      %2186 = vadd.xlane.f32.xlu0 %v2185
      %v2187 = vpop.xlane.xlu0 %2186
      %v2188 = vadd.f32 %v2005, %v2007
      %v2189 = vadd.f32 %v2188, %v2009
      %v2190 = vadd.f32 %v2189, %v2011
      %2191 = vadd.xlane.f32.xlu0 %v2190
      %v2192 = vpop.xlane.xlu0 %2191
      %v2193 = vadd.f32 %v2013, %v2015
      %v2194 = vadd.f32 %v2193, %v2017
      %v2195 = vadd.f32 %v2194, %v2019
      %2196 = vadd.xlane.f32.xlu0 %v2195
      %v2197 = vpop.xlane.xlu0 %2196
      %v2198 = vadd.f32 %v2021, %v2023
      %v2199 = vadd.f32 %v2198, %v2025
      %v2200 = vadd.f32 %v2199, %v2027
      %2201 = vadd.xlane.f32.xlu0 %v2200
      %v2202 = vpop.xlane.xlu0 %2201
      %v2203 = vadd.f32 %v2029, %v2031
      %v2204 = vadd.f32 %v2203, %v2033
      %v2205 = vadd.f32 %v2204, %v2035
      %2206 = vadd.xlane.f32.xlu0 %v2205
      %v2207 = vpop.xlane.xlu0 %2206
      %v2208 = vadd.f32 %v2037, %v2039
      %v2209 = vadd.f32 %v2208, %v2041
      %v2210 = vadd.f32 %v2209, %v2043
      %2211 = vadd.xlane.f32.xlu0 %v2210
      %v2212 = vpop.xlane.xlu0 %2211
      %v2213 = vadd.f32 %v2045, %v2047
      %v2214 = vadd.f32 %v2213, %v2049
      %v2215 = vadd.f32 %v2214, %v2051
      %2216 = vadd.xlane.f32.xlu0 %v2215
      %v2217 = vpop.xlane.xlu0 %2216
      %v2218 = vadd.f32 %v2053, %v2055
      %v2219 = vadd.f32 %v2218, %v2057
      %v2220 = vadd.f32 %v2219, %v2059
      %2221 = vadd.xlane.f32.xlu0 %v2220
      %v2222 = vpop.xlane.xlu0 %2221
      %v2223 = vadd.f32 %v2061, %v2063
      %v2224 = vadd.f32 %v2223, %v2065
      %v2225 = vadd.f32 %v2224, %v2067
      %2226 = vadd.xlane.f32.xlu0 %v2225
      %v2227 = vpop.xlane.xlu0 %2226
      %v2228 = vrcp.pop %v2072
      %v2229 = vrcp.pop %v2077
      %v2230 = vrcp.pop %v2082
      %v2231 = vrcp.pop %v2087
      %v2232 = vrcp.pop %v2092
      %v2233 = vrcp.pop %v2097
      %v2234 = vrcp.pop %v2102
      %v2235 = vrcp.pop %v2107
      %v2236 = vrcp.pop %v2112
      %v2237 = vrcp.pop %v2117
      %v2238 = vrcp.pop %v2122
      %v2239 = vrcp.pop %v2127
      %v2240 = vrcp.pop %v2132
      %v2241 = vrcp.pop %v2137
      %v2242 = vrcp.pop %v2142
      %v2243 = vrcp.pop %v2147
      %v2244 = vrcp.pop %v2152
      %v2245 = vrcp.pop %v2157
      %v2246 = vrcp.pop %v2162
      %v2247 = vrcp.pop %v2167
      %v2248 = vrcp.pop %v2172
      %v2249 = vrcp.pop %v2177
      %v2250 = vrcp.pop %v2182
      %v2251 = vrcp.pop %v2187
      %v2252 = vrcp.pop %v2192
      %v2253 = vrcp.pop %v2197
      %v2254 = vrcp.pop %v2202
      %v2255 = vrcp.pop %v2207
      %v2256 = vrcp.pop %v2212
      %v2257 = vrcp.pop %v2217
      %v2258 = vrcp.pop %v2222
      %v2259 = vrcp.pop %v2227
      %v2260 = vmul.f32 %v1813, %v2228
      %v2261 = vmul.f32 %v1815, %v2228
      %v2262 = vmul.f32 %v1817, %v2228
      %v2263 = vmul.f32 %v1819, %v2228
      %v2264 = vmul.f32 %v1821, %v2229
      %v2265 = vmul.f32 %v1823, %v2229
      %v2266 = vmul.f32 %v1825, %v2229
      %v2267 = vmul.f32 %v1827, %v2229
      %v2268 = vmul.f32 %v1829, %v2230
      %v2269 = vmul.f32 %v1831, %v2230
      %v2270 = vmul.f32 %v1833, %v2230
      %v2271 = vmul.f32 %v1835, %v2230
      %v2272 = vmul.f32 %v1837, %v2231
      %v2273 = vmul.f32 %v1839, %v2231
      %v2274 = vmul.f32 %v1841, %v2231
      %v2275 = vmul.f32 %v1843, %v2231
      %v2276 = vmul.f32 %v1845, %v2232
      %v2277 = vmul.f32 %v1847, %v2232
      %v2278 = vmul.f32 %v1849, %v2232
      %v2279 = vmul.f32 %v1851, %v2232
      %v2280 = vmul.f32 %v1853, %v2233
      %v2281 = vmul.f32 %v1855, %v2233
      %v2282 = vmul.f32 %v1857, %v2233
      %v2283 = vmul.f32 %v1859, %v2233
      %v2284 = vmul.f32 %v1861, %v2234
      %v2285 = vmul.f32 %v1863, %v2234
      %v2286 = vmul.f32 %v1865, %v2234
      %v2287 = vmul.f32 %v1867, %v2234
      %v2288 = vmul.f32 %v1869, %v2235
      %v2289 = vmul.f32 %v1871, %v2235
      %v2290 = vmul.f32 %v1873, %v2235
      %v2291 = vmul.f32 %v1875, %v2235
      %v2292 = vmul.f32 %v1877, %v2236
      %v2293 = vmul.f32 %v1879, %v2236
      %v2294 = vmul.f32 %v1881, %v2236
      %v2295 = vmul.f32 %v1883, %v2236
      %v2296 = vmul.f32 %v1885, %v2237
      %v2297 = vmul.f32 %v1887, %v2237
      %v2298 = vmul.f32 %v1889, %v2237
      %v2299 = vmul.f32 %v1891, %v2237
      %v2300 = vmul.f32 %v1893, %v2238
      %v2301 = vmul.f32 %v1895, %v2238
      %v2302 = vmul.f32 %v1897, %v2238
      %v2303 = vmul.f32 %v1899, %v2238
      %v2304 = vmul.f32 %v1901, %v2239
      %v2305 = vmul.f32 %v1903, %v2239
      %v2306 = vmul.f32 %v1905, %v2239
      %v2307 = vmul.f32 %v1907, %v2239
      %v2308 = vmul.f32 %v1909, %v2240
      %v2309 = vmul.f32 %v1911, %v2240
      %v2310 = vmul.f32 %v1913, %v2240
      %v2311 = vmul.f32 %v1915, %v2240
      %v2312 = vmul.f32 %v1917, %v2241
      %v2313 = vmul.f32 %v1919, %v2241
      %v2314 = vmul.f32 %v1921, %v2241
      %v2315 = vmul.f32 %v1923, %v2241
      %v2316 = vmul.f32 %v1925, %v2242
      %v2317 = vmul.f32 %v1927, %v2242
      %v2318 = vmul.f32 %v1929, %v2242
      %v2319 = vmul.f32 %v1931, %v2242
      %v2320 = vmul.f32 %v1933, %v2243
      %v2321 = vmul.f32 %v1935, %v2243
      %v2322 = vmul.f32 %v1937, %v2243
      %v2323 = vmul.f32 %v1939, %v2243
      %v2324 = vmul.f32 %v1941, %v2244
      %v2325 = vmul.f32 %v1943, %v2244
      %v2326 = vmul.f32 %v1945, %v2244
      %v2327 = vmul.f32 %v1947, %v2244
      %v2328 = vmul.f32 %v1949, %v2245
      %v2329 = vmul.f32 %v1951, %v2245
      %v2330 = vmul.f32 %v1953, %v2245
      %v2331 = vmul.f32 %v1955, %v2245
      %v2332 = vmul.f32 %v1957, %v2246
      %v2333 = vmul.f32 %v1959, %v2246
      %v2334 = vmul.f32 %v1961, %v2246
      %v2335 = vmul.f32 %v1963, %v2246
      %v2336 = vmul.f32 %v1965, %v2247
      %v2337 = vmul.f32 %v1967, %v2247
      %v2338 = vmul.f32 %v1969, %v2247
      %v2339 = vmul.f32 %v1971, %v2247
      %v2340 = vmul.f32 %v1973, %v2248
      %v2341 = vmul.f32 %v1975, %v2248
      %v2342 = vmul.f32 %v1977, %v2248
      %v2343 = vmul.f32 %v1979, %v2248
      %v2344 = vmul.f32 %v1981, %v2249
      %v2345 = vmul.f32 %v1983, %v2249
      %v2346 = vmul.f32 %v1985, %v2249
      %v2347 = vmul.f32 %v1987, %v2249
      %v2348 = vmul.f32 %v1989, %v2250
      %v2349 = vmul.f32 %v1991, %v2250
      %v2350 = vmul.f32 %v1993, %v2250
      %v2351 = vmul.f32 %v1995, %v2250
      %v2352 = vmul.f32 %v1997, %v2251
      %v2353 = vmul.f32 %v1999, %v2251
      %v2354 = vmul.f32 %v2001, %v2251
      %v2355 = vmul.f32 %v2003, %v2251
      %v2356 = vmul.f32 %v2005, %v2252
      %v2357 = vmul.f32 %v2007, %v2252
      %v2358 = vmul.f32 %v2009, %v2252
      %v2359 = vmul.f32 %v2011, %v2252
      %v2360 = vmul.f32 %v2013, %v2253
      %v2361 = vmul.f32 %v2015, %v2253
      %v2362 = vmul.f32 %v2017, %v2253
      %v2363 = vmul.f32 %v2019, %v2253
      %v2364 = vmul.f32 %v2021, %v2254
      %v2365 = vmul.f32 %v2023, %v2254
      %v2366 = vmul.f32 %v2025, %v2254
      %v2367 = vmul.f32 %v2027, %v2254
      %v2368 = vmul.f32 %v2029, %v2255
      %v2369 = vmul.f32 %v2031, %v2255
      %v2370 = vmul.f32 %v2033, %v2255
      %v2371 = vmul.f32 %v2035, %v2255
      %v2372 = vmul.f32 %v2037, %v2256
      %v2373 = vmul.f32 %v2039, %v2256
      %v2374 = vmul.f32 %v2041, %v2256
      %v2375 = vmul.f32 %v2043, %v2256
      %v2376 = vmul.f32 %v2045, %v2257
      %v2377 = vmul.f32 %v2047, %v2257
      %v2378 = vmul.f32 %v2049, %v2257
      %v2379 = vmul.f32 %v2051, %v2257
      %v2380 = vmul.f32 %v2053, %v2258
      %v2381 = vmul.f32 %v2055, %v2258
      %v2382 = vmul.f32 %v2057, %v2258
      %v2383 = vmul.f32 %v2059, %v2258
      %v2384 = vmul.f32 %v2061, %v2259
      %v2385 = vmul.f32 %v2063, %v2259
      %v2386 = vmul.f32 %v2065, %v2259
      %v2387 = vmul.f32 %v2067, %v2259
      %v2388 = vpack.c.bf16 %v2264, %v2260
      %v2389 = vpack.c.bf16 %v2265, %v2261
      %v2390 = vpack.c.bf16 %v2266, %v2262
      %v2391 = vpack.c.bf16 %v2267, %v2263
      %v2392 = vpack.c.bf16 %v2272, %v2268
      %v2393 = vpack.c.bf16 %v2273, %v2269
      %v2394 = vpack.c.bf16 %v2274, %v2270
      %v2395 = vpack.c.bf16 %v2275, %v2271
      %v2396 = vpack.c.bf16 %v2280, %v2276
      %v2397 = vpack.c.bf16 %v2281, %v2277
      %v2398 = vpack.c.bf16 %v2282, %v2278
      %v2399 = vpack.c.bf16 %v2283, %v2279
      %v2400 = vpack.c.bf16 %v2288, %v2284
      %v2401 = vpack.c.bf16 %v2289, %v2285
      %v2402 = vpack.c.bf16 %v2290, %v2286
      %v2403 = vpack.c.bf16 %v2291, %v2287
      %v2404 = vpack.c.bf16 %v2296, %v2292
      %v2405 = vpack.c.bf16 %v2297, %v2293
      %v2406 = vpack.c.bf16 %v2298, %v2294
      %v2407 = vpack.c.bf16 %v2299, %v2295
      %v2408 = vpack.c.bf16 %v2304, %v2300
      %v2409 = vpack.c.bf16 %v2305, %v2301
      %v2410 = vpack.c.bf16 %v2306, %v2302
      %v2411 = vpack.c.bf16 %v2307, %v2303
      %v2412 = vpack.c.bf16 %v2312, %v2308
      %v2413 = vpack.c.bf16 %v2313, %v2309
      %v2414 = vpack.c.bf16 %v2314, %v2310
      %v2415 = vpack.c.bf16 %v2315, %v2311
      %v2416 = vpack.c.bf16 %v2320, %v2316
      %v2417 = vpack.c.bf16 %v2321, %v2317
      %v2418 = vpack.c.bf16 %v2322, %v2318
      %v2419 = vpack.c.bf16 %v2323, %v2319
      %v2420 = vpack.c.bf16 %v2328, %v2324
      %v2421 = vpack.c.bf16 %v2329, %v2325
      %v2422 = vpack.c.bf16 %v2330, %v2326
      %v2423 = vpack.c.bf16 %v2331, %v2327
      %v2424 = vpack.c.bf16 %v2336, %v2332
      %v2425 = vpack.c.bf16 %v2337, %v2333
      %v2426 = vpack.c.bf16 %v2338, %v2334
      %v2427 = vpack.c.bf16 %v2339, %v2335
      %v2428 = vpack.c.bf16 %v2344, %v2340
      %v2429 = vpack.c.bf16 %v2345, %v2341
      %v2430 = vpack.c.bf16 %v2346, %v2342
      %v2431 = vpack.c.bf16 %v2347, %v2343
      %v2432 = vpack.c.bf16 %v2352, %v2348
      %v2433 = vpack.c.bf16 %v2353, %v2349
      %v2434 = vpack.c.bf16 %v2354, %v2350
      %v2435 = vpack.c.bf16 %v2355, %v2351
      %v2436 = vpack.c.bf16 %v2360, %v2356
      %v2437 = vpack.c.bf16 %v2361, %v2357
      %v2438 = vpack.c.bf16 %v2362, %v2358
      %v2439 = vpack.c.bf16 %v2363, %v2359
      %v2440 = vpack.c.bf16 %v2368, %v2364
      %v2441 = vpack.c.bf16 %v2369, %v2365
      %v2442 = vpack.c.bf16 %v2370, %v2366
      %v2443 = vpack.c.bf16 %v2371, %v2367
      %v2444 = vpack.c.bf16 %v2376, %v2372
      %v2445 = vpack.c.bf16 %v2377, %v2373
      %v2446 = vpack.c.bf16 %v2378, %v2374
      %v2447 = vpack.c.bf16 %v2379, %v2375
      %v2448 = vpack.c.bf16 %v2384, %v2380
      %v2449 = vpack.c.bf16 %v2385, %v2381
      %v2450 = vpack.c.bf16 %v2386, %v2382
      %v2451 = vpack.c.bf16 %v2387, %v2383
      %v2452 = vld [vmem:[%s405] sm:$0xf]
      %v2453 = vld [vmem:[%s405 + $0x4] sm:$0xf]
      %v2454 = vld [vmem:[%s405 + $0x8] sm:$0xf]
      %v2455 = vld [vmem:[%s405 + $0xc] sm:$0xf]
      %v2456 = vld [vmem:[%s405 + $0x10] sm:$0xf]
      %v2457 = vld [vmem:[%s405 + $0x14] sm:$0xf]
      %v2458 = vld [vmem:[%s405 + $0x18] sm:$0xf]
      %v2459 = vld [vmem:[%s405 + $0x1c] sm:$0xf]
      %v2460 = vld [vmem:[%s405 + $0x20] sm:$0xf]
      %v2461 = vld [vmem:[%s405 + $0x24] sm:$0xf]
      %v2462 = vld [vmem:[%s405 + $0x28] sm:$0xf]
      %v2463 = vld [vmem:[%s405 + $0x2c] sm:$0xf]
      %v2464 = vld [vmem:[%s405 + $0x30] sm:$0xf]
      %v2465 = vld [vmem:[%s405 + $0x34] sm:$0xf]
      %v2466 = vld [vmem:[%s405 + $0x38] sm:$0xf]
      %v2467 = vld [vmem:[%s405 + $0x3c] sm:$0xf]
      %v2468 = vld [vmem:[%s405 + $0x40] sm:$0xf]
      %v2469 = vld [vmem:[%s405 + $0x44] sm:$0xf]
      %v2470 = vld [vmem:[%s405 + $0x48] sm:$0xf]
      %v2471 = vld [vmem:[%s405 + $0x4c] sm:$0xf]
      %v2472 = vld [vmem:[%s405 + $0x50] sm:$0xf]
      %v2473 = vld [vmem:[%s405 + $0x54] sm:$0xf]
      %v2474 = vld [vmem:[%s405 + $0x58] sm:$0xf]
      %v2475 = vld [vmem:[%s405 + $0x5c] sm:$0xf]
      %v2476 = vld [vmem:[%s405 + $0x60] sm:$0xf]
      %v2477 = vld [vmem:[%s405 + $0x64] sm:$0xf]
      %v2478 = vld [vmem:[%s405 + $0x68] sm:$0xf]
      %v2479 = vld [vmem:[%s405 + $0x6c] sm:$0xf]
      %v2480 = vld [vmem:[%s405 + $0x70] sm:$0xf]
      %v2481 = vld [vmem:[%s405 + $0x74] sm:$0xf]
      %v2482 = vld [vmem:[%s405 + $0x78] sm:$0xf]
      %v2483 = vld [vmem:[%s405 + $0x7c] sm:$0xf]
      %v2484 = vld [vmem:[%s405 + $0x80] sm:$0xf]
      %v2485 = vld [vmem:[%s405 + $0x84] sm:$0xf]
      %v2486 = vld [vmem:[%s405 + $0x88] sm:$0xf]
      %v2487 = vld [vmem:[%s405 + $0x8c] sm:$0xf]
      %v2488 = vld [vmem:[%s405 + $0x90] sm:$0xf]
      %v2489 = vld [vmem:[%s405 + $0x94] sm:$0xf]
      %v2490 = vld [vmem:[%s405 + $0x98] sm:$0xf]
      %v2491 = vld [vmem:[%s405 + $0x9c] sm:$0xf]
      %v2492 = vld [vmem:[%s405 + $0xa0] sm:$0xf]
      %v2493 = vld [vmem:[%s405 + $0xa4] sm:$0xf]
      %v2494 = vld [vmem:[%s405 + $0xa8] sm:$0xf]
      %v2495 = vld [vmem:[%s405 + $0xac] sm:$0xf]
      %v2496 = vld [vmem:[%s405 + $0xb0] sm:$0xf]
      %v2497 = vld [vmem:[%s405 + $0xb4] sm:$0xf]
      %v2498 = vld [vmem:[%s405 + $0xb8] sm:$0xf]
      %v2499 = vld [vmem:[%s405 + $0xbc] sm:$0xf]
      %v2500 = vld [vmem:[%s405 + $0xc0] sm:$0xf]
      %v2501 = vld [vmem:[%s405 + $0xc4] sm:$0xf]
      %v2502 = vld [vmem:[%s405 + $0xc8] sm:$0xf]
      %v2503 = vld [vmem:[%s405 + $0xcc] sm:$0xf]
      %v2504 = vld [vmem:[%s405 + $0xd0] sm:$0xf]
      %v2505 = vld [vmem:[%s405 + $0xd4] sm:$0xf]
      %v2506 = vld [vmem:[%s405 + $0xd8] sm:$0xf]
      %v2507 = vld [vmem:[%s405 + $0xdc] sm:$0xf]
      %v2508 = vld [vmem:[%s405 + $0xe0] sm:$0xf]
      %v2509 = vld [vmem:[%s405 + $0xe4] sm:$0xf]
      %v2510 = vld [vmem:[%s405 + $0xe8] sm:$0xf]
      %v2511 = vld [vmem:[%s405 + $0xec] sm:$0xf]
      %v2512 = vld [vmem:[%s405 + $0xf0] sm:$0xf]
      %v2513 = vld [vmem:[%s405 + $0xf4] sm:$0xf]
      %v2514 = vld [vmem:[%s405 + $0xf8] sm:$0xf]
      %v2515 = vld [vmem:[%s405 + $0xfc] sm:$0xf]
      %v2580 = vunpack.c.l.b16 %v2452
      %v2581 = vunpack.c.l.b16 %v2453
      %v2582 = vunpack.c.l.b16 %v2454
      %v2583 = vunpack.c.l.b16 %v2455
      %v2584 = vunpack.c.l.b16 %v2456
      %v2585 = vunpack.c.l.b16 %v2457
      %v2586 = vunpack.c.l.b16 %v2458
      %v2587 = vunpack.c.l.b16 %v2459
      %v2588 = vunpack.c.l.b16 %v2460
      %v2589 = vunpack.c.l.b16 %v2461
      %v2590 = vunpack.c.l.b16 %v2462
      %v2591 = vunpack.c.l.b16 %v2463
      %v2592 = vunpack.c.l.b16 %v2464
      %v2593 = vunpack.c.l.b16 %v2465
      %v2594 = vunpack.c.l.b16 %v2466
      %v2595 = vunpack.c.l.b16 %v2467
      %v2596 = vunpack.c.l.b16 %v2468
      %v2597 = vunpack.c.l.b16 %v2469
      %v2598 = vunpack.c.l.b16 %v2470
      %v2599 = vunpack.c.l.b16 %v2471
      %v2600 = vunpack.c.l.b16 %v2472
      %v2601 = vunpack.c.l.b16 %v2473
      %v2602 = vunpack.c.l.b16 %v2474
      %v2603 = vunpack.c.l.b16 %v2475
      %v2604 = vunpack.c.l.b16 %v2476
      %v2605 = vunpack.c.l.b16 %v2477
      %v2606 = vunpack.c.l.b16 %v2478
      %v2607 = vunpack.c.l.b16 %v2479
      %v2608 = vunpack.c.l.b16 %v2480
      %v2609 = vunpack.c.l.b16 %v2481
      %v2610 = vunpack.c.l.b16 %v2482
      %v2611 = vunpack.c.l.b16 %v2483
      %v2612 = vunpack.c.l.b16 %v2484
      %v2613 = vunpack.c.l.b16 %v2485
      %v2614 = vunpack.c.l.b16 %v2486
      %v2615 = vunpack.c.l.b16 %v2487
      %v2616 = vunpack.c.l.b16 %v2488
      %v2617 = vunpack.c.l.b16 %v2489
      %v2618 = vunpack.c.l.b16 %v2490
      %v2619 = vunpack.c.l.b16 %v2491
      %v2620 = vunpack.c.l.b16 %v2492
      %v2621 = vunpack.c.l.b16 %v2493
      %v2622 = vunpack.c.l.b16 %v2494
      %v2623 = vunpack.c.l.b16 %v2495
      %v2624 = vunpack.c.l.b16 %v2496
      %v2625 = vunpack.c.l.b16 %v2497
      %v2626 = vunpack.c.l.b16 %v2498
      %v2627 = vunpack.c.l.b16 %v2499
      %v2628 = vunpack.c.l.b16 %v2500
      %v2629 = vunpack.c.l.b16 %v2501
      %v2630 = vunpack.c.l.b16 %v2502
      %v2631 = vunpack.c.l.b16 %v2503
      %v2632 = vunpack.c.l.b16 %v2504
      %v2633 = vunpack.c.l.b16 %v2505
      %v2634 = vunpack.c.l.b16 %v2506
      %v2635 = vunpack.c.l.b16 %v2507
      %v2636 = vunpack.c.l.b16 %v2508
      %v2637 = vunpack.c.l.b16 %v2509
      %v2638 = vunpack.c.l.b16 %v2510
      %v2639 = vunpack.c.l.b16 %v2511
      %v2640 = vunpack.c.l.b16 %v2512
      %v2641 = vunpack.c.l.b16 %v2513
      %v2642 = vunpack.c.l.b16 %v2514
      %v2643 = vunpack.c.l.b16 %v2515
      %v2644 = vpack.c.b16 %v2581, %v2580
      %v2645 = vpack.c.b16 %v2583, %v2582
      %v2646 = vpack.c.b16 %v2585, %v2584
      %v2647 = vpack.c.b16 %v2587, %v2586
      %v2648 = vpack.c.b16 %v2589, %v2588
      %v2649 = vpack.c.b16 %v2591, %v2590
      %v2650 = vpack.c.b16 %v2593, %v2592
      %v2651 = vpack.c.b16 %v2595, %v2594
      %v2652 = vpack.c.b16 %v2597, %v2596
      %v2653 = vpack.c.b16 %v2599, %v2598
      %v2654 = vpack.c.b16 %v2601, %v2600
      %v2655 = vpack.c.b16 %v2603, %v2602
      %v2656 = vpack.c.b16 %v2605, %v2604
      %v2657 = vpack.c.b16 %v2607, %v2606
      %v2658 = vpack.c.b16 %v2609, %v2608
      %v2659 = vpack.c.b16 %v2611, %v2610
      %v2660 = vpack.c.b16 %v2613, %v2612
      %v2661 = vpack.c.b16 %v2615, %v2614
      %v2662 = vpack.c.b16 %v2617, %v2616
      %v2663 = vpack.c.b16 %v2619, %v2618
      %v2664 = vpack.c.b16 %v2621, %v2620
      %v2665 = vpack.c.b16 %v2623, %v2622
      %v2666 = vpack.c.b16 %v2625, %v2624
      %v2667 = vpack.c.b16 %v2627, %v2626
      %v2668 = vpack.c.b16 %v2629, %v2628
      %v2669 = vpack.c.b16 %v2631, %v2630
      %v2670 = vpack.c.b16 %v2633, %v2632
      %v2671 = vpack.c.b16 %v2635, %v2634
      %v2672 = vpack.c.b16 %v2637, %v2636
      %v2673 = vpack.c.b16 %v2639, %v2638
      %v2674 = vpack.c.b16 %v2641, %v2640
      %v2675 = vpack.c.b16 %v2643, %v2642
      %2708 = vmatprep.subr.bf16.mxu0 0
      %2709 = vmatpush1.bf16.msra.mxu0 %v2644
      %2710 = vmatprep.subr.bf16.mxu0 0
      %2711 = vmatpush1.bf16.msra.mxu0 %v2645
      %2712 = vmatprep.subr.bf16.mxu0 0
      %2713 = vmatpush1.bf16.msra.mxu0 %v2646
      %2714 = vmatprep.subr.bf16.mxu0 0
      %2715 = vmatpush1.bf16.msra.mxu0 %v2647
      %2716 = vmatprep.subr.bf16.mxu0 0
      %2717 = vmatpush1.bf16.msra.mxu0 %v2648
      %2718 = vmatprep.subr.bf16.mxu0 0
      %2719 = vmatpush1.bf16.msra.mxu0 %v2649
      %2720 = vmatprep.subr.bf16.mxu0 0
      %2721 = vmatpush1.bf16.msra.mxu0 %v2650
      %2722 = vmatprep.subr.bf16.mxu0 0
      %2723 = vmatpush1.bf16.msra.mxu0 %v2651
      %2724 = vmatprep.subr.bf16.mxu0 0
      %2725 = vmatpush1.bf16.msra.mxu0 %v2652
      %2726 = vmatprep.subr.bf16.mxu0 0
      %2727 = vmatpush1.bf16.msra.mxu0 %v2653
      %2728 = vmatprep.subr.bf16.mxu0 0
      %2729 = vmatpush1.bf16.msra.mxu0 %v2654
      %2730 = vmatprep.subr.bf16.mxu0 0
      %2731 = vmatpush1.bf16.msra.mxu0 %v2655
      %2732 = vmatprep.subr.bf16.mxu0 0
      %2733 = vmatpush1.bf16.msra.mxu0 %v2656
      %2734 = vmatprep.subr.bf16.mxu0 0
      %2735 = vmatpush1.bf16.msra.mxu0 %v2657
      %2736 = vmatprep.subr.bf16.mxu0 0
      %2737 = vmatpush1.bf16.msra.mxu0 %v2658
      %2738 = vmatprep.subr.bf16.mxu0 0
      %2739 = vmatpush1.bf16.msra.mxu0 %v2659
      %2740 = vmatprep.mubr.bf16.mxu0 %v2389
      %2741 = vmatmul.mubr.bf16.gmra.mrb[0].mxu0 %v2388
      %v2742 = vpop.f32.mrb[0].mxu0
      %v2743 = vadd.f32 0.0, %v2742
      %v2744 = vpop.f32.mrb[0].mxu0
      %v2745 = vpop.f32.mrb[0].mxu0
      %v2746 = vadd.f32 0.0, %v2745
      %v2747 = vpop.f32.mrb[0].mxu0
      %2748 = vmatprep.mubr.bf16.mxu0 %v2393
      %2749 = vmatmul.mubr.bf16.gmra.mrb[0].mxu0 %v2392
      %v2750 = vpop.f32.mrb[0].mxu0
      %v2751 = vadd.f32 0.0, %v2750
      %v2752 = vpop.f32.mrb[0].mxu0
      %v2753 = vpop.f32.mrb[0].mxu0
      %v2754 = vadd.f32 0.0, %v2753
      %v2755 = vpop.f32.mrb[0].mxu0
      %2756 = vmatprep.mubr.bf16.mxu0 %v2397
      %2757 = vmatmul.mubr.bf16.gmra.mrb[0].mxu0 %v2396
      %v2758 = vpop.f32.mrb[0].mxu0
      %v2759 = vadd.f32 0.0, %v2758
      %v2760 = vpop.f32.mrb[0].mxu0
      %v2761 = vpop.f32.mrb[0].mxu0
      %v2762 = vadd.f32 0.0, %v2761
      %v2763 = vpop.f32.mrb[0].mxu0
      %2764 = vmatprep.mubr.bf16.mxu0 %v2401
      %2765 = vmatmul.mubr.bf16.gmra.mrb[0].mxu0 %v2400
      %v2766 = vpop.f32.mrb[0].mxu0
      %v2767 = vadd.f32 0.0, %v2766
      %v2768 = vpop.f32.mrb[0].mxu0
      %v2769 = vpop.f32.mrb[0].mxu0
      %v2770 = vadd.f32 0.0, %v2769
      %v2771 = vpop.f32.mrb[0].mxu0
      %2772 = vmatprep.mubr.bf16.mxu0 %v2405
      %2773 = vmatmul.mubr.bf16.gmra.mrb[0].mxu0 %v2404
      %v2774 = vpop.f32.mrb[0].mxu0
      %v2775 = vadd.f32 0.0, %v2774
      %v2776 = vpop.f32.mrb[0].mxu0
      %v2777 = vpop.f32.mrb[0].mxu0
      %v2778 = vadd.f32 0.0, %v2777
      %v2779 = vpop.f32.mrb[0].mxu0
      %2780 = vmatprep.mubr.bf16.mxu0 %v2409
      %2781 = vmatmul.mubr.bf16.gmra.mrb[0].mxu0 %v2408
      %v2782 = vpop.f32.mrb[0].mxu0
      %v2783 = vadd.f32 0.0, %v2782
      %v2784 = vpop.f32.mrb[0].mxu0
      %v2785 = vpop.f32.mrb[0].mxu0
      %v2786 = vadd.f32 0.0, %v2785
      %v2787 = vpop.f32.mrb[0].mxu0
      %2788 = vmatprep.mubr.bf16.mxu0 %v2413
      %2789 = vmatmul.mubr.bf16.gmra.mrb[0].mxu0 %v2412
      %v2790 = vpop.f32.mrb[0].mxu0
      %v2791 = vadd.f32 0.0, %v2790
      %v2792 = vpop.f32.mrb[0].mxu0
      %v2793 = vpop.f32.mrb[0].mxu0
      %v2794 = vadd.f32 0.0, %v2793
      %v2795 = vpop.f32.mrb[0].mxu0
      %2796 = vmatprep.mubr.bf16.mxu0 %v2417
      %2797 = vmatmul.mubr.bf16.gmra.mrb[0].mxu0 %v2416
      %v2798 = vpop.f32.mrb[0].mxu0
      %v2799 = vadd.f32 0.0, %v2798
      %v2800 = vpop.f32.mrb[0].mxu0
      %v2801 = vpop.f32.mrb[0].mxu0
      %v2802 = vadd.f32 0.0, %v2801
      %v2803 = vpop.f32.mrb[0].mxu0
      %2804 = vmatprep.mubr.bf16.mxu0 %v2421
      %2805 = vmatmul.mubr.bf16.gmra.mrb[0].mxu0 %v2420
      %v2806 = vpop.f32.mrb[0].mxu0
      %v2807 = vadd.f32 0.0, %v2806
      %v2808 = vpop.f32.mrb[0].mxu0
      %v2809 = vpop.f32.mrb[0].mxu0
      %v2810 = vadd.f32 0.0, %v2809
      %v2811 = vpop.f32.mrb[0].mxu0
      %2812 = vmatprep.mubr.bf16.mxu0 %v2425
      %2813 = vmatmul.mubr.bf16.gmra.mrb[0].mxu0 %v2424
      %v2814 = vpop.f32.mrb[0].mxu0
      %v2815 = vadd.f32 0.0, %v2814
      %v2816 = vpop.f32.mrb[0].mxu0
      %v2817 = vpop.f32.mrb[0].mxu0
      %v2818 = vadd.f32 0.0, %v2817
      %v2819 = vpop.f32.mrb[0].mxu0
      %2820 = vmatprep.mubr.bf16.mxu0 %v2429
      %2821 = vmatmul.mubr.bf16.gmra.mrb[0].mxu0 %v2428
      %v2822 = vpop.f32.mrb[0].mxu0
      %v2823 = vadd.f32 0.0, %v2822
      %v2824 = vpop.f32.mrb[0].mxu0
      %v2825 = vpop.f32.mrb[0].mxu0
      %v2826 = vadd.f32 0.0, %v2825
      %v2827 = vpop.f32.mrb[0].mxu0
      %2828 = vmatprep.mubr.bf16.mxu0 %v2433
      %2829 = vmatmul.mubr.bf16.gmra.mrb[0].mxu0 %v2432
      %v2830 = vpop.f32.mrb[0].mxu0
      %v2831 = vadd.f32 0.0, %v2830
      %v2832 = vpop.f32.mrb[0].mxu0
      %v2833 = vpop.f32.mrb[0].mxu0
      %v2834 = vadd.f32 0.0, %v2833
      %v2835 = vpop.f32.mrb[0].mxu0
      %2836 = vmatprep.mubr.bf16.mxu0 %v2437
      %2837 = vmatmul.mubr.bf16.gmra.mrb[0].mxu0 %v2436
      %v2838 = vpop.f32.mrb[0].mxu0
      %v2839 = vadd.f32 0.0, %v2838
      %v2840 = vpop.f32.mrb[0].mxu0
      %v2841 = vpop.f32.mrb[0].mxu0
      %v2842 = vadd.f32 0.0, %v2841
      %v2843 = vpop.f32.mrb[0].mxu0
      %2844 = vmatprep.mubr.bf16.mxu0 %v2441
      %2845 = vmatmul.mubr.bf16.gmra.mrb[0].mxu0 %v2440
      %v2846 = vpop.f32.mrb[0].mxu0
      %v2847 = vadd.f32 0.0, %v2846
      %v2848 = vpop.f32.mrb[0].mxu0
      %v2849 = vpop.f32.mrb[0].mxu0
      %v2850 = vadd.f32 0.0, %v2849
      %v2851 = vpop.f32.mrb[0].mxu0
      %2852 = vmatprep.mubr.bf16.mxu0 %v2445
      %2853 = vmatmul.mubr.bf16.gmra.mrb[0].mxu0 %v2444
      %v2854 = vpop.f32.mrb[0].mxu0
      %v2855 = vadd.f32 0.0, %v2854
      %v2856 = vpop.f32.mrb[0].mxu0
      %v2857 = vpop.f32.mrb[0].mxu0
      %v2858 = vadd.f32 0.0, %v2857
      %v2859 = vpop.f32.mrb[0].mxu0
      %2860 = vmatprep.mubr.bf16.mxu0 %v2449
      %2861 = vmatmul.mubr.bf16.gmra.mrb[0].mxu0 %v2448
      %v2862 = vpop.f32.mrb[0].mxu0
      %v2863 = vadd.f32 0.0, %v2862
      %v2864 = vpop.f32.mrb[0].mxu0
      %v2865 = vpop.f32.mrb[0].mxu0
      %v2866 = vadd.f32 0.0, %v2865
      %v2867 = vpop.f32.mrb[0].mxu0
      %2868 = vdwg.mxu0
      %2869 = vmatprep.subr.bf16.mxu0 0
      %2870 = vmatpush1.bf16.msra.mxu0 %v2660
      %2871 = vmatprep.subr.bf16.mxu0 0
      %2872 = vmatpush1.bf16.msra.mxu0 %v2661
      %2873 = vmatprep.subr.bf16.mxu0 0
      %2874 = vmatpush1.bf16.msra.mxu0 %v2662
      %2875 = vmatprep.subr.bf16.mxu0 0
      %2876 = vmatpush1.bf16.msra.mxu0 %v2663
      %2877 = vmatprep.subr.bf16.mxu0 0
      %2878 = vmatpush1.bf16.msra.mxu0 %v2664
      %2879 = vmatprep.subr.bf16.mxu0 0
      %2880 = vmatpush1.bf16.msra.mxu0 %v2665
      %2881 = vmatprep.subr.bf16.mxu0 0
      %2882 = vmatpush1.bf16.msra.mxu0 %v2666
      %2883 = vmatprep.subr.bf16.mxu0 0
      %2884 = vmatpush1.bf16.msra.mxu0 %v2667
      %2885 = vmatprep.subr.bf16.mxu0 0
      %2886 = vmatpush1.bf16.msra.mxu0 %v2668
      %2887 = vmatprep.subr.bf16.mxu0 0
      %2888 = vmatpush1.bf16.msra.mxu0 %v2669
      %2889 = vmatprep.subr.bf16.mxu0 0
      %2890 = vmatpush1.bf16.msra.mxu0 %v2670
      %2891 = vmatprep.subr.bf16.mxu0 0
      %2892 = vmatpush1.bf16.msra.mxu0 %v2671
      %2893 = vmatprep.subr.bf16.mxu0 0
      %2894 = vmatpush1.bf16.msra.mxu0 %v2672
      %2895 = vmatprep.subr.bf16.mxu0 0
      %2896 = vmatpush1.bf16.msra.mxu0 %v2673
      %2897 = vmatprep.subr.bf16.mxu0 0
      %2898 = vmatpush1.bf16.msra.mxu0 %v2674
      %2899 = vmatprep.subr.bf16.mxu0 0
      %2900 = vmatpush1.bf16.msra.mxu0 %v2675
      %2901 = vmatprep.mubr.bf16.mxu0 %v2391
      %2902 = vmatmul.mubr.bf16.gmra.mrb[0].mxu0 %v2390
      %v2903 = vpop.f32.mrb[0].mxu0
      %v2904 = vadd.f32 %v2743, %v2903
      %v2905 = vpop.f32.mrb[0].mxu0
      %v2906 = vpop.f32.mrb[0].mxu0
      %v2907 = vadd.f32 %v2746, %v2906
      %v2908 = vpop.f32.mrb[0].mxu0
      %2909 = vmatprep.mubr.bf16.mxu0 %v2395
      %2910 = vmatmul.mubr.bf16.gmra.mrb[0].mxu0 %v2394
      %v2911 = vpop.f32.mrb[0].mxu0
      %v2912 = vadd.f32 %v2751, %v2911
      %v2913 = vpop.f32.mrb[0].mxu0
      %v2914 = vpop.f32.mrb[0].mxu0
      %v2915 = vadd.f32 %v2754, %v2914
      %v2916 = vpop.f32.mrb[0].mxu0
      %2917 = vmatprep.mubr.bf16.mxu0 %v2399
      %2918 = vmatmul.mubr.bf16.gmra.mrb[0].mxu0 %v2398
      %v2919 = vpop.f32.mrb[0].mxu0
      %v2920 = vadd.f32 %v2759, %v2919
      %v2921 = vpop.f32.mrb[0].mxu0
      %v2922 = vpop.f32.mrb[0].mxu0
      %v2923 = vadd.f32 %v2762, %v2922
      %v2924 = vpop.f32.mrb[0].mxu0
      %2925 = vmatprep.mubr.bf16.mxu0 %v2403
      %2926 = vmatmul.mubr.bf16.gmra.mrb[0].mxu0 %v2402
      %v2927 = vpop.f32.mrb[0].mxu0
      %v2928 = vadd.f32 %v2767, %v2927
      %v2929 = vpop.f32.mrb[0].mxu0
      %v2930 = vpop.f32.mrb[0].mxu0
      %v2931 = vadd.f32 %v2770, %v2930
      %v2932 = vpop.f32.mrb[0].mxu0
      %2933 = vmatprep.mubr.bf16.mxu0 %v2407
      %2934 = vmatmul.mubr.bf16.gmra.mrb[0].mxu0 %v2406
      %v2935 = vpop.f32.mrb[0].mxu0
      %v2936 = vadd.f32 %v2775, %v2935
      %v2937 = vpop.f32.mrb[0].mxu0
      %v2938 = vpop.f32.mrb[0].mxu0
      %v2939 = vadd.f32 %v2778, %v2938
      %v2940 = vpop.f32.mrb[0].mxu0
      %2941 = vmatprep.mubr.bf16.mxu0 %v2411
      %2942 = vmatmul.mubr.bf16.gmra.mrb[0].mxu0 %v2410
      %v2943 = vpop.f32.mrb[0].mxu0
      %v2944 = vadd.f32 %v2783, %v2943
      %v2945 = vpop.f32.mrb[0].mxu0
      %v2946 = vpop.f32.mrb[0].mxu0
      %v2947 = vadd.f32 %v2786, %v2946
      %v2948 = vpop.f32.mrb[0].mxu0
      %2949 = vmatprep.mubr.bf16.mxu0 %v2415
      %2950 = vmatmul.mubr.bf16.gmra.mrb[0].mxu0 %v2414
      %v2951 = vpop.f32.mrb[0].mxu0
      %v2952 = vadd.f32 %v2791, %v2951
      %v2953 = vpop.f32.mrb[0].mxu0
      %v2954 = vpop.f32.mrb[0].mxu0
      %v2955 = vadd.f32 %v2794, %v2954
      %v2956 = vpop.f32.mrb[0].mxu0
      %2957 = vmatprep.mubr.bf16.mxu0 %v2419
      %2958 = vmatmul.mubr.bf16.gmra.mrb[0].mxu0 %v2418
      %v2959 = vpop.f32.mrb[0].mxu0
      %v2960 = vadd.f32 %v2799, %v2959
      %v2961 = vpop.f32.mrb[0].mxu0
      %v2962 = vpop.f32.mrb[0].mxu0
      %v2963 = vadd.f32 %v2802, %v2962
      %v2964 = vpop.f32.mrb[0].mxu0
      %2965 = vmatprep.mubr.bf16.mxu0 %v2423
      %2966 = vmatmul.mubr.bf16.gmra.mrb[0].mxu0 %v2422
      %v2967 = vpop.f32.mrb[0].mxu0
      %v2968 = vadd.f32 %v2807, %v2967
      %v2969 = vpop.f32.mrb[0].mxu0
      %v2970 = vpop.f32.mrb[0].mxu0
      %v2971 = vadd.f32 %v2810, %v2970
      %v2972 = vpop.f32.mrb[0].mxu0
      %2973 = vmatprep.mubr.bf16.mxu0 %v2427
      %2974 = vmatmul.mubr.bf16.gmra.mrb[0].mxu0 %v2426
      %v2975 = vpop.f32.mrb[0].mxu0
      %v2976 = vadd.f32 %v2815, %v2975
      %v2977 = vpop.f32.mrb[0].mxu0
      %v2978 = vpop.f32.mrb[0].mxu0
      %v2979 = vadd.f32 %v2818, %v2978
      %v2980 = vpop.f32.mrb[0].mxu0
      %2981 = vmatprep.mubr.bf16.mxu0 %v2431
      %2982 = vmatmul.mubr.bf16.gmra.mrb[0].mxu0 %v2430
      %v2983 = vpop.f32.mrb[0].mxu0
      %v2984 = vadd.f32 %v2823, %v2983
      %v2985 = vpop.f32.mrb[0].mxu0
      %v2986 = vpop.f32.mrb[0].mxu0
      %v2987 = vadd.f32 %v2826, %v2986
      %v2988 = vpop.f32.mrb[0].mxu0
      %2989 = vmatprep.mubr.bf16.mxu0 %v2435
      %2990 = vmatmul.mubr.bf16.gmra.mrb[0].mxu0 %v2434
      %v2991 = vpop.f32.mrb[0].mxu0
      %v2992 = vadd.f32 %v2831, %v2991
      %v2993 = vpop.f32.mrb[0].mxu0
      %v2994 = vpop.f32.mrb[0].mxu0
      %v2995 = vadd.f32 %v2834, %v2994
      %v2996 = vpop.f32.mrb[0].mxu0
      %2997 = vmatprep.mubr.bf16.mxu0 %v2439
      %2998 = vmatmul.mubr.bf16.gmra.mrb[0].mxu0 %v2438
      %v2999 = vpop.f32.mrb[0].mxu0
      %v3000 = vadd.f32 %v2839, %v2999
      %v3001 = vpop.f32.mrb[0].mxu0
      %v3002 = vpop.f32.mrb[0].mxu0
      %v3003 = vadd.f32 %v2842, %v3002
      %v3004 = vpop.f32.mrb[0].mxu0
      %3005 = vmatprep.mubr.bf16.mxu0 %v2443
      %3006 = vmatmul.mubr.bf16.gmra.mrb[0].mxu0 %v2442
      %v3007 = vpop.f32.mrb[0].mxu0
      %v3008 = vadd.f32 %v2847, %v3007
      %v3009 = vpop.f32.mrb[0].mxu0
      %v3010 = vpop.f32.mrb[0].mxu0
      %v3011 = vadd.f32 %v2850, %v3010
      %v3012 = vpop.f32.mrb[0].mxu0
      %3013 = vmatprep.mubr.bf16.mxu0 %v2447
      %3014 = vmatmul.mubr.bf16.gmra.mrb[0].mxu0 %v2446
      %v3015 = vpop.f32.mrb[0].mxu0
      %v3016 = vadd.f32 %v2855, %v3015
      %v3017 = vpop.f32.mrb[0].mxu0
      %v3018 = vpop.f32.mrb[0].mxu0
      %v3019 = vadd.f32 %v2858, %v3018
      %v3020 = vpop.f32.mrb[0].mxu0
      %3021 = vmatprep.mubr.bf16.mxu0 %v2451
      %3022 = vmatmul.mubr.bf16.gmra.mrb[0].mxu0 %v2450
      %v3023 = vpop.f32.mrb[0].mxu0
      %v3024 = vadd.f32 %v2863, %v3023
      %v3025 = vpop.f32.mrb[0].mxu0
      %v3026 = vpop.f32.mrb[0].mxu0
      %v3027 = vadd.f32 %v2866, %v3026
      %v3028 = vpop.f32.mrb[0].mxu0
      %3029 = vdwg.mxu0
      %v3030 = vld [vmem:[%s419] sm:$0xff]
      %v3031 = vld [vmem:[%s419 + $0x8] sm:$0xff]
      %v3032 = vld [vmem:[%s419 + $0x10] sm:$0xff]
      %v3033 = vld [vmem:[%s419 + $0x18] sm:$0xff]
      %v3034 = vld [vmem:[%s419 + $0x20] sm:$0xff]
      %v3035 = vld [vmem:[%s419 + $0x28] sm:$0xff]
      %v3036 = vld [vmem:[%s419 + $0x30] sm:$0xff]
      %v3037 = vld [vmem:[%s419 + $0x38] sm:$0xff]
      %v3038 = vld [vmem:[%s419 + $0x40] sm:$0xff]
      %v3039 = vld [vmem:[%s419 + $0x48] sm:$0xff]
      %v3040 = vld [vmem:[%s419 + $0x50] sm:$0xff]
      %v3041 = vld [vmem:[%s419 + $0x58] sm:$0xff]
      %v3042 = vld [vmem:[%s419 + $0x60] sm:$0xff]
      %v3043 = vld [vmem:[%s419 + $0x68] sm:$0xff]
      %v3044 = vld [vmem:[%s419 + $0x70] sm:$0xff]
      %v3045 = vld [vmem:[%s419 + $0x78] sm:$0xff]
      %v3046 = vld [vmem:[%s419 + $0x80] sm:$0xff]
      %v3047 = vld [vmem:[%s419 + $0x88] sm:$0xff]
      %v3048 = vld [vmem:[%s419 + $0x90] sm:$0xff]
      %v3049 = vld [vmem:[%s419 + $0x98] sm:$0xff]
      %v3050 = vld [vmem:[%s419 + $0xa0] sm:$0xff]
      %v3051 = vld [vmem:[%s419 + $0xa8] sm:$0xff]
      %v3052 = vld [vmem:[%s419 + $0xb0] sm:$0xff]
      %v3053 = vld [vmem:[%s419 + $0xb8] sm:$0xff]
      %v3054 = vld [vmem:[%s419 + $0xc0] sm:$0xff]
      %v3055 = vld [vmem:[%s419 + $0xc8] sm:$0xff]
      %v3056 = vld [vmem:[%s419 + $0xd0] sm:$0xff]
      %v3057 = vld [vmem:[%s419 + $0xd8] sm:$0xff]
      %v3058 = vld [vmem:[%s419 + $0xe0] sm:$0xff]
      %v3059 = vld [vmem:[%s419 + $0xe8] sm:$0xff]
      %v3060 = vld [vmem:[%s419 + $0xf0] sm:$0xff]
      %v3061 = vld [vmem:[%s419 + $0xf8] sm:$0xff]
      %3063 = vset.pattern.permute.xlu0 0
      %3064 = vperm.xlu0 %3063, %v3030
      %v3065 = vpop.permute.xlu0 %3064
      %3068 = vset.pattern.permute.xlu0 0
      %3069 = vperm.xlu0 %3068, %v3031
      %v3070 = vpop.permute.xlu0 %3069
      %3073 = vset.pattern.permute.xlu0 0
      %3074 = vperm.xlu0 %3073, %v3032
      %v3075 = vpop.permute.xlu0 %3074
      %3078 = vset.pattern.permute.xlu0 0
      %3079 = vperm.xlu0 %3078, %v3033
      %v3080 = vpop.permute.xlu0 %3079
      %3083 = vset.pattern.permute.xlu0 0
      %3084 = vperm.xlu0 %3083, %v3034
      %v3085 = vpop.permute.xlu0 %3084
      %3088 = vset.pattern.permute.xlu0 0
      %3089 = vperm.xlu0 %3088, %v3035
      %v3090 = vpop.permute.xlu0 %3089
      %3093 = vset.pattern.permute.xlu0 0
      %3094 = vperm.xlu0 %3093, %v3036
      %v3095 = vpop.permute.xlu0 %3094
      %3098 = vset.pattern.permute.xlu0 0
      %3099 = vperm.xlu0 %3098, %v3037
      %v3100 = vpop.permute.xlu0 %3099
      %3103 = vset.pattern.permute.xlu0 0
      %3104 = vperm.xlu0 %3103, %v3038
      %v3105 = vpop.permute.xlu0 %3104
      %3108 = vset.pattern.permute.xlu0 0
      %3109 = vperm.xlu0 %3108, %v3039
      %v3110 = vpop.permute.xlu0 %3109
      %3113 = vset.pattern.permute.xlu0 0
      %3114 = vperm.xlu0 %3113, %v3040
      %v3115 = vpop.permute.xlu0 %3114
      %3118 = vset.pattern.permute.xlu0 0
      %3119 = vperm.xlu0 %3118, %v3041
      %v3120 = vpop.permute.xlu0 %3119
      %3123 = vset.pattern.permute.xlu0 0
      %3124 = vperm.xlu0 %3123, %v3042
      %v3125 = vpop.permute.xlu0 %3124
      %3128 = vset.pattern.permute.xlu0 0
      %3129 = vperm.xlu0 %3128, %v3043
      %v3130 = vpop.permute.xlu0 %3129
      %3133 = vset.pattern.permute.xlu0 0
      %3134 = vperm.xlu0 %3133, %v3044
      %v3135 = vpop.permute.xlu0 %3134
      %3138 = vset.pattern.permute.xlu0 0
      %3139 = vperm.xlu0 %3138, %v3045
      %v3140 = vpop.permute.xlu0 %3139
      %3143 = vset.pattern.permute.xlu0 0
      %3144 = vperm.xlu0 %3143, %v3046
      %v3145 = vpop.permute.xlu0 %3144
      %3148 = vset.pattern.permute.xlu0 0
      %3149 = vperm.xlu0 %3148, %v3047
      %v3150 = vpop.permute.xlu0 %3149
      %3153 = vset.pattern.permute.xlu0 0
      %3154 = vperm.xlu0 %3153, %v3048
      %v3155 = vpop.permute.xlu0 %3154
      %3158 = vset.pattern.permute.xlu0 0
      %3159 = vperm.xlu0 %3158, %v3049
      %v3160 = vpop.permute.xlu0 %3159
      %3163 = vset.pattern.permute.xlu0 0
      %3164 = vperm.xlu0 %3163, %v3050
      %v3165 = vpop.permute.xlu0 %3164
      %3168 = vset.pattern.permute.xlu0 0
      %3169 = vperm.xlu0 %3168, %v3051
      %v3170 = vpop.permute.xlu0 %3169
      %3173 = vset.pattern.permute.xlu0 0
      %3174 = vperm.xlu0 %3173, %v3052
      %v3175 = vpop.permute.xlu0 %3174
      %3178 = vset.pattern.permute.xlu0 0
      %3179 = vperm.xlu0 %3178, %v3053
      %v3180 = vpop.permute.xlu0 %3179
      %3183 = vset.pattern.permute.xlu0 0
      %3184 = vperm.xlu0 %3183, %v3054
      %v3185 = vpop.permute.xlu0 %3184
      %3188 = vset.pattern.permute.xlu0 0
      %3189 = vperm.xlu0 %3188, %v3055
      %v3190 = vpop.permute.xlu0 %3189
      %3193 = vset.pattern.permute.xlu0 0
      %3194 = vperm.xlu0 %3193, %v3056
      %v3195 = vpop.permute.xlu0 %3194
      %3198 = vset.pattern.permute.xlu0 0
      %3199 = vperm.xlu0 %3198, %v3057
      %v3200 = vpop.permute.xlu0 %3199
      %3203 = vset.pattern.permute.xlu0 0
      %3204 = vperm.xlu0 %3203, %v3058
      %v3205 = vpop.permute.xlu0 %3204
      %3208 = vset.pattern.permute.xlu0 0
      %3209 = vperm.xlu0 %3208, %v3059
      %v3210 = vpop.permute.xlu0 %3209
      %3213 = vset.pattern.permute.xlu0 0
      %3214 = vperm.xlu0 %3213, %v3060
      %v3215 = vpop.permute.xlu0 %3214
      %3218 = vset.pattern.permute.xlu0 0
      %3219 = vperm.xlu0 %3218, %v3061
      %v3220 = vpop.permute.xlu0 %3219
      %v3222 = vmul.f32 %v3065, %v2904
      %v3223 = vmul.f32 %v3070, %v2907
      %v3224 = vmul.f32 %v3075, %v2912
      %v3225 = vmul.f32 %v3080, %v2915
      %v3226 = vmul.f32 %v3085, %v2920
      %v3227 = vmul.f32 %v3090, %v2923
      %v3228 = vmul.f32 %v3095, %v2928
      %v3229 = vmul.f32 %v3100, %v2931
      %v3230 = vmul.f32 %v3105, %v2936
      %v3231 = vmul.f32 %v3110, %v2939
      %v3232 = vmul.f32 %v3115, %v2944
      %v3233 = vmul.f32 %v3120, %v2947
      %v3234 = vmul.f32 %v3125, %v2952
      %v3235 = vmul.f32 %v3130, %v2955
      %v3236 = vmul.f32 %v3135, %v2960
      %v3237 = vmul.f32 %v3140, %v2963
      %v3238 = vmul.f32 %v3145, %v2968
      %v3239 = vmul.f32 %v3150, %v2971
      %v3240 = vmul.f32 %v3155, %v2976
      %v3241 = vmul.f32 %v3160, %v2979
      %v3242 = vmul.f32 %v3165, %v2984
      %v3243 = vmul.f32 %v3170, %v2987
      %v3244 = vmul.f32 %v3175, %v2992
      %v3245 = vmul.f32 %v3180, %v2995
      %v3246 = vmul.f32 %v3185, %v3000
      %v3247 = vmul.f32 %v3190, %v3003
      %v3248 = vmul.f32 %v3195, %v3008
      %v3249 = vmul.f32 %v3200, %v3011
      %v3250 = vmul.f32 %v3205, %v3016
      %v3251 = vmul.f32 %v3210, %v3019
      %v3252 = vmul.f32 %v3215, %v3024
      %v3253 = vmul.f32 %v3220, %v3027
      %v3254 = vsub.f32 %v436, %v3222
      %v3255 = vsub.f32 %v437, %v3223
      %v3256 = vsub.f32 %v438, %v3224
      %v3257 = vsub.f32 %v439, %v3225
      %v3258 = vsub.f32 %v440, %v3226
      %v3259 = vsub.f32 %v441, %v3227
      %v3260 = vsub.f32 %v442, %v3228
      %v3261 = vsub.f32 %v443, %v3229
      %v3262 = vsub.f32 %v444, %v3230
      %v3263 = vsub.f32 %v445, %v3231
      %v3264 = vsub.f32 %v446, %v3232
      %v3265 = vsub.f32 %v447, %v3233
      %v3266 = vsub.f32 %v448, %v3234
      %v3267 = vsub.f32 %v449, %v3235
      %v3268 = vsub.f32 %v450, %v3236
      %v3269 = vsub.f32 %v451, %v3237
      %v3270 = vsub.f32 %v452, %v3238
      %v3271 = vsub.f32 %v453, %v3239
      %v3272 = vsub.f32 %v454, %v3240
      %v3273 = vsub.f32 %v455, %v3241
      %v3274 = vsub.f32 %v456, %v3242
      %v3275 = vsub.f32 %v457, %v3243
      %v3276 = vsub.f32 %v458, %v3244
      %v3277 = vsub.f32 %v459, %v3245
      %v3278 = vsub.f32 %v460, %v3246
      %v3279 = vsub.f32 %v461, %v3247
      %v3280 = vsub.f32 %v462, %v3248
      %v3281 = vsub.f32 %v463, %v3249
      %v3282 = vsub.f32 %v464, %v3250
      %v3283 = vsub.f32 %v465, %v3251
      %v3284 = vsub.f32 %v466, %v3252
      %v3285 = vsub.f32 %v467, %v3253
      %v3286 = vmul.f32 %v3254, %v3254
      %v3287 = vmul.f32 %v3255, %v3255
      %v3288 = vmul.f32 %v3256, %v3256
      %v3289 = vmul.f32 %v3257, %v3257
      %v3290 = vmul.f32 %v3258, %v3258
      %v3291 = vmul.f32 %v3259, %v3259
      %v3292 = vmul.f32 %v3260, %v3260
      %v3293 = vmul.f32 %v3261, %v3261
      %v3294 = vmul.f32 %v3262, %v3262
      %v3295 = vmul.f32 %v3263, %v3263
      %v3296 = vmul.f32 %v3264, %v3264
      %v3297 = vmul.f32 %v3265, %v3265
      %v3298 = vmul.f32 %v3266, %v3266
      %v3299 = vmul.f32 %v3267, %v3267
      %v3300 = vmul.f32 %v3268, %v3268
      %v3301 = vmul.f32 %v3269, %v3269
      %v3302 = vmul.f32 %v3270, %v3270
      %v3303 = vmul.f32 %v3271, %v3271
      %v3304 = vmul.f32 %v3272, %v3272
      %v3305 = vmul.f32 %v3273, %v3273
      %v3306 = vmul.f32 %v3274, %v3274
      %v3307 = vmul.f32 %v3275, %v3275
      %v3308 = vmul.f32 %v3276, %v3276
      %v3309 = vmul.f32 %v3277, %v3277
      %v3310 = vmul.f32 %v3278, %v3278
      %v3311 = vmul.f32 %v3279, %v3279
      %v3312 = vmul.f32 %v3280, %v3280
      %v3313 = vmul.f32 %v3281, %v3281
      %v3314 = vmul.f32 %v3282, %v3282
      %v3315 = vmul.f32 %v3283, %v3283
      %v3316 = vmul.f32 %v3284, %v3284
      %v3317 = vmul.f32 %v3285, %v3285
      %v3318 = vadd.f32 %v3286, %v3287
      %v3319 = vadd.f32 %v3318, %v3288
      %v3320 = vadd.f32 %v3319, %v3289
      %v3321 = vadd.f32 %v3320, %v3290
      %v3322 = vadd.f32 %v3321, %v3291
      %v3323 = vadd.f32 %v3322, %v3292
      %v3324 = vadd.f32 %v3323, %v3293
      %v3325 = vadd.f32 %v3324, %v3294
      %v3326 = vadd.f32 %v3325, %v3295
      %v3327 = vadd.f32 %v3326, %v3296
      %v3328 = vadd.f32 %v3327, %v3297
      %v3329 = vadd.f32 %v3328, %v3298
      %v3330 = vadd.f32 %v3329, %v3299
      %v3331 = vadd.f32 %v3330, %v3300
      %v3332 = vadd.f32 %v3331, %v3301
      %v3333 = vadd.f32 %v3332, %v3302
      %v3334 = vadd.f32 %v3333, %v3303
      %v3335 = vadd.f32 %v3334, %v3304
      %v3336 = vadd.f32 %v3335, %v3305
      %v3337 = vadd.f32 %v3336, %v3306
      %v3338 = vadd.f32 %v3337, %v3307
      %v3339 = vadd.f32 %v3338, %v3308
      %v3340 = vadd.f32 %v3339, %v3309
      %v3341 = vadd.f32 %v3340, %v3310
      %v3342 = vadd.f32 %v3341, %v3311
      %v3343 = vadd.f32 %v3342, %v3312
      %v3344 = vadd.f32 %v3343, %v3313
      %v3345 = vadd.f32 %v3344, %v3314
      %v3346 = vadd.f32 %v3345, %v3315
      %v3347 = vadd.f32 %v3346, %v3316
      %v3348 = vadd.f32 %v3347, %v3317
      %3349 = vadd.xlane.f32.xlu0 %v3348
      %v3350 = vpop.xlane.xlu0 %3349
      %v3351 = vrot.slane %v3350, 4
      %v3352 = vadd.f32 %v3350, %v3351
      %v3353 = vrot.slane %v3352, 2
      %v3354 = vadd.f32 %v3352, %v3353
      %v3355 = vrot.slane %v3354, 1
      %v3356 = vadd.f32 %v3354, %v3355
      %s3357 = vtos %v3356
      %v3358 = vstv %s3357
      %vm3359 = vcmask 0
      %3360 = vst.msk [vmem:[%s425] sm:$0x1] %vm3359, %v3358
      %vm3361 = vcmp.ne.f32.partialorder %v3286, 0.0
      %vm3362 = vcmp.ne.f32.partialorder %v3287, 0.0
      %vm3363 = vcmp.ne.f32.partialorder %v3288, 0.0
      %vm3364 = vcmp.ne.f32.partialorder %v3289, 0.0
      %vm3365 = vcmp.ne.f32.partialorder %v3290, 0.0
      %vm3366 = vcmp.ne.f32.partialorder %v3291, 0.0
      %vm3367 = vcmp.ne.f32.partialorder %v3292, 0.0
      %vm3368 = vcmp.ne.f32.partialorder %v3293, 0.0
      %vm3369 = vcmp.ne.f32.partialorder %v3294, 0.0
      %vm3370 = vcmp.ne.f32.partialorder %v3295, 0.0
      %vm3371 = vcmp.ne.f32.partialorder %v3296, 0.0
      %vm3372 = vcmp.ne.f32.partialorder %v3297, 0.0
      %vm3373 = vcmp.ne.f32.partialorder %v3298, 0.0
      %vm3374 = vcmp.ne.f32.partialorder %v3299, 0.0
      %vm3375 = vcmp.ne.f32.partialorder %v3300, 0.0
      %vm3376 = vcmp.ne.f32.partialorder %v3301, 0.0
      %vm3377 = vcmp.ne.f32.partialorder %v3302, 0.0
      %vm3378 = vcmp.ne.f32.partialorder %v3303, 0.0
      %vm3379 = vcmp.ne.f32.partialorder %v3304, 0.0
      %vm3380 = vcmp.ne.f32.partialorder %v3305, 0.0
      %vm3381 = vcmp.ne.f32.partialorder %v3306, 0.0
      %vm3382 = vcmp.ne.f32.partialorder %v3307, 0.0
      %vm3383 = vcmp.ne.f32.partialorder %v3308, 0.0
      %vm3384 = vcmp.ne.f32.partialorder %v3309, 0.0
      %vm3385 = vcmp.ne.f32.partialorder %v3310, 0.0
      %vm3386 = vcmp.ne.f32.partialorder %v3311, 0.0
      %vm3387 = vcmp.ne.f32.partialorder %v3312, 0.0
      %vm3388 = vcmp.ne.f32.partialorder %v3313, 0.0
      %vm3389 = vcmp.ne.f32.partialorder %v3314, 0.0
      %vm3390 = vcmp.ne.f32.partialorder %v3315, 0.0
      %vm3391 = vcmp.ne.f32.partialorder %v3316, 0.0
      %vm3392 = vcmp.ne.f32.partialorder %v3317, 0.0
      %v3393 = vsel %vm3361, 1, 0
      %v3394 = vsel %vm3362, 1, 0
      %v3395 = vsel %vm3363, 1, 0
      %v3396 = vsel %vm3364, 1, 0
      %v3397 = vsel %vm3365, 1, 0
      %v3398 = vsel %vm3366, 1, 0
      %v3399 = vsel %vm3367, 1, 0
      %v3400 = vsel %vm3368, 1, 0
      %v3401 = vsel %vm3369, 1, 0
      %v3402 = vsel %vm3370, 1, 0
      %v3403 = vsel %vm3371, 1, 0
      %v3404 = vsel %vm3372, 1, 0
      %v3405 = vsel %vm3373, 1, 0
      %v3406 = vsel %vm3374, 1, 0
      %v3407 = vsel %vm3375, 1, 0
      %v3408 = vsel %vm3376, 1, 0
      %v3409 = vsel %vm3377, 1, 0
      %v3410 = vsel %vm3378, 1, 0
      %v3411 = vsel %vm3379, 1, 0
      %v3412 = vsel %vm3380, 1, 0
      %v3413 = vsel %vm3381, 1, 0
      %v3414 = vsel %vm3382, 1, 0
      %v3415 = vsel %vm3383, 1, 0
      %v3416 = vsel %vm3384, 1, 0
      %v3417 = vsel %vm3385, 1, 0
      %v3418 = vsel %vm3386, 1, 0
      %v3419 = vsel %vm3387, 1, 0
      %v3420 = vsel %vm3388, 1, 0
      %v3421 = vsel %vm3389, 1, 0
      %v3422 = vsel %vm3390, 1, 0
      %v3423 = vsel %vm3391, 1, 0
      %v3424 = vsel %vm3392, 1, 0
      %v3425 = vcvt.s32.f32 %v3393
      %v3426 = vcvt.s32.f32 %v3394
      %v3427 = vcvt.s32.f32 %v3395
      %v3428 = vcvt.s32.f32 %v3396
      %v3429 = vcvt.s32.f32 %v3397
      %v3430 = vcvt.s32.f32 %v3398
      %v3431 = vcvt.s32.f32 %v3399
      %v3432 = vcvt.s32.f32 %v3400
      %v3433 = vcvt.s32.f32 %v3401
      %v3434 = vcvt.s32.f32 %v3402
      %v3435 = vcvt.s32.f32 %v3403
      %v3436 = vcvt.s32.f32 %v3404
      %v3437 = vcvt.s32.f32 %v3405
      %v3438 = vcvt.s32.f32 %v3406
      %v3439 = vcvt.s32.f32 %v3407
      %v3440 = vcvt.s32.f32 %v3408
      %v3441 = vcvt.s32.f32 %v3409
      %v3442 = vcvt.s32.f32 %v3410
      %v3443 = vcvt.s32.f32 %v3411
      %v3444 = vcvt.s32.f32 %v3412
      %v3445 = vcvt.s32.f32 %v3413
      %v3446 = vcvt.s32.f32 %v3414
      %v3447 = vcvt.s32.f32 %v3415
      %v3448 = vcvt.s32.f32 %v3416
      %v3449 = vcvt.s32.f32 %v3417
      %v3450 = vcvt.s32.f32 %v3418
      %v3451 = vcvt.s32.f32 %v3419
      %v3452 = vcvt.s32.f32 %v3420
      %v3453 = vcvt.s32.f32 %v3421
      %v3454 = vcvt.s32.f32 %v3422
      %v3455 = vcvt.s32.f32 %v3423
      %v3456 = vcvt.s32.f32 %v3424
      %v3457 = vadd.f32 %v3425, %v3426
      %v3458 = vadd.f32 %v3457, %v3427
      %v3459 = vadd.f32 %v3458, %v3428
      %v3460 = vadd.f32 %v3459, %v3429
      %v3461 = vadd.f32 %v3460, %v3430
      %v3462 = vadd.f32 %v3461, %v3431
      %v3463 = vadd.f32 %v3462, %v3432
      %v3464 = vadd.f32 %v3463, %v3433
      %v3465 = vadd.f32 %v3464, %v3434
      %v3466 = vadd.f32 %v3465, %v3435
      %v3467 = vadd.f32 %v3466, %v3436
      %v3468 = vadd.f32 %v3467, %v3437
      %v3469 = vadd.f32 %v3468, %v3438
      %v3470 = vadd.f32 %v3469, %v3439
      %v3471 = vadd.f32 %v3470, %v3440
      %v3472 = vadd.f32 %v3471, %v3441
      %v3473 = vadd.f32 %v3472, %v3442
      %v3474 = vadd.f32 %v3473, %v3443
      %v3475 = vadd.f32 %v3474, %v3444
      %v3476 = vadd.f32 %v3475, %v3445
      %v3477 = vadd.f32 %v3476, %v3446
      %v3478 = vadd.f32 %v3477, %v3447
      %v3479 = vadd.f32 %v3478, %v3448
      %v3480 = vadd.f32 %v3479, %v3449
      %v3481 = vadd.f32 %v3480, %v3450
      %v3482 = vadd.f32 %v3481, %v3451
      %v3483 = vadd.f32 %v3482, %v3452
      %v3484 = vadd.f32 %v3483, %v3453
      %v3485 = vadd.f32 %v3484, %v3454
      %v3486 = vadd.f32 %v3485, %v3455
      %v3487 = vadd.f32 %v3486, %v3456
      %3488 = vadd.xlane.f32.xlu0 %v3487
      %v3489 = vpop.xlane.xlu0 %3488
      %v3490 = vrot.slane %v3489, 4
      %v3491 = vadd.f32 %v3489, %v3490
      %v3492 = vrot.slane %v3491, 2
      %v3493 = vadd.f32 %v3491, %v3492
      %v3494 = vrot.slane %v3493, 1
      %v3495 = vadd.f32 %v3493, %v3494
      %s3496 = vtos %v3495
      %v3497 = vstv %s3496
      %3498 = vst.msk [vmem:[%s432] sm:$0x1] %vm3359, %v3497
      %s3499 = smul.u32 %s24, 2
      %s3500 = sadd.s32 %s3499, %s25
      %p3501 = scmp.lt.s32.totalorder %s3500, 3
      %s3502 = scalar_select %p3501, %s3500, 3
      %s3503 = scalar_lea.vmem %s7, %s3502
      %s3504 = smul.u32 %s24, 2
      %s3505 = sadd.s32 %s3504, %s25
      %p3506 = scmp.lt.s32.totalorder %s3505, 3
      %s3507 = scalar_select %p3506, %s3505, 3
      %s3508 = scalar_lea.vmem %s8, %s3507
      // Predicated region
      $region49: #{lorm_forward.1} parent=47 // pred_check
        %p3509 = pneg %p225
      $region50: #{lorm_forward.1} parent=47 // pred_check_branch
        %3511 = sbr.rel (%p3509) target = $region52
      $region51: #{lorm_forward.1} parent=47 // pred_region
        %s3512 = smul.u32 %s24, 2
        %s3513 = sadd.s32 %s3512, %s25
      $region52: #{lorm_forward.1} parent=47 // pred_fallthru
        _
      // Predicated region
      $region53: #{lorm_forward.1} parent=47 // pred_check
        %p3514 = pneg %p255
      $region54: #{lorm_forward.1} parent=47 // pred_check_branch
        %3516 = sbr.rel (%p3514) target = $region56
      $region55: #{lorm_forward.1} parent=47 // pred_region
        %s3517 = smul.u32 %s24, 2
        %s3518 = sadd.s32 %s3517, %s25
      $region56: #{lorm_forward.1} parent=47 // pred_fallthru
        _
    $region48: #{lorm_forward.1} parent=5 // pred_fallthru
      _
    %p3519 = scmp.le.s32.totalorder 2, %s15
    // Predicated region
    $region57: #{lorm_forward.1} parent=5 // pred_check
      %p3520 = pneg %p3519
    $region58: #{lorm_forward.1} parent=5 // pred_check_branch
      %3522 = sbr.rel (%p3520) target = $region60
    $region59: #{lorm_forward.1} parent=5 // pred_region
      %s3523 = ssub.s32 %s15, 2
      // Predicated region
      $region61: #{lorm_forward.1} parent=59 // pred_check
        %p3524 = pneg %p231
      $region62: #{lorm_forward.1} parent=59 // pred_check_branch
        %3526 = sbr.rel (%p3524) target = $region64
      $region63: #{lorm_forward.1} parent=59 // pred_region
        %s3527 = smul.u32 %s26, 2
        %s3528 = sadd.s32 %s3527, %s27
        %p3529 = scmp.lt.s32.totalorder %s3528, 3
        %s3530 = scalar_select %p3529, %s3528, 3
        %s3531 = scalar_lea.vmem %s7, %s3530
      $region64: #{lorm_forward.1} parent=59 // pred_fallthru
        _
      // Predicated region
      $region65: #{lorm_forward.1} parent=59 // pred_check
        %p3532 = pneg %p261
      $region66: #{lorm_forward.1} parent=59 // pred_check_branch
        %3534 = sbr.rel (%p3532) target = $region68
      $region67: #{lorm_forward.1} parent=59 // pred_region
        %s3535 = smul.u32 %s26, 2
        %s3536 = sadd.s32 %s3535, %s27
        %p3537 = scmp.lt.s32.totalorder %s3536, 3
        %s3538 = scalar_select %p3537, %s3536, 3
        %s3539 = scalar_lea.vmem %s8, %s3538
      $region68: #{lorm_forward.1} parent=59 // pred_fallthru
        _
    $region60: #{lorm_forward.1} parent=5 // pred_fallthru
      _
  $region6: #{lorm_forward.1} parent=0 // loop_footer
    %s19 = sadd.s32 1, %s15
  $region7: #{lorm_forward.1} parent=0 // loop_footer_branch
    %14 = sbr.rel target = $region3
  $region8: #{lorm_forward.1} parent=0 // loop_exit
    _

</llo_original>
